<compile_context>
chip_gen: v7x
topology: tpu7x:2x2x1
jax: 0.10.0
libtpu: 0.0.40
codegen_flags: <defaults>
</compile_context>

<pallas_src>
import jax
import jax.numpy as jnp
from jax.experimental import pallas as pl
from jax.experimental.pallas import tpu as pltpu


def _leaky(x):
    # LeakyReLU(negative_slope=0.1)
    return jnp.where(x > 0, x, 0.1 * x)


# ----------------------------------------------------------------------------
# Pallas kernels (channels on sublanes, per-image flattened spatial on lanes)
# ----------------------------------------------------------------------------
def freq_fuse_kernel(mag_ref, pha_ref,
                     aw1_ref, ab1_ref, aw2_ref, ab2_ref,
                     pw1_ref, pb1_ref, pw2_ref, pb2_ref,
                     real_ref, imag_ref):
    """amp_fuse + pha_fuse (conv1x1 -> LeakyReLU -> conv1x1) + polar->cart.

    mag/pha arrive as separate (C, tm) blocks (no HBM concat).  real/imag are
    produced at the original resolution; the 2x2 repeat_interleave commutes
    with the elementwise cos/sin and is applied in the wrapper as one pass.
    """
    mag = mag_ref[...]                                               # (C, tm)
    pha = pha_ref[...]

    hm = _leaky(jnp.dot(aw1_ref[...], mag,
                        preferred_element_type=jnp.float32) + ab1_ref[...])
    m_out = jnp.dot(aw2_ref[...], hm,
                    preferred_element_type=jnp.float32) + ab2_ref[...]

    hp = _leaky(jnp.dot(pw1_ref[...], pha,
                        preferred_element_type=jnp.float32) + pb1_ref[...])
    p_out = jnp.dot(pw2_ref[...], hp,
                    preferred_element_type=jnp.float32) + pb2_ref[...]

    real_ref[...] = m_out * jnp.cos(p_out)
    imag_ref[...] = m_out * jnp.sin(p_out)


def fuse_kernel(x2_ref, cu_ref, wx2_ref, wcu_ref, b_ref, out_ref):
    """fuse(cat([x2, post(crop_up)])) with the post conv folded in:

        out = Wf[:, :C] @ x2 + (Wf[:, C:] @ Wp) @ cu + (Wf[:, C:] @ bp + bf)

    Two K=C matmuls, no intermediate layer, no VMEM concat copy.
    """
    out_ref[...] = (jnp.dot(wx2_ref[...], x2_ref[...],
                            preferred_element_type=jnp.float32)
                    + jnp.dot(wcu_ref[...], cu_ref[...],
                              preferred_element_type=jnp.float32)
                    + b_ref[...])


# ----------------------------------------------------------------------------
# Tiling / padding / compiler-params helpers
# ----------------------------------------------------------------------------
def _choose_tile(m, n_batch, cap=8192):
    """Lane-tile for a flattened spatial dim of (unpadded) length m.

    Prefers large tiles (amortize ~0.35us/step overhead, approach the HBM
    roofline) but backs off until the (N, tiles) grid has >= 4 total steps
    (>= 2 per TensorCore on v7x) whenever the problem is large enough."""
    m128 = ((m + 127) // 128) * 128
    t = max(128, (min(cap, m128) // 128) * 128)
    while t > 128 and n_batch * ((m128 + t - 1) // t) < 4:
        t = max(128, ((t // 2) // 128) * 128)
    return t


def _pad_spatial(a, tm):
    """Pad the last (flattened spatial) dim of (N, C, M) up to a multiple of tm."""
    m = a.shape[-1]
    pad = (-m) % tm
    if pad:
        a = jnp.pad(a, ((0, 0), (0, 0), (0, pad)))
    return a


def _compiler_params(n_io_blocks, C, tm):
    # Double-buffered IO blocks + generous margin for weights / in-kernel
    # temps.  48 MiB cap is safe on every generation (v7x physical = 64 MiB)
    # and explicitly raises v5e's 16 MiB default when tiles get large.
    io_block_bytes = n_io_blocks * C * tm * 4
    vmem_limit = int(min(48 * 1024 * 1024, 2 * io_block_bytes + 16 * 1024 * 1024))
    return pltpu.CompilerParams(
        dimension_semantics=("parallel", "parallel"),
        vmem_limit_bytes=vmem_limit)


# ----------------------------------------------------------------------------
# Pallas call wrappers
# ----------------------------------------------------------------------------
def freq_fuse_call(mag_c, pha_c, C, tm, p):
    N, _, Mp = mag_c.shape
    n_tiles = Mp // tm

    act_spec = pl.BlockSpec((None, C, tm), lambda n, i: (n, 0, i))
    w_spec = pl.BlockSpec((C, C), lambda n, i: (0, 0))
    b_spec = pl.BlockSpec((C, 1), lambda n, i: (0, 0))

    cost = pl.CostEstimate(
        flops=int(4 * 2 * C * C * N * Mp),            # four (C,C)@(C,M) matmuls
        transcendentals=int(2 * C * N * Mp),          # cos + sin
        bytes_accessed=int(4 * (4 * C * N * Mp + 4 * C * C + 4 * C)),
    )
    return pl.pallas_call(
        freq_fuse_kernel,
        out_shape=(jax.ShapeDtypeStruct((N, C, Mp), jnp.float32),
                   jax.ShapeDtypeStruct((N, C, Mp), jnp.float32)),
        grid=(N, n_tiles),
        in_specs=[act_spec, act_spec,
                  w_spec, b_spec, w_spec, b_spec,
                  w_spec, b_spec, w_spec, b_spec],
        out_specs=(act_spec, act_spec),
        compiler_params=_compiler_params(4, C, tm),
        cost_estimate=cost,
    )(mag_c, pha_c,
      p["amp_w1"], p["amp_b1"], p["amp_w2"], p["amp_b2"],
      p["pha_w1"], p["pha_b1"], p["pha_w2"], p["pha_b2"])


def fuse_call(x2_c, cu_c, C, tm, p):
    N, _, Mp = x2_c.shape
    n_tiles = Mp // tm

    act_spec = pl.BlockSpec((None, C, tm), lambda n, i: (n, 0, i))
    w_spec = pl.BlockSpec((C, C), lambda n, i: (0, 0))
    b_spec = pl.BlockSpec((C, 1), lambda n, i: (0, 0))

    cost = pl.CostEstimate(
        flops=int(2 * 2 * C * C * N * Mp),
        transcendentals=0,
        bytes_accessed=int(4 * (3 * C * N * Mp + 2 * C * C + C)),
    )
    return pl.pallas_call(
        fuse_kernel,
        out_shape=jax.ShapeDtypeStruct((N, C, Mp), jnp.float32),
        grid=(N, n_tiles),
        in_specs=[act_spec, act_spec, w_spec, w_spec, b_spec],
        out_specs=act_spec,
        compiler_params=_compiler_params(3, C, tm),
        cost_estimate=cost,
    )(x2_c, cu_c, p["fuse_wx2"], p["fuse_wcu"], p["fuse_bcomb"])


# ----------------------------------------------------------------------------
# Parameter init (deterministic, synthetic — mirrors nn.Conv2d shapes)
# ----------------------------------------------------------------------------
def init_params(key, C):
    ks = jax.random.split(key, 12)

    def conv_w(k, cout, cin):   # PyTorch layout: (out, in, 1, 1) -> (out, in)
        return jax.random.normal(k, (cout, cin), jnp.float32) * 0.1

    def conv_b(k, cout):
        return jax.random.normal(k, (cout,), jnp.float32) * 0.1

    amp_w1, amp_b1 = conv_w(ks[0], C, C), conv_b(ks[1], C)
    amp_w2, amp_b2 = conv_w(ks[2], C, C), conv_b(ks[3], C)
    pha_w1, pha_b1 = conv_w(ks[4], C, C), conv_b(ks[5], C)
    pha_w2, pha_b2 = conv_w(ks[6], C, C), conv_b(ks[7], C)
    post_w, post_b = conv_w(ks[8], C, C), conv_b(ks[9], C)
    fuse_w, fuse_b = conv_w(ks[10], C, 2 * C), conv_b(ks[11], C)

    # Fold the post conv into the fuse conv (no nonlinearity between them).
    fuse_wx2 = fuse_w[:, :C]
    fuse_wcu = fuse_w[:, C:] @ post_w
    fuse_bcomb = fuse_w[:, C:] @ post_b + fuse_b

    col = lambda b: b.reshape(-1, 1)
    return {
        "amp_w1": amp_w1, "amp_b1": col(amp_b1),
        "amp_w2": amp_w2, "amp_b2": col(amp_b2),
        "pha_w1": pha_w1, "pha_b1": col(pha_b1),
        "pha_w2": pha_w2, "pha_b2": col(pha_b2),
        "fuse_wx2": fuse_wx2, "fuse_wcu": fuse_wcu, "fuse_bcomb": col(fuse_bcomb),
        # Raw (un-fused) weights kept only for the pure-JAX reference check.
        "_post_w": post_w, "_post_b": post_b,
        "_fuse_w": fuse_w, "_fuse_b": fuse_b,
    }


# ----------------------------------------------------------------------------
# Glue helpers
# ----------------------------------------------------------------------------
def _up2(a):
    """repeat_interleave(2, dim=2).repeat_interleave(2, dim=3) in one pass."""
    n, c, h, w = a.shape
    return jnp.broadcast_to(a[:, :, :, None, :, None],
                            (n, c, h, 2, w, 2)).reshape(n, c, 2 * h, 2 * w)


# ----------------------------------------------------------------------------
# frescat forward (version=1)
# ----------------------------------------------------------------------------
def frescat_forward(x, params):
    N, C, H, W = x.shape
    x = x.astype(jnp.float32)

    # x2: bilinear 2x upsample (half-pixel == PyTorch align_corners=False)
    x2 = jax.image.resize(x, (N, C, 2 * H, 2 * W), method="bilinear")

    # frequency branch: fft2 -> magnitude / phase
    # TODO(synk): FFT / iFFT have no Pallas TPU equivalent; kept as jnp.fft glue.
    fx = jnp.fft.fft2(x)
    mag = jnp.abs(fx).astype(jnp.float32)
    pha = jnp.angle(fx).astype(jnp.float32)

    # amp/pha conv chains + cos/sin in Pallas, native (N, C, H*W) layout
    HW = H * W
    tm1 = _choose_tile(HW, N)
    mag_c = _pad_spatial(mag.reshape(N, C, HW), tm1)
    pha_c = _pad_spatial(pha.reshape(N, C, HW), tm1)
    real_c, imag_c = freq_fuse_call(mag_c, pha_c, C, tm1, params)
    real_s = real_c[:, :, :HW].reshape(N, C, H, W)
    imag_s = imag_c[:, :, :HW].reshape(N, C, H, W)

    # repeat_interleave(2, dim=2).repeat_interleave(2, dim=3) (single pass)
    real = _up2(real_s)
    imag = _up2(imag_s)

    output = jnp.abs(jnp.fft.ifft2(jax.lax.complex(real, imag)))

    # corner crop (index arithmetic of the reference; exact for even H, W)
    H2, W2 = H // 2, W // 2
    tl = output[:, :, :H2, :W2]
    tr = output[:, :, :H2, 3 * W // 2:2 * W]
    bl = output[:, :, 3 * H // 2:2 * H, :W2]
    br = output[:, :, 3 * H // 2:2 * H, 3 * W // 2:2 * W]
    crop = jnp.concatenate([jnp.concatenate([tl, tr], axis=3),
                            jnp.concatenate([bl, br], axis=3)], axis=2)

    # F.interpolate(crop, (2H, 2W)) default mode='nearest' == 2x duplication
    crop_up = _up2(crop).astype(jnp.float32)

    # folded post+fuse conv in a single Pallas kernel
    HW4 = 4 * HW
    tm2 = _choose_tile(HW4, N)
    x2_c = _pad_spatial(x2.reshape(N, C, HW4), tm2)
    cu_c = _pad_spatial(crop_up.reshape(N, C, HW4), tm2)
    out_c = fuse_call(x2_c, cu_c, C, tm2, params)
    return out_c[:, :, :HW4].reshape(N, C, 2 * H, 2 * W)


# ----------------------------------------------------------------------------
# Pure-JAX reference (mirrors the PyTorch module exactly; for validation)
# ----------------------------------------------------------------------------
def _conv1x1(x, w, b):
    y = jnp.einsum("oc,nchw->nohw", w, x, precision=jax.lax.Precision.HIGHEST)
    return y + b[None, :, None, None]


def frescat_reference(x, p):
    N, C, H, W = x.shape
    bv = lambda k: p[k].reshape(-1)
    x = x.astype(jnp.float32)
    x2 = jax.image.resize(x, (N, C, 2 * H, 2 * W), method="bilinear")
    fx = jnp.fft.fft2(x)
    mag = jnp.abs(fx).astype(jnp.float32)
    pha = jnp.angle(fx).astype(jnp.float32)
    Mag = _conv1x1(_leaky(_conv1x1(mag, p["amp_w1"], bv("amp_b1"))),
                   p["amp_w2"], bv("amp_b2"))
    Pha = _conv1x1(_leaky(_conv1x1(pha, p["pha_w1"], bv("pha_b1"))),
                   p["pha_w2"], bv("pha_b2"))
    amp_up, pha_up = _up2(Mag), _up2(Pha)
    real = amp_up * jnp.cos(pha_up)
    imag = amp_up * jnp.sin(pha_up)
    output = jnp.abs(jnp.fft.ifft2(jax.lax.complex(real, imag)))
    H2, W2 = H // 2, W // 2
    crop = jnp.concatenate(
        [jnp.concatenate([output[:, :, :H2, :W2],
                          output[:, :, :H2, 3 * W // 2:2 * W]], axis=3),
         jnp.concatenate([output[:, :, 3 * H // 2:2 * H, :W2],
                          output[:, :, 3 * H // 2:2 * H, 3 * W // 2:2 * W]],
                         axis=3)], axis=2)
    crop_up = _up2(crop)
    x3 = _conv1x1(crop_up, p["_post_w"], p["_post_b"])
    return _conv1x1(jnp.concatenate([x2, x3], axis=1), p["_fuse_w"], p["_fuse_b"])


if __name__ == "__main__":
    N, C, H, W = 2, 32, 16, 16   # channels=32 matches frescat default
    key = jax.random.PRNGKey(0)
    kx, kp = jax.random.split(key)
    x = jax.random.normal(kx, (N, C, H, W), jnp.float32)
    params = init_params(kp, C)

    out = jax.jit(frescat_forward)(x, params)
    out = jax.block_until_ready(out)
    assert out.shape == (N, C, 2 * H, 2 * W), out.shape
    assert out.dtype == jnp.float32

    ref = jax.block_until_ready(jax.jit(frescat_reference)(x, params))
    max_diff = float(jnp.max(jnp.abs(out - ref)))
    assert max_diff < 1e-2, f"mismatch vs reference: max_diff={max_diff}"

    print("KERNEL_OK")
</pallas_src>

<mosaic_0001>
module attributes {stable_mosaic.version = 11 : i64} {
  func.func @freq_fuse_kernel(%arg0: i32, %arg1: i32, %arg2: memref<1x32x128xf32, #tpu.memory_space<vmem>>, %arg3: memref<1x32x128xf32, #tpu.memory_space<vmem>>, %arg4: memref<32x32xf32, #tpu.memory_space<vmem>>, %arg5: memref<32x1xf32, #tpu.memory_space<vmem>>, %arg6: memref<32x32xf32, #tpu.memory_space<vmem>>, %arg7: memref<32x1xf32, #tpu.memory_space<vmem>>, %arg8: memref<32x32xf32, #tpu.memory_space<vmem>>, %arg9: memref<32x1xf32, #tpu.memory_space<vmem>>, %arg10: memref<32x32xf32, #tpu.memory_space<vmem>>, %arg11: memref<32x1xf32, #tpu.memory_space<vmem>>, %arg12: memref<1x32x128xf32, #tpu.memory_space<vmem>>, %arg13: memref<1x32x128xf32, #tpu.memory_space<vmem>>) attributes {dimension_semantics = [#tpu.dimension_semantics<parallel>, #tpu.dimension_semantics<parallel>], iteration_bounds = array<i64: 2, 2>, scalar_prefetch = 0 : i64, scratch_operands = 0 : i64, tpu.core_type = #tpu.core_type<tc>, window_params = [{transform_indices = @transform_0, window_bounds = array<i64: 1, 32, 128>}, {transform_indices = @transform_1, window_bounds = array<i64: 1, 32, 128>}, {pipeline_mode = #tpu.pipeline_mode<synchronous>, transform_indices = @transform_2, window_bounds = array<i64: 32, 32>}, {pipeline_mode = #tpu.pipeline_mode<synchronous>, transform_indices = @transform_3, window_bounds = array<i64: 32, 1>}, {pipeline_mode = #tpu.pipeline_mode<synchronous>, transform_indices = @transform_4, window_bounds = array<i64: 32, 32>}, {pipeline_mode = #tpu.pipeline_mode<synchronous>, transform_indices = @transform_5, window_bounds = array<i64: 32, 1>}, {pipeline_mode = #tpu.pipeline_mode<synchronous>, transform_indices = @transform_6, window_bounds = array<i64: 32, 32>}, {pipeline_mode = #tpu.pipeline_mode<synchronous>, transform_indices = @transform_7, window_bounds = array<i64: 32, 1>}, {pipeline_mode = #tpu.pipeline_mode<synchronous>, transform_indices = @transform_8, window_bounds = array<i64: 32, 32>}, {pipeline_mode = #tpu.pipeline_mode<synchronous>, transform_indices = @transform_9, window_bounds = array<i64: 32, 1>}, {transform_indices = @transform_10, window_bounds = array<i64: 1, 32, 128>}, {transform_indices = @transform_11, window_bounds = array<i64: 1, 32, 128>}]} {
    %c0 = arith.constant 0 : index
    %c0_0 = arith.constant 0 : index
    %c0_1 = arith.constant 0 : index
    %0 = vector.load %arg2[%c0, %c0_0, %c0_1] : memref<1x32x128xf32, #tpu.memory_space<vmem>>, vector<1x32x128xf32>
    %1 = vector.shape_cast %0 : vector<1x32x128xf32> to vector<32x128xf32>
    %c0_2 = arith.constant 0 : index
    %c0_3 = arith.constant 0 : index
    %c0_4 = arith.constant 0 : index
    %2 = vector.load %arg3[%c0_2, %c0_3, %c0_4] : memref<1x32x128xf32, #tpu.memory_space<vmem>>, vector<1x32x128xf32>
    %3 = vector.shape_cast %2 : vector<1x32x128xf32> to vector<32x128xf32>
    %c0_5 = arith.constant 0 : index
    %c0_6 = arith.constant 0 : index
    %4 = vector.load %arg4[%c0_5, %c0_6] : memref<32x32xf32, #tpu.memory_space<vmem>>, vector<32x32xf32>
    %cst = arith.constant dense<0.000000e+00> : vector<32x128xf32>
    %5 = tpu.matmul %4, %1, %cst {dimension_numbers = #tpu.dot_dimension_numbers<[1], [0], [0], [1], [0, 0, 1, 1], [], []>} : vector<32x32xf32>, vector<32x128xf32>, vector<32x128xf32> -> vector<32x128xf32>
    %c0_7 = arith.constant 0 : index
    %c0_8 = arith.constant 0 : index
    %6 = vector.load %arg5[%c0_7, %c0_8] : memref<32x1xf32, #tpu.memory_space<vmem>>, vector<32x1xf32>
    %7 = vector.broadcast %6 : vector<32x1xf32> to vector<32x128xf32>
    %8 = arith.addf %5, %7 : vector<32x128xf32>
    %cst_9 = arith.constant 0.000000e+00 : f32
    %9 = vector.broadcast %cst_9 : f32 to vector<32x128xf32>
    %10 = arith.cmpf ogt, %8, %9 : vector<32x128xf32>
    %cst_10 = arith.constant 1.000000e-01 : f32
    %11 = vector.broadcast %cst_10 : f32 to vector<32x128xf32>
    %12 = arith.mulf %11, %8 : vector<32x128xf32>
    %13 = arith.select %10, %8, %12 : vector<32x128xi1>, vector<32x128xf32>
    %c0_11 = arith.constant 0 : index
    %c0_12 = arith.constant 0 : index
    %14 = vector.load %arg6[%c0_11, %c0_12] : memref<32x32xf32, #tpu.memory_space<vmem>>, vector<32x32xf32>
    %cst_13 = arith.constant dense<0.000000e+00> : vector<32x128xf32>
    %15 = tpu.matmul %14, %13, %cst_13 {dimension_numbers = #tpu.dot_dimension_numbers<[1], [0], [0], [1], [0, 0, 1, 1], [], []>} : vector<32x32xf32>, vector<32x128xf32>, vector<32x128xf32> -> vector<32x128xf32>
    %c0_14 = arith.constant 0 : index
    %c0_15 = arith.constant 0 : index
    %16 = vector.load %arg7[%c0_14, %c0_15] : memref<32x1xf32, #tpu.memory_space<vmem>>, vector<32x1xf32>
    %17 = vector.broadcast %16 : vector<32x1xf32> to vector<32x128xf32>
    %18 = arith.addf %15, %17 : vector<32x128xf32>
    %c0_16 = arith.constant 0 : index
    %c0_17 = arith.constant 0 : index
    %19 = vector.load %arg8[%c0_16, %c0_17] : memref<32x32xf32, #tpu.memory_space<vmem>>, vector<32x32xf32>
    %cst_18 = arith.constant dense<0.000000e+00> : vector<32x128xf32>
    %20 = tpu.matmul %19, %3, %cst_18 {dimension_numbers = #tpu.dot_dimension_numbers<[1], [0], [0], [1], [0, 0, 1, 1], [], []>} : vector<32x32xf32>, vector<32x128xf32>, vector<32x128xf32> -> vector<32x128xf32>
    %c0_19 = arith.constant 0 : index
    %c0_20 = arith.constant 0 : index
    %21 = vector.load %arg9[%c0_19, %c0_20] : memref<32x1xf32, #tpu.memory_space<vmem>>, vector<32x1xf32>
    %22 = vector.broadcast %21 : vector<32x1xf32> to vector<32x128xf32>
    %23 = arith.addf %20, %22 : vector<32x128xf32>
    %cst_21 = arith.constant 0.000000e+00 : f32
    %24 = vector.broadcast %cst_21 : f32 to vector<32x128xf32>
    %25 = arith.cmpf ogt, %23, %24 : vector<32x128xf32>
    %cst_22 = arith.constant 1.000000e-01 : f32
    %26 = vector.broadcast %cst_22 : f32 to vector<32x128xf32>
    %27 = arith.mulf %26, %23 : vector<32x128xf32>
    %28 = arith.select %25, %23, %27 : vector<32x128xi1>, vector<32x128xf32>
    %c0_23 = arith.constant 0 : index
    %c0_24 = arith.constant 0 : index
    %29 = vector.load %arg10[%c0_23, %c0_24] : memref<32x32xf32, #tpu.memory_space<vmem>>, vector<32x32xf32>
    %cst_25 = arith.constant dense<0.000000e+00> : vector<32x128xf32>
    %30 = tpu.matmul %29, %28, %cst_25 {dimension_numbers = #tpu.dot_dimension_numbers<[1], [0], [0], [1], [0, 0, 1, 1], [], []>} : vector<32x32xf32>, vector<32x128xf32>, vector<32x128xf32> -> vector<32x128xf32>
    %c0_26 = arith.constant 0 : index
    %c0_27 = arith.constant 0 : index
    %31 = vector.load %arg11[%c0_26, %c0_27] : memref<32x1xf32, #tpu.memory_space<vmem>>, vector<32x1xf32>
    %32 = vector.broadcast %31 : vector<32x1xf32> to vector<32x128xf32>
    %33 = arith.addf %30, %32 : vector<32x128xf32>
    %34 = math.cos %33 : vector<32x128xf32>
    %35 = arith.mulf %18, %34 : vector<32x128xf32>
    %c0_28 = arith.constant 0 : index
    %c0_29 = arith.constant 0 : index
    %c0_30 = arith.constant 0 : index
    %36 = vector.load %arg12[%c0_28, %c0_29, %c0_30] : memref<1x32x128xf32, #tpu.memory_space<vmem>>, vector<1x32x128xf32>
    %37 = vector.shape_cast %36 : vector<1x32x128xf32> to vector<32x128xf32>
    %38 = vector.shape_cast %35 : vector<32x128xf32> to vector<1x32x128xf32>
    tpu.vector_store %arg12[%c0_28, %c0_29, %c0_30], %38 {strides = array<i32>} : memref<1x32x128xf32, #tpu.memory_space<vmem>>, vector<1x32x128xf32>,
    %39 = math.sin %33 : vector<32x128xf32>
    %40 = arith.mulf %18, %39 : vector<32x128xf32>
    %c0_31 = arith.constant 0 : index
    %c0_32 = arith.constant 0 : index
    %c0_33 = arith.constant 0 : index
    %41 = vector.load %arg13[%c0_31, %c0_32, %c0_33] : memref<1x32x128xf32, #tpu.memory_space<vmem>>, vector<1x32x128xf32>
    %42 = vector.shape_cast %41 : vector<1x32x128xf32> to vector<32x128xf32>
    %43 = vector.shape_cast %40 : vector<32x128xf32> to vector<1x32x128xf32>
    tpu.vector_store %arg13[%c0_31, %c0_32, %c0_33], %43 {strides = array<i32>} : memref<1x32x128xf32, #tpu.memory_space<vmem>>, vector<1x32x128xf32>,
    return
  }
  func.func @transform_0(%arg0: i32, %arg1: i32) -> (i32, i32, i32) {
    %c0_i32 = arith.constant 0 : i32
    %c0_i32_0 = arith.constant 0 : i32
    return %arg0, %c0_i32, %arg1 : i32, i32, i32
  }
  func.func @transform_1(%arg0: i32, %arg1: i32) -> (i32, i32, i32) {
    %c0_i32 = arith.constant 0 : i32
    %c0_i32_0 = arith.constant 0 : i32
    return %arg0, %c0_i32, %arg1 : i32, i32, i32
  }
  func.func @transform_2(%arg0: i32, %arg1: i32) -> (i32, i32) {
    %c0_i32 = arith.constant 0 : i32
    %c0_i32_0 = arith.constant 0 : i32
    %c0_i32_1 = arith.constant 0 : i32
    return %c0_i32, %c0_i32_0 : i32, i32
  }
  func.func @transform_3(%arg0: i32, %arg1: i32) -> (i32, i32) {
    %c0_i32 = arith.constant 0 : i32
    %c0_i32_0 = arith.constant 0 : i32
    %c0_i32_1 = arith.constant 0 : i32
    return %c0_i32, %c0_i32_0 : i32, i32
  }
  func.func @transform_4(%arg0: i32, %arg1: i32) -> (i32, i32) {
    %c0_i32 = arith.constant 0 : i32
    %c0_i32_0 = arith.constant 0 : i32
    %c0_i32_1 = arith.constant 0 : i32
    return %c0_i32, %c0_i32_0 : i32, i32
  }
  func.func @transform_5(%arg0: i32, %arg1: i32) -> (i32, i32) {
    %c0_i32 = arith.constant 0 : i32
    %c0_i32_0 = arith.constant 0 : i32
    %c0_i32_1 = arith.constant 0 : i32
    return %c0_i32, %c0_i32_0 : i32, i32
  }
  func.func @transform_6(%arg0: i32, %arg1: i32) -> (i32, i32) {
    %c0_i32 = arith.constant 0 : i32
    %c0_i32_0 = arith.constant 0 : i32
    %c0_i32_1 = arith.constant 0 : i32
    return %c0_i32, %c0_i32_0 : i32, i32
  }
  func.func @transform_7(%arg0: i32, %arg1: i32) -> (i32, i32) {
    %c0_i32 = arith.constant 0 : i32
    %c0_i32_0 = arith.constant 0 : i32
    %c0_i32_1 = arith.constant 0 : i32
    return %c0_i32, %c0_i32_0 : i32, i32
  }
  func.func @transform_8(%arg0: i32, %arg1: i32) -> (i32, i32) {
    %c0_i32 = arith.constant 0 : i32
    %c0_i32_0 = arith.constant 0 : i32
    %c0_i32_1 = arith.constant 0 : i32
    return %c0_i32, %c0_i32_0 : i32, i32
  }
  func.func @transform_9(%arg0: i32, %arg1: i32) -> (i32, i32) {
    %c0_i32 = arith.constant 0 : i32
    %c0_i32_0 = arith.constant 0 : i32
    %c0_i32_1 = arith.constant 0 : i32
    return %c0_i32, %c0_i32_0 : i32, i32
  }
  func.func @transform_10(%arg0: i32, %arg1: i32) -> (i32, i32, i32) {
    %c0_i32 = arith.constant 0 : i32
    %c0_i32_0 = arith.constant 0 : i32
    return %arg0, %c0_i32, %arg1 : i32, i32, i32
  }
  func.func @transform_11(%arg0: i32, %arg1: i32) -> (i32, i32, i32) {
    %c0_i32 = arith.constant 0 : i32
    %c0_i32_0 = arith.constant 0 : i32
    return %arg0, %c0_i32, %arg1 : i32, i32, i32
  }
}

module attributes {stable_mosaic.version = 11 : i64} {
  func.func @fuse_kernel(%arg0: i32, %arg1: i32, %arg2: memref<1x32x512xf32, #tpu.memory_space<vmem>>, %arg3: memref<1x32x512xf32, #tpu.memory_space<vmem>>, %arg4: memref<32x32xf32, #tpu.memory_space<vmem>>, %arg5: memref<32x32xf32, #tpu.memory_space<vmem>>, %arg6: memref<32x1xf32, #tpu.memory_space<vmem>>, %arg7: memref<1x32x512xf32, #tpu.memory_space<vmem>>) attributes {dimension_semantics = [#tpu.dimension_semantics<parallel>, #tpu.dimension_semantics<parallel>], iteration_bounds = array<i64: 2, 2>, scalar_prefetch = 0 : i64, scratch_operands = 0 : i64, tpu.core_type = #tpu.core_type<tc>, window_params = [{transform_indices = @transform_0, window_bounds = array<i64: 1, 32, 512>}, {transform_indices = @transform_1, window_bounds = array<i64: 1, 32, 512>}, {pipeline_mode = #tpu.pipeline_mode<synchronous>, transform_indices = @transform_2, window_bounds = array<i64: 32, 32>}, {pipeline_mode = #tpu.pipeline_mode<synchronous>, transform_indices = @transform_3, window_bounds = array<i64: 32, 32>}, {pipeline_mode = #tpu.pipeline_mode<synchronous>, transform_indices = @transform_4, window_bounds = array<i64: 32, 1>}, {transform_indices = @transform_5, window_bounds = array<i64: 1, 32, 512>}]} {
    %c0 = arith.constant 0 : index
    %c0_0 = arith.constant 0 : index
    %0 = vector.load %arg4[%c0, %c0_0] : memref<32x32xf32, #tpu.memory_space<vmem>>, vector<32x32xf32>
    %c0_1 = arith.constant 0 : index
    %c0_2 = arith.constant 0 : index
    %c0_3 = arith.constant 0 : index
    %1 = vector.load %arg2[%c0_1, %c0_2, %c0_3] : memref<1x32x512xf32, #tpu.memory_space<vmem>>, vector<1x32x512xf32>
    %2 = vector.shape_cast %1 : vector<1x32x512xf32> to vector<32x512xf32>
    %cst = arith.constant dense<0.000000e+00> : vector<32x512xf32>
    %3 = tpu.matmul %0, %2, %cst {dimension_numbers = #tpu.dot_dimension_numbers<[1], [0], [0], [1], [0, 0, 1, 1], [], []>} : vector<32x32xf32>, vector<32x512xf32>, vector<32x512xf32> -> vector<32x512xf32>
    %c0_4 = arith.constant 0 : index
    %c0_5 = arith.constant 0 : index
    %4 = vector.load %arg5[%c0_4, %c0_5] : memref<32x32xf32, #tpu.memory_space<vmem>>, vector<32x32xf32>
    %c0_6 = arith.constant 0 : index
    %c0_7 = arith.constant 0 : index
    %c0_8 = arith.constant 0 : index
    %5 = vector.load %arg3[%c0_6, %c0_7, %c0_8] : memref<1x32x512xf32, #tpu.memory_space<vmem>>, vector<1x32x512xf32>
    %6 = vector.shape_cast %5 : vector<1x32x512xf32> to vector<32x512xf32>
    %cst_9 = arith.constant dense<0.000000e+00> : vector<32x512xf32>
    %7 = tpu.matmul %4, %6, %cst_9 {dimension_numbers = #tpu.dot_dimension_numbers<[1], [0], [0], [1], [0, 0, 1, 1], [], []>} : vector<32x32xf32>, vector<32x512xf32>, vector<32x512xf32> -> vector<32x512xf32>
    %8 = arith.addf %3, %7 : vector<32x512xf32>
    %c0_10 = arith.constant 0 : index
    %c0_11 = arith.constant 0 : index
    %9 = vector.load %arg6[%c0_10, %c0_11] : memref<32x1xf32, #tpu.memory_space<vmem>>, vector<32x1xf32>
    %10 = vector.broadcast %9 : vector<32x1xf32> to vector<32x512xf32>
    %11 = arith.addf %8, %10 : vector<32x512xf32>
    %c0_12 = arith.constant 0 : index
    %c0_13 = arith.constant 0 : index
    %c0_14 = arith.constant 0 : index
    %12 = vector.load %arg7[%c0_12, %c0_13, %c0_14] : memref<1x32x512xf32, #tpu.memory_space<vmem>>, vector<1x32x512xf32>
    %13 = vector.shape_cast %12 : vector<1x32x512xf32> to vector<32x512xf32>
    %14 = vector.shape_cast %11 : vector<32x512xf32> to vector<1x32x512xf32>
    tpu.vector_store %arg7[%c0_12, %c0_13, %c0_14], %14 {strides = array<i32>} : memref<1x32x512xf32, #tpu.memory_space<vmem>>, vector<1x32x512xf32>,
    return
  }
  func.func @transform_0(%arg0: i32, %arg1: i32) -> (i32, i32, i32) {
    %c0_i32 = arith.constant 0 : i32
    %c0_i32_0 = arith.constant 0 : i32
    return %arg0, %c0_i32, %arg1 : i32, i32, i32
  }
  func.func @transform_1(%arg0: i32, %arg1: i32) -> (i32, i32, i32) {
    %c0_i32 = arith.constant 0 : i32
    %c0_i32_0 = arith.constant 0 : i32
    return %arg0, %c0_i32, %arg1 : i32, i32, i32
  }
  func.func @transform_2(%arg0: i32, %arg1: i32) -> (i32, i32) {
    %c0_i32 = arith.constant 0 : i32
    %c0_i32_0 = arith.constant 0 : i32
    %c0_i32_1 = arith.constant 0 : i32
    return %c0_i32, %c0_i32_0 : i32, i32
  }
  func.func @transform_3(%arg0: i32, %arg1: i32) -> (i32, i32) {
    %c0_i32 = arith.constant 0 : i32
    %c0_i32_0 = arith.constant 0 : i32
    %c0_i32_1 = arith.constant 0 : i32
    return %c0_i32, %c0_i32_0 : i32, i32
  }
  func.func @transform_4(%arg0: i32, %arg1: i32) -> (i32, i32) {
    %c0_i32 = arith.constant 0 : i32
    %c0_i32_0 = arith.constant 0 : i32
    %c0_i32_1 = arith.constant 0 : i32
    return %c0_i32, %c0_i32_0 : i32, i32
  }
  func.func @transform_5(%arg0: i32, %arg1: i32) -> (i32, i32, i32) {
    %c0_i32 = arith.constant 0 : i32
    %c0_i32_0 = arith.constant 0 : i32
    return %arg0, %c0_i32, %arg1 : i32, i32, i32
  }
}

</mosaic_0001>

<llo_original>
// kernel: frescat_forward.2
$region0: #{frescat_forward.2}
  #allocation0 [shape = 'u32[]', space=smem, size = 0x4, offset = 0x4, fixed_abs, tag = 'smem constant byte address 0x4 - core index']
  #allocation1 [shape = 'u32[144,128]{1,0:T(1,128)}', space=vmem, size = 0x12000, scoped, tag = 'internal scratch']
  %s0 = inlined_call_operand.vmem [shape: f32[2,32,256], index: 0, kind: input, shape index: {}]
  %s1 = inlined_call_operand.vmem [shape: f32[2,32,256], index: 1, kind: input, shape index: {}]
  %s2 = inlined_call_operand.vmem [shape: f32[32,32], index: 2, kind: input, shape index: {}]
  %s3 = inlined_call_operand.vmem [shape: f32[32,1], index: 3, kind: input, shape index: {}]
  %s4 = inlined_call_operand.vmem [shape: f32[32,32], index: 4, kind: input, shape index: {}]
  %s5 = inlined_call_operand.vmem [shape: f32[32,1], index: 5, kind: input, shape index: {}]
  %s6 = inlined_call_operand.vmem [shape: f32[32,32], index: 6, kind: input, shape index: {}]
  %s7 = inlined_call_operand.vmem [shape: f32[32,1], index: 7, kind: input, shape index: {}]
  %s8 = inlined_call_operand.vmem [shape: f32[32,32], index: 8, kind: input, shape index: {}]
  %s9 = inlined_call_operand.vmem [shape: f32[32,1], index: 9, kind: input, shape index: {}]
  %s10 = inlined_call_operand.vmem [shape: f32[2,32,256], index: 10, kind: output, shape index: {0}]
  %s11 = inlined_call_operand.vmem [shape: f32[2,32,256], index: 11, kind: output, shape index: {1}]
  %12 = xla_tuple %s10, %s11
  %s13 = sld [smem:[#allocation0]]
  $region225: #{frescat_forward.2} parent=0
    _
  %s15 = ssub.s32 1, %s13
  %s16 = scalar_select 0, %s15, %s13
  $region1: #{frescat_forward.2} parent=0
    #allocation2 [shape = 'u8[32768]{0}', space=vmem, size = 0x8000, scoped, tag = 'input window, operand 0']
    #allocation3 [shape = 'u8[32768]{0}', space=vmem, size = 0x8000, scoped, tag = 'input window, operand 1']
    #allocation4 [shape = 'u8[32768]{0}', space=vmem, size = 0x8000, scoped, tag = 'output window, operand 0']
    #allocation5 [shape = 'u8[32768]{0}', space=vmem, size = 0x8000, scoped, tag = 'output window, operand 1']
    loop: start=0, step=1, limit=6
    $region2: #{frescat_forward.2} parent=1 // loop_pre_header
      _
    $region3: #{frescat_forward.2} parent=1 // loop_header
      %s18 = sphi 0, %s22
      %p19 = scmp.ge.s32.totalorder %s18, 6
      %s25 = sphi 0, %s37
      %s26 = sphi 0, %s33
      %s27 = sphi 0, %s25
      %s28 = sphi 0, %s26
      %s29 = sphi 0, %s27
      %s30 = sphi 0, %s28
      %s42 = sphi 0, %s44
      %s45 = sphi 0, %s42
      %s46 = sphi 0, %s45
      %s62 = sphi 0, %s46
      %s70 = sphi 0, %s72
      %s73 = sphi 0, %s70
      %s74 = sphi 0, %s73
      %s90 = sphi 0, %s74
      %s94 = sphi 0, %s94
      %s96 = sphi 0, %s94
      %s97 = sphi 0, %s96
      %s111 = sphi 0, %s97
      %s115 = sphi 0, %s115
      %s117 = sphi 0, %s115
      %s118 = sphi 0, %s117
      %s132 = sphi 0, %s118
      %s136 = sphi 0, %s136
      %s138 = sphi 0, %s136
      %s139 = sphi 0, %s138
      %s153 = sphi 0, %s139
      %s157 = sphi 0, %s157
      %s159 = sphi 0, %s157
      %s160 = sphi 0, %s159
      %s174 = sphi 0, %s160
      %s178 = sphi 0, %s178
      %s180 = sphi 0, %s178
      %s181 = sphi 0, %s180
      %s195 = sphi 0, %s181
      %s199 = sphi 0, %s199
      %s201 = sphi 0, %s199
      %s202 = sphi 0, %s201
      %s216 = sphi 0, %s202
      %s220 = sphi 0, %s220
      %s222 = sphi 0, %s220
      %s223 = sphi 0, %s222
      %s237 = sphi 0, %s223
      %s241 = sphi 0, %s241
      %s243 = sphi 0, %s241
      %s244 = sphi 0, %s243
      %s258 = sphi 0, %s244
      %s266 = sphi 0, %s268
      %s269 = sphi 0, %s266
      %s270 = sphi 0, %s269
      %s286 = sphi 0, %s270
      %s294 = sphi 0, %s296
      %s297 = sphi 0, %s294
      %s298 = sphi 0, %s297
      %s314 = sphi 0, %s298
    $region4: #{frescat_forward.2} parent=1 // loop_header_branch
      %21 = sbr.rel (%p19) target = $region8
    $region5: #{frescat_forward.2} parent=1 // loop_body
      %s23 = ssub.s32 %s18, 1
      %s24 = ssub.s32 %s18, 2
      %s31 = sadd.s32 1, %s26
      %p32 = scmp.ge.s32.totalorder %s31, 2
      %s33 = scalar_select %p32, 0, %s31
      %s34 = sadd.s32 1, %s25
      %s35 = scalar_select %p32, %s34, %s25
      %p36 = scmp.ge.s32.totalorder %s35, 2
      %s37 = scalar_select %p36, 0, %s35
      %s38 = ssub.s32 %s25, %s37
      %s39 = ssub.s32 %s26, %s33
      %s40 = sor.u32 %s38, %s39
      %p41 = scmp.eq.s32.totalorder %s40, 0
      %s43 = sadd.s32 %s42, 1
      %s44 = scalar_select %p41, %s42, %s43
      %p47 = pneg %p41
      %p48 = scmp.eq.s32.totalorder %s18, 3
      %p49 = por %p47, %p48
      %p50 = scmp.ne.s32.totalorder %s42, %s45
      %p51 = scmp.eq.s32.totalorder %s18, 0
      %p52 = por %p50, %p51
      %p53 = scmp.ne.s32.totalorder %s42, %s45
      %p54 = scmp.eq.s32.totalorder %s23, 3
      %p55 = por %p53, %p54
      %p56 = scmp.ne.s32.totalorder %s45, %s46
      %p57 = scmp.eq.s32.totalorder %s23, 0
      %p58 = por %p56, %p57
      %p59 = scmp.ne.s32.totalorder %s45, %s46
      %p60 = scmp.eq.s32.totalorder %s24, 3
      %p61 = por %p59, %p60
      %p63 = scmp.ne.s32.totalorder %s46, %s62
      %p64 = scmp.eq.s32.totalorder %s24, 0
      %p65 = por %p63, %p64
      %s66 = ssub.s32 %s25, %s37
      %s67 = ssub.s32 %s26, %s33
      %s68 = sor.u32 %s66, %s67
      %p69 = scmp.eq.s32.totalorder %s68, 0
      %s71 = sadd.s32 %s70, 1
      %s72 = scalar_select %p69, %s70, %s71
      %p75 = pneg %p69
      %p76 = scmp.eq.s32.totalorder %s18, 3
      %p77 = por %p75, %p76
      %p78 = scmp.ne.s32.totalorder %s70, %s73
      %p79 = scmp.eq.s32.totalorder %s18, 0
      %p80 = por %p78, %p79
      %p81 = scmp.ne.s32.totalorder %s70, %s73
      %p82 = scmp.eq.s32.totalorder %s23, 3
      %p83 = por %p81, %p82
      %p84 = scmp.ne.s32.totalorder %s73, %s74
      %p85 = scmp.eq.s32.totalorder %s23, 0
      %p86 = por %p84, %p85
      %p87 = scmp.ne.s32.totalorder %s73, %s74
      %p88 = scmp.eq.s32.totalorder %s24, 3
      %p89 = por %p87, %p88
      %p91 = scmp.ne.s32.totalorder %s74, %s90
      %p92 = scmp.eq.s32.totalorder %s24, 0
      %p93 = por %p91, %p92
      %s95 = sadd.s32 %s94, 1
      %p98 = scmp.eq.s32.totalorder %s18, 3
      %p99 = scmp.ne.s32.totalorder %s94, %s96
      %p100 = scmp.eq.s32.totalorder %s18, 0
      %p101 = por %p99, %p100
      %p102 = scmp.ne.s32.totalorder %s94, %s96
      %p103 = scmp.eq.s32.totalorder %s23, 3
      %p104 = por %p102, %p103
      %p105 = scmp.ne.s32.totalorder %s96, %s97
      %p106 = scmp.eq.s32.totalorder %s23, 0
      %p107 = por %p105, %p106
      %p108 = scmp.ne.s32.totalorder %s96, %s97
      %p109 = scmp.eq.s32.totalorder %s24, 3
      %p110 = por %p108, %p109
      %p112 = scmp.ne.s32.totalorder %s97, %s111
      %p113 = scmp.eq.s32.totalorder %s24, 0
      %p114 = por %p112, %p113
      %s116 = sadd.s32 %s115, 1
      %p119 = scmp.eq.s32.totalorder %s18, 3
      %p120 = scmp.ne.s32.totalorder %s115, %s117
      %p121 = scmp.eq.s32.totalorder %s18, 0
      %p122 = por %p120, %p121
      %p123 = scmp.ne.s32.totalorder %s115, %s117
      %p124 = scmp.eq.s32.totalorder %s23, 3
      %p125 = por %p123, %p124
      %p126 = scmp.ne.s32.totalorder %s117, %s118
      %p127 = scmp.eq.s32.totalorder %s23, 0
      %p128 = por %p126, %p127
      %p129 = scmp.ne.s32.totalorder %s117, %s118
      %p130 = scmp.eq.s32.totalorder %s24, 3
      %p131 = por %p129, %p130
      %p133 = scmp.ne.s32.totalorder %s118, %s132
      %p134 = scmp.eq.s32.totalorder %s24, 0
      %p135 = por %p133, %p134
      %s137 = sadd.s32 %s136, 1
      %p140 = scmp.eq.s32.totalorder %s18, 3
      %p141 = scmp.ne.s32.totalorder %s136, %s138
      %p142 = scmp.eq.s32.totalorder %s18, 0
      %p143 = por %p141, %p142
      %p144 = scmp.ne.s32.totalorder %s136, %s138
      %p145 = scmp.eq.s32.totalorder %s23, 3
      %p146 = por %p144, %p145
      %p147 = scmp.ne.s32.totalorder %s138, %s139
      %p148 = scmp.eq.s32.totalorder %s23, 0
      %p149 = por %p147, %p148
      %p150 = scmp.ne.s32.totalorder %s138, %s139
      %p151 = scmp.eq.s32.totalorder %s24, 3
      %p152 = por %p150, %p151
      %p154 = scmp.ne.s32.totalorder %s139, %s153
      %p155 = scmp.eq.s32.totalorder %s24, 0
      %p156 = por %p154, %p155
      %s158 = sadd.s32 %s157, 1
      %p161 = scmp.eq.s32.totalorder %s18, 3
      %p162 = scmp.ne.s32.totalorder %s157, %s159
      %p163 = scmp.eq.s32.totalorder %s18, 0
      %p164 = por %p162, %p163
      %p165 = scmp.ne.s32.totalorder %s157, %s159
      %p166 = scmp.eq.s32.totalorder %s23, 3
      %p167 = por %p165, %p166
      %p168 = scmp.ne.s32.totalorder %s159, %s160
      %p169 = scmp.eq.s32.totalorder %s23, 0
      %p170 = por %p168, %p169
      %p171 = scmp.ne.s32.totalorder %s159, %s160
      %p172 = scmp.eq.s32.totalorder %s24, 3
      %p173 = por %p171, %p172
      %p175 = scmp.ne.s32.totalorder %s160, %s174
      %p176 = scmp.eq.s32.totalorder %s24, 0
      %p177 = por %p175, %p176
      %s179 = sadd.s32 %s178, 1
      %p182 = scmp.eq.s32.totalorder %s18, 3
      %p183 = scmp.ne.s32.totalorder %s178, %s180
      %p184 = scmp.eq.s32.totalorder %s18, 0
      %p185 = por %p183, %p184
      %p186 = scmp.ne.s32.totalorder %s178, %s180
      %p187 = scmp.eq.s32.totalorder %s23, 3
      %p188 = por %p186, %p187
      %p189 = scmp.ne.s32.totalorder %s180, %s181
      %p190 = scmp.eq.s32.totalorder %s23, 0
      %p191 = por %p189, %p190
      %p192 = scmp.ne.s32.totalorder %s180, %s181
      %p193 = scmp.eq.s32.totalorder %s24, 3
      %p194 = por %p192, %p193
      %p196 = scmp.ne.s32.totalorder %s181, %s195
      %p197 = scmp.eq.s32.totalorder %s24, 0
      %p198 = por %p196, %p197
      %s200 = sadd.s32 %s199, 1
      %p203 = scmp.eq.s32.totalorder %s18, 3
      %p204 = scmp.ne.s32.totalorder %s199, %s201
      %p205 = scmp.eq.s32.totalorder %s18, 0
      %p206 = por %p204, %p205
      %p207 = scmp.ne.s32.totalorder %s199, %s201
      %p208 = scmp.eq.s32.totalorder %s23, 3
      %p209 = por %p207, %p208
      %p210 = scmp.ne.s32.totalorder %s201, %s202
      %p211 = scmp.eq.s32.totalorder %s23, 0
      %p212 = por %p210, %p211
      %p213 = scmp.ne.s32.totalorder %s201, %s202
      %p214 = scmp.eq.s32.totalorder %s24, 3
      %p215 = por %p213, %p214
      %p217 = scmp.ne.s32.totalorder %s202, %s216
      %p218 = scmp.eq.s32.totalorder %s24, 0
      %p219 = por %p217, %p218
      %s221 = sadd.s32 %s220, 1
      %p224 = scmp.eq.s32.totalorder %s18, 3
      %p225 = scmp.ne.s32.totalorder %s220, %s222
      %p226 = scmp.eq.s32.totalorder %s18, 0
      %p227 = por %p225, %p226
      %p228 = scmp.ne.s32.totalorder %s220, %s222
      %p229 = scmp.eq.s32.totalorder %s23, 3
      %p230 = por %p228, %p229
      %p231 = scmp.ne.s32.totalorder %s222, %s223
      %p232 = scmp.eq.s32.totalorder %s23, 0
      %p233 = por %p231, %p232
      %p234 = scmp.ne.s32.totalorder %s222, %s223
      %p235 = scmp.eq.s32.totalorder %s24, 3
      %p236 = por %p234, %p235
      %p238 = scmp.ne.s32.totalorder %s223, %s237
      %p239 = scmp.eq.s32.totalorder %s24, 0
      %p240 = por %p238, %p239
      %s242 = sadd.s32 %s241, 1
      %p245 = scmp.eq.s32.totalorder %s18, 3
      %p246 = scmp.ne.s32.totalorder %s241, %s243
      %p247 = scmp.eq.s32.totalorder %s18, 0
      %p248 = por %p246, %p247
      %p249 = scmp.ne.s32.totalorder %s241, %s243
      %p250 = scmp.eq.s32.totalorder %s23, 3
      %p251 = por %p249, %p250
      %p252 = scmp.ne.s32.totalorder %s243, %s244
      %p253 = scmp.eq.s32.totalorder %s23, 0
      %p254 = por %p252, %p253
      %p255 = scmp.ne.s32.totalorder %s243, %s244
      %p256 = scmp.eq.s32.totalorder %s24, 3
      %p257 = por %p255, %p256
      %p259 = scmp.ne.s32.totalorder %s244, %s258
      %p260 = scmp.eq.s32.totalorder %s24, 0
      %p261 = por %p259, %p260
      %s262 = ssub.s32 %s25, %s37
      %s263 = ssub.s32 %s26, %s33
      %s264 = sor.u32 %s262, %s263
      %p265 = scmp.eq.s32.totalorder %s264, 0
      %s267 = sadd.s32 %s266, 1
      %s268 = scalar_select %p265, %s266, %s267
      %p271 = pneg %p265
      %p272 = scmp.eq.s32.totalorder %s18, 3
      %p273 = por %p271, %p272
      %p274 = scmp.ne.s32.totalorder %s266, %s269
      %p275 = scmp.eq.s32.totalorder %s18, 0
      %p276 = por %p274, %p275
      %p277 = scmp.ne.s32.totalorder %s266, %s269
      %p278 = scmp.eq.s32.totalorder %s23, 3
      %p279 = por %p277, %p278
      %p280 = scmp.ne.s32.totalorder %s269, %s270
      %p281 = scmp.eq.s32.totalorder %s23, 0
      %p282 = por %p280, %p281
      %p283 = scmp.ne.s32.totalorder %s269, %s270
      %p284 = scmp.eq.s32.totalorder %s24, 3
      %p285 = por %p283, %p284
      %p287 = scmp.ne.s32.totalorder %s270, %s286
      %p288 = scmp.eq.s32.totalorder %s24, 0
      %p289 = por %p287, %p288
      %s290 = ssub.s32 %s25, %s37
      %s291 = ssub.s32 %s26, %s33
      %s292 = sor.u32 %s290, %s291
      %p293 = scmp.eq.s32.totalorder %s292, 0
      %s295 = sadd.s32 %s294, 1
      %s296 = scalar_select %p293, %s294, %s295
      %p299 = pneg %p293
      %p300 = scmp.eq.s32.totalorder %s18, 3
      %p301 = por %p299, %p300
      %p302 = scmp.ne.s32.totalorder %s294, %s297
      %p303 = scmp.eq.s32.totalorder %s18, 0
      %p304 = por %p302, %p303
      %p305 = scmp.ne.s32.totalorder %s294, %s297
      %p306 = scmp.eq.s32.totalorder %s23, 3
      %p307 = por %p305, %p306
      %p308 = scmp.ne.s32.totalorder %s297, %s298
      %p309 = scmp.eq.s32.totalorder %s23, 0
      %p310 = por %p308, %p309
      %p311 = scmp.ne.s32.totalorder %s297, %s298
      %p312 = scmp.eq.s32.totalorder %s24, 3
      %p313 = por %p311, %p312
      %p315 = scmp.ne.s32.totalorder %s298, %s314
      %p316 = scmp.eq.s32.totalorder %s24, 0
      %p317 = por %p315, %p316
      %p318 = scmp.le.s32.totalorder 1, %s18
      %p319 = scmp.lt.s32.totalorder %s18, 5
      %p320 = pnand %p318, %p319
      %p321 = pneg %p320
      // Predicated region
      $region9: #{frescat_forward.2} parent=5 // pred_check
        _
      $region10: #{frescat_forward.2} parent=5 // pred_check_branch
        %323 = sbr.rel (%p320) target = $region12
      $region11: #{frescat_forward.2} parent=5 // pred_region
        %s324 = ssub.s32 %s18, 1
        // Predicated region
        $region13: #{frescat_forward.2} parent=11 // pred_check
          %p325 = pneg %p107
        $region14: #{frescat_forward.2} parent=11 // pred_check_branch
          %327 = sbr.rel (%p325) target = $region16
        $region15: #{frescat_forward.2} parent=11 // pred_region
          _
        $region16: #{frescat_forward.2} parent=11 // pred_fallthru
          _
        // Predicated region
        $region17: #{frescat_forward.2} parent=11 // pred_check
          %p328 = pneg %p128
        $region18: #{frescat_forward.2} parent=11 // pred_check_branch
          %330 = sbr.rel (%p328) target = $region20
        $region19: #{frescat_forward.2} parent=11 // pred_region
          _
        $region20: #{frescat_forward.2} parent=11 // pred_fallthru
          _
        // Predicated region
        $region21: #{frescat_forward.2} parent=11 // pred_check
          %p331 = pneg %p149
        $region22: #{frescat_forward.2} parent=11 // pred_check_branch
          %333 = sbr.rel (%p331) target = $region24
        $region23: #{frescat_forward.2} parent=11 // pred_region
          _
        $region24: #{frescat_forward.2} parent=11 // pred_fallthru
          _
        // Predicated region
        $region25: #{frescat_forward.2} parent=11 // pred_check
          %p334 = pneg %p170
        $region26: #{frescat_forward.2} parent=11 // pred_check_branch
          %336 = sbr.rel (%p334) target = $region28
        $region27: #{frescat_forward.2} parent=11 // pred_region
          _
        $region28: #{frescat_forward.2} parent=11 // pred_fallthru
          _
        // Predicated region
        $region29: #{frescat_forward.2} parent=11 // pred_check
          %p337 = pneg %p191
        $region30: #{frescat_forward.2} parent=11 // pred_check_branch
          %339 = sbr.rel (%p337) target = $region32
        $region31: #{frescat_forward.2} parent=11 // pred_region
          _
        $region32: #{frescat_forward.2} parent=11 // pred_fallthru
          _
        // Predicated region
        $region33: #{frescat_forward.2} parent=11 // pred_check
          %p340 = pneg %p212
        $region34: #{frescat_forward.2} parent=11 // pred_check_branch
          %342 = sbr.rel (%p340) target = $region36
        $region35: #{frescat_forward.2} parent=11 // pred_region
          _
        $region36: #{frescat_forward.2} parent=11 // pred_fallthru
          _
        // Predicated region
        $region37: #{frescat_forward.2} parent=11 // pred_check
          %p343 = pneg %p233
        $region38: #{frescat_forward.2} parent=11 // pred_check_branch
          %345 = sbr.rel (%p343) target = $region40
        $region39: #{frescat_forward.2} parent=11 // pred_region
          _
        $region40: #{frescat_forward.2} parent=11 // pred_fallthru
          _
        // Predicated region
        $region41: #{frescat_forward.2} parent=11 // pred_check
          %p346 = pneg %p254
        $region42: #{frescat_forward.2} parent=11 // pred_check_branch
          %348 = sbr.rel (%p346) target = $region44
        $region43: #{frescat_forward.2} parent=11 // pred_region
          _
        $region44: #{frescat_forward.2} parent=11 // pred_fallthru
          _
      $region12: #{frescat_forward.2} parent=5 // pred_fallthru
        _
      %p349 = scmp.lt.s32.totalorder %s18, 4
      // Predicated region
      $region45: #{frescat_forward.2} parent=5 // pred_check
        %p350 = pneg %p349
      $region46: #{frescat_forward.2} parent=5 // pred_check_branch
        %352 = sbr.rel (%p350) target = $region48
      $region47: #{frescat_forward.2} parent=5 // pred_region
        // Predicated region
        $region49: #{frescat_forward.2} parent=47 // pred_check
          %p353 = pneg %p52
        $region50: #{frescat_forward.2} parent=47 // pred_check_branch
          %355 = sbr.rel (%p353) target = $region52
        $region51: #{frescat_forward.2} parent=47 // pred_region
          %s356 = sand.u32 %s42, 1
          %s357 = sand.u32 %s42, 1
          %s358 = smul.addr %s357, 32
          %s359 = scalar_lea.vmem [#allocation2], %s358
          %s360 = smul.addr %s25, 8
          %s361 = sadd.s32 %s26, %s360
          %s362 = smul.addr %s361, 8
          %s363 = scalar_lea.vmem %s0, %s362
          // Predicated region
          $region53: #{frescat_forward.2} parent=51 // pred_check
            _
          $region54: #{frescat_forward.2} parent=51 // pred_check_branch
            %365 = sbr.rel (0) target = $region56
          $region55: #{frescat_forward.2} parent=51 // pred_region
            // Predicated region
            $region57: #{frescat_forward.2} parent=55 // pred_check
              _
            $region58: #{frescat_forward.2} parent=55 // pred_check_branch
              %367 = sbr.rel (0) target = $region60
            $region59: #{frescat_forward.2} parent=55 // pred_region
              // Predicated region
              $region72: #{frescat_forward.2} parent=59 // pred_check
                _
              $region73: #{frescat_forward.2} parent=59 // pred_check_branch
                %388 = sbr.rel (0) target = $region75
              $region74: #{frescat_forward.2} parent=59 // pred_region
                loop: start=0, step=1, limit=1
                $region76: #{frescat_forward.2} parent=74 // loop_pre_header
                  _
                $region77: #{frescat_forward.2} parent=74 // loop_header
                  %s390 = sphi 0, %s394
                  %p391 = scmp.ge.s32.totalorder %s390, 1
                  %s395 = sphi %s363, %s363
                  %s396 = sphi %s359, %s359
                $region78: #{frescat_forward.2} parent=74 // loop_header_branch
                  %393 = sbr.rel (%p391) target = $region82
                $region79: #{frescat_forward.2} parent=74 // loop_body
                  %v397 = vld [vmem:[%s395] sm:$0xff]
                  %398 = vst [vmem:[%s396] sm:$0xff] %v397
                  %v399 = vld [vmem:[%s395 + $0x10] sm:$0xff]
                  %400 = vst [vmem:[%s396 + $0x8] sm:$0xff] %v399
                  %v401 = vld [vmem:[%s395 + $0x20] sm:$0xff]
                  %402 = vst [vmem:[%s396 + $0x10] sm:$0xff] %v401
                  %v403 = vld [vmem:[%s395 + $0x30] sm:$0xff]
                  %404 = vst [vmem:[%s396 + $0x18] sm:$0xff] %v403
                $region80: #{frescat_forward.2} parent=74 // loop_footer
                  %s394 = sadd.s32 1, %s390
                $region81: #{frescat_forward.2} parent=74 // loop_footer_branch
                  %389 = sbr.rel target = $region77
                $region82: #{frescat_forward.2} parent=74 // loop_exit
                  _
              $region75: #{frescat_forward.2} parent=59 // pred_fallthru
                _
              // Predicated region
              $region83: #{frescat_forward.2} parent=59 // pred_check
                _
              $region84: #{frescat_forward.2} parent=59 // pred_check_branch
                %406 = sbr.rel target = $region86
              $region85: #{frescat_forward.2} parent=59 // pred_region
                _
              $region86: #{frescat_forward.2} parent=59 // pred_fallthru
                _
            $region60: #{frescat_forward.2} parent=55 // pred_fallthru
              _
            // Predicated region
            $region61: #{frescat_forward.2} parent=55 // pred_check
              _
            $region62: #{frescat_forward.2} parent=55 // pred_check_branch
              %369 = sbr.rel target = $region64
            $region63: #{frescat_forward.2} parent=55 // pred_region
              loop: start=0, step=1, limit=1
              $region65: #{frescat_forward.2} parent=63 // loop_pre_header
                _
              $region66: #{frescat_forward.2} parent=63 // loop_header
                %s372 = sphi 0, %s376
                %p373 = scmp.ge.s32.totalorder %s372, 1
                %s377 = sphi %s363, %s363
                %s378 = sphi %s359, %s359
              $region67: #{frescat_forward.2} parent=63 // loop_header_branch
                %375 = sbr.rel (%p373) target = $region71
              $region68: #{frescat_forward.2} parent=63 // loop_body
                %v379 = vld [vmem:[%s377] sm:$0xff]
                %380 = vst [vmem:[%s378] sm:$0xff] %v379
                %v381 = vld [vmem:[%s377 + $0x10] sm:$0xff]
                %382 = vst [vmem:[%s378 + $0x8] sm:$0xff] %v381
                %v383 = vld [vmem:[%s377 + $0x20] sm:$0xff]
                %384 = vst [vmem:[%s378 + $0x10] sm:$0xff] %v383
                %v385 = vld [vmem:[%s377 + $0x30] sm:$0xff]
                %386 = vst [vmem:[%s378 + $0x18] sm:$0xff] %v385
              $region69: #{frescat_forward.2} parent=63 // loop_footer
                %s376 = sadd.s32 1, %s372
              $region70: #{frescat_forward.2} parent=63 // loop_footer_branch
                %371 = sbr.rel target = $region66
              $region71: #{frescat_forward.2} parent=63 // loop_exit
                _
            $region64: #{frescat_forward.2} parent=55 // pred_fallthru
              _
          $region56: #{frescat_forward.2} parent=51 // pred_fallthru
            _
          %407 = vnop
        $region52: #{frescat_forward.2} parent=47 // pred_fallthru
          _
        // Predicated region
        $region87: #{frescat_forward.2} parent=47 // pred_check
          %p408 = pneg %p80
        $region88: #{frescat_forward.2} parent=47 // pred_check_branch
          %410 = sbr.rel (%p408) target = $region90
        $region89: #{frescat_forward.2} parent=47 // pred_region
          %s411 = sand.u32 %s70, 1
          %s412 = sand.u32 %s70, 1
          %s413 = smul.addr %s412, 32
          %s414 = scalar_lea.vmem [#allocation3], %s413
          %s415 = smul.addr %s25, 8
          %s416 = sadd.s32 %s26, %s415
          %s417 = smul.addr %s416, 8
          %s418 = scalar_lea.vmem %s1, %s417
          // Predicated region
          $region91: #{frescat_forward.2} parent=89 // pred_check
            _
          $region92: #{frescat_forward.2} parent=89 // pred_check_branch
            %420 = sbr.rel (0) target = $region94
          $region93: #{frescat_forward.2} parent=89 // pred_region
            // Predicated region
            $region95: #{frescat_forward.2} parent=93 // pred_check
              _
            $region96: #{frescat_forward.2} parent=93 // pred_check_branch
              %422 = sbr.rel (0) target = $region98
            $region97: #{frescat_forward.2} parent=93 // pred_region
              // Predicated region
              $region110: #{frescat_forward.2} parent=97 // pred_check
                _
              $region111: #{frescat_forward.2} parent=97 // pred_check_branch
                %443 = sbr.rel (0) target = $region113
              $region112: #{frescat_forward.2} parent=97 // pred_region
                loop: start=0, step=1, limit=1
                $region114: #{frescat_forward.2} parent=112 // loop_pre_header
                  _
                $region115: #{frescat_forward.2} parent=112 // loop_header
                  %s445 = sphi 0, %s449
                  %p446 = scmp.ge.s32.totalorder %s445, 1
                  %s450 = sphi %s418, %s418
                  %s451 = sphi %s414, %s414
                $region116: #{frescat_forward.2} parent=112 // loop_header_branch
                  %448 = sbr.rel (%p446) target = $region120
                $region117: #{frescat_forward.2} parent=112 // loop_body
                  %v452 = vld [vmem:[%s450] sm:$0xff]
                  %453 = vst [vmem:[%s451] sm:$0xff] %v452
                  %v454 = vld [vmem:[%s450 + $0x10] sm:$0xff]
                  %455 = vst [vmem:[%s451 + $0x8] sm:$0xff] %v454
                  %v456 = vld [vmem:[%s450 + $0x20] sm:$0xff]
                  %457 = vst [vmem:[%s451 + $0x10] sm:$0xff] %v456
                  %v458 = vld [vmem:[%s450 + $0x30] sm:$0xff]
                  %459 = vst [vmem:[%s451 + $0x18] sm:$0xff] %v458
                $region118: #{frescat_forward.2} parent=112 // loop_footer
                  %s449 = sadd.s32 1, %s445
                $region119: #{frescat_forward.2} parent=112 // loop_footer_branch
                  %444 = sbr.rel target = $region115
                $region120: #{frescat_forward.2} parent=112 // loop_exit
                  _
              $region113: #{frescat_forward.2} parent=97 // pred_fallthru
                _
              // Predicated region
              $region121: #{frescat_forward.2} parent=97 // pred_check
                _
              $region122: #{frescat_forward.2} parent=97 // pred_check_branch
                %461 = sbr.rel target = $region124
              $region123: #{frescat_forward.2} parent=97 // pred_region
                _
              $region124: #{frescat_forward.2} parent=97 // pred_fallthru
                _
            $region98: #{frescat_forward.2} parent=93 // pred_fallthru
              _
            // Predicated region
            $region99: #{frescat_forward.2} parent=93 // pred_check
              _
            $region100: #{frescat_forward.2} parent=93 // pred_check_branch
              %424 = sbr.rel target = $region102
            $region101: #{frescat_forward.2} parent=93 // pred_region
              loop: start=0, step=1, limit=1
              $region103: #{frescat_forward.2} parent=101 // loop_pre_header
                _
              $region104: #{frescat_forward.2} parent=101 // loop_header
                %s427 = sphi 0, %s431
                %p428 = scmp.ge.s32.totalorder %s427, 1
                %s432 = sphi %s418, %s418
                %s433 = sphi %s414, %s414
              $region105: #{frescat_forward.2} parent=101 // loop_header_branch
                %430 = sbr.rel (%p428) target = $region109
              $region106: #{frescat_forward.2} parent=101 // loop_body
                %v434 = vld [vmem:[%s432] sm:$0xff]
                %435 = vst [vmem:[%s433] sm:$0xff] %v434
                %v436 = vld [vmem:[%s432 + $0x10] sm:$0xff]
                %437 = vst [vmem:[%s433 + $0x8] sm:$0xff] %v436
                %v438 = vld [vmem:[%s432 + $0x20] sm:$0xff]
                %439 = vst [vmem:[%s433 + $0x10] sm:$0xff] %v438
                %v440 = vld [vmem:[%s432 + $0x30] sm:$0xff]
                %441 = vst [vmem:[%s433 + $0x18] sm:$0xff] %v440
              $region107: #{frescat_forward.2} parent=101 // loop_footer
                %s431 = sadd.s32 1, %s427
              $region108: #{frescat_forward.2} parent=101 // loop_footer_branch
                %426 = sbr.rel target = $region104
              $region109: #{frescat_forward.2} parent=101 // loop_exit
                _
            $region102: #{frescat_forward.2} parent=93 // pred_fallthru
              _
          $region94: #{frescat_forward.2} parent=89 // pred_fallthru
            _
          %462 = vnop
        $region90: #{frescat_forward.2} parent=47 // pred_fallthru
          _
      $region48: #{frescat_forward.2} parent=5 // pred_fallthru
        _
      %p463 = scmp.le.s32.totalorder 1, %s18
      %p464 = scmp.lt.s32.totalorder %s18, 5
      %p465 = pnand %p463, %p464
      %p466 = pneg %p465
      // Predicated region
      $region125: #{frescat_forward.2} parent=5 // pred_check
        _
      $region126: #{frescat_forward.2} parent=5 // pred_check_branch
        %468 = sbr.rel (%p465) target = $region128
      $region127: #{frescat_forward.2} parent=5 // pred_region
        %s469 = ssub.s32 %s18, 1
        %s470 = sand.u32 %s45, 1
        %s471 = sand.u32 %s45, 1
        %s472 = smul.addr %s471, 32
        %s473 = scalar_lea.vmem [#allocation2], %s472
        // Predicated region
        $region129: #{frescat_forward.2} parent=127 // pred_check
          %p474 = pneg %p58
        $region130: #{frescat_forward.2} parent=127 // pred_check_branch
          %476 = sbr.rel (%p474) target = $region132
        $region131: #{frescat_forward.2} parent=127 // pred_region
          _
        $region132: #{frescat_forward.2} parent=127 // pred_fallthru
          _
        %s477 = sand.u32 %s73, 1
        %s478 = sand.u32 %s73, 1
        %s479 = smul.addr %s478, 32
        %s480 = scalar_lea.vmem [#allocation3], %s479
        // Predicated region
        $region133: #{frescat_forward.2} parent=127 // pred_check
          %p481 = pneg %p86
        $region134: #{frescat_forward.2} parent=127 // pred_check_branch
          %483 = sbr.rel (%p481) target = $region136
        $region135: #{frescat_forward.2} parent=127 // pred_region
          _
        $region136: #{frescat_forward.2} parent=127 // pred_fallthru
          _
        %s484 = sand.u32 %s45, 1
        %s485 = sand.u32 %s45, 1
        %s486 = smul.addr %s485, 32
        %s487 = scalar_lea.vmem [#allocation2], %s486
        %p488 = pneg %p58
        %p489 = pneg %p55
        %s490 = sand.u32 %s73, 1
        %s491 = sand.u32 %s73, 1
        %s492 = smul.addr %s491, 32
        %s493 = scalar_lea.vmem [#allocation3], %s492
        %p494 = pneg %p86
        %p495 = pneg %p83
        %p496 = pneg %p107
        %p497 = pneg %p104
        %p498 = pneg %p128
        %p499 = pneg %p125
        %p500 = pneg %p149
        %p501 = pneg %p146
        %p502 = pneg %p170
        %p503 = pneg %p167
        %p504 = pneg %p191
        %p505 = pneg %p188
        %p506 = pneg %p212
        %p507 = pneg %p209
        %p508 = pneg %p233
        %p509 = pneg %p230
        %p510 = pneg %p254
        %p511 = pneg %p251
        %p512 = pneg %p282
        %p513 = pneg %p279
        %s514 = sand.u32 %s269, 1
        %s515 = sand.u32 %s269, 1
        %s516 = smul.addr %s515, 32
        %s517 = scalar_lea.vmem [#allocation4], %s516
        %p518 = pneg %p310
        %p519 = pneg %p307
        %s520 = sand.u32 %s297, 1
        %s521 = sand.u32 %s297, 1
        %s522 = smul.addr %s521, 32
        %s523 = scalar_lea.vmem [#allocation5], %s522
        %v524 = vld [vmem:[%s473] sm:$0xff]
        %v525 = vld [vmem:[%s473 + $0x8] sm:$0xff]
        %v526 = vld [vmem:[%s473 + $0x10] sm:$0xff]
        %v527 = vld [vmem:[%s473 + $0x18] sm:$0xff]
        %v528 = vld [vmem:[%s480] sm:$0xff]
        %v529 = vld [vmem:[%s480 + $0x8] sm:$0xff]
        %v530 = vld [vmem:[%s480 + $0x10] sm:$0xff]
        %v531 = vld [vmem:[%s480 + $0x18] sm:$0xff]
        %v532 = vld [vmem:[%s2] sm:$0xff]
        %v533 = vld [vmem:[%s2 + $0x8] sm:$0xff]
        %v534 = vld [vmem:[%s2 + $0x10] sm:$0xff]
        %v535 = vld [vmem:[%s2 + $0x18] sm:$0xff]
        %v536 = vld [vmem:[%s3] sm:$0xff]
        %v537 = vld [vmem:[%s3 + $0x8] sm:$0xff]
        %v538 = vld [vmem:[%s3 + $0x10] sm:$0xff]
        %v539 = vld [vmem:[%s3 + $0x18] sm:$0xff]
        %541 = vset.pattern.permute.xlu0 0
        %542 = vperm.xlu0 %541, %v536
        %v543 = vpop.permute.xlu0 %542
        %546 = vset.pattern.permute.xlu0 0
        %547 = vperm.xlu0 %546, %v537
        %v548 = vpop.permute.xlu0 %547
        %551 = vset.pattern.permute.xlu0 0
        %552 = vperm.xlu0 %551, %v538
        %v553 = vpop.permute.xlu0 %552
        %556 = vset.pattern.permute.xlu0 0
        %557 = vperm.xlu0 %556, %v539
        %v558 = vpop.permute.xlu0 %557
        %vm560 = vcmask 261120
        %v562 = vsel %vm560, %v532, 0
        %v565 = vsel %vm560, %v533, 0
        %v568 = vsel %vm560, %v534, 0
        %v571 = vsel %vm560, %v535, 0
        %573 = vmatprep.subr.mxu0 0.0
        %574 = vmatpush1.msra.mxu0 %v524
        %575 = vmatprep.subr.mxu0 0.0
        %576 = vmatpush1.msra.mxu0 %v525
        %577 = vmatprep.subr.mxu0 0.0
        %578 = vmatpush1.msra.mxu0 %v526
        %579 = vmatprep.subr.mxu0 0.0
        %580 = vmatpush1.msra.mxu0 %v527
        %581 = vmatprep.subr.mxu0 0.0
        %582 = vmatpush1.msra.mxu0 0.0
        %583 = vmatprep.subr.mxu0 0.0
        %584 = vmatpush1.msra.mxu0 0.0
        %585 = vmatprep.subr.mxu0 0.0
        %586 = vmatpush1.msra.mxu0 0.0
        %587 = vmatprep.subr.mxu0 0.0
        %588 = vmatpush1.msra.mxu0 0.0
        %589 = vmatprep.subr.mxu0 0.0
        %590 = vmatpush1.msra.mxu0 0.0
        %591 = vmatprep.subr.mxu0 0.0
        %592 = vmatpush1.msra.mxu0 0.0
        %593 = vmatprep.subr.mxu0 0.0
        %594 = vmatpush1.msra.mxu0 0.0
        %595 = vmatprep.subr.mxu0 0.0
        %596 = vmatpush1.msra.mxu0 0.0
        %597 = vmatprep.subr.mxu0 0.0
        %598 = vmatpush1.msra.mxu0 0.0
        %599 = vmatprep.subr.mxu0 0.0
        %600 = vmatpush1.msra.mxu0 0.0
        %601 = vmatprep.subr.mxu0 0.0
        %602 = vmatpush1.msra.mxu0 0.0
        %603 = vmatprep.subr.mxu0 0.0
        %604 = vmatpush1.msra.mxu0 0.0
        %605 = vmatprep.subr.mxu0 0.0
        %606 = vmatpush1.msra.mxu0 0.0
        %607 = vmatprep.subr.mxu0 0.0
        %608 = vmatpush1.msra.mxu0 0.0
        %609 = vmatprep.subr.mxu0 0.0
        %610 = vmatpush1.msra.mxu0 0.0
        %611 = vmatprep.subr.mxu0 0.0
        %612 = vmatpush1.msra.mxu0 0.0
        %613 = vmatprep.subr.mxu0 0.0
        %614 = vmatpush1.msra.mxu0 0.0
        %615 = vmatprep.subr.mxu0 0.0
        %616 = vmatpush1.msra.mxu0 0.0
        %617 = vmatprep.subr.mxu0 0.0
        %618 = vmatpush1.msra.mxu0 0.0
        %619 = vmatprep.subr.mxu0 0.0
        %620 = vmatpush1.msra.mxu0 0.0
        %621 = vmatprep.subr.mxu0 0.0
        %622 = vmatpush1.msra.mxu0 0.0
        %623 = vmatprep.subr.mxu0 0.0
        %624 = vmatpush1.msra.mxu0 0.0
        %625 = vmatprep.subr.mxu0 0.0
        %626 = vmatpush1.msra.mxu0 0.0
        %627 = vmatprep.subr.mxu0 0.0
        %628 = vmatpush1.msra.mxu0 0.0
        %629 = vmatprep.subr.mxu0 0.0
        %630 = vmatpush1.msra.mxu0 0.0
        %631 = vmatprep.subr.mxu0 0.0
        %632 = vmatpush1.msra.mxu0 0.0
        %633 = vmatprep.subr.mxu0 0.0
        %634 = vmatpush1.msra.mxu0 0.0
        %635 = vmatprep.subr.mxu0 0.0
        %636 = vmatpush1.msra.mxu0 0.0
        %637 = vmatprep.mubr.f32.mxu0 0.0
        %638 = vmatmul.mubr.f32.gmra.mrb[0].mxu0 %v562
        %v639 = vpop.f32.mrb[0].mxu0
        %v640 = vadd.f32 %v543, %v639
        %v641 = vpop.f32.mrb[0].mxu0
        %642 = vmatprep.mubr.f32.mxu0 0.0
        %643 = vmatmul.mubr.f32.gmra.mrb[0].mxu0 %v565
        %v644 = vpop.f32.mrb[0].mxu0
        %v645 = vadd.f32 %v548, %v644
        %v646 = vpop.f32.mrb[0].mxu0
        %647 = vmatprep.mubr.f32.mxu0 0.0
        %648 = vmatmul.mubr.f32.gmra.mrb[0].mxu0 %v568
        %v649 = vpop.f32.mrb[0].mxu0
        %v650 = vadd.f32 %v553, %v649
        %v651 = vpop.f32.mrb[0].mxu0
        %652 = vmatprep.mubr.f32.mxu0 0.0
        %653 = vmatmul.mubr.f32.gmra.mrb[0].mxu0 %v571
        %v654 = vpop.f32.mrb[0].mxu0
        %v655 = vadd.f32 %v558, %v654
        %v656 = vpop.f32.mrb[0].mxu0
        %657 = vdwg.mxu0
        %vm658 = vcmp.gt.f32.partialorder %v640, 0.0
        %vm659 = vcmp.gt.f32.partialorder %v645, 0.0
        %vm660 = vcmp.gt.f32.partialorder %v650, 0.0
        %vm661 = vcmp.gt.f32.partialorder %v655, 0.0
        %v662 = vmul.f32 %v640, 0.1
        %v663 = vmul.f32 %v645, 0.1
        %v664 = vmul.f32 %v650, 0.1
        %v665 = vmul.f32 %v655, 0.1
        %v666 = vsel %vm658, %v640, %v662
        %v667 = vsel %vm659, %v645, %v663
        %v668 = vsel %vm660, %v650, %v664
        %v669 = vsel %vm661, %v655, %v665
        %v670 = vld [vmem:[%s4] sm:$0xff]
        %v671 = vld [vmem:[%s4 + $0x8] sm:$0xff]
        %v672 = vld [vmem:[%s4 + $0x10] sm:$0xff]
        %v673 = vld [vmem:[%s4 + $0x18] sm:$0xff]
        %v674 = vld [vmem:[%s5] sm:$0xff]
        %v675 = vld [vmem:[%s5 + $0x8] sm:$0xff]
        %v676 = vld [vmem:[%s5 + $0x10] sm:$0xff]
        %v677 = vld [vmem:[%s5 + $0x18] sm:$0xff]
        %679 = vset.pattern.permute.xlu0 0
        %680 = vperm.xlu0 %679, %v674
        %v681 = vpop.permute.xlu0 %680
        %684 = vset.pattern.permute.xlu0 0
        %685 = vperm.xlu0 %684, %v675
        %v686 = vpop.permute.xlu0 %685
        %689 = vset.pattern.permute.xlu0 0
        %690 = vperm.xlu0 %689, %v676
        %v691 = vpop.permute.xlu0 %690
        %694 = vset.pattern.permute.xlu0 0
        %695 = vperm.xlu0 %694, %v677
        %v696 = vpop.permute.xlu0 %695
        %v699 = vsel %vm560, %v670, 0
        %v702 = vsel %vm560, %v671, 0
        %v705 = vsel %vm560, %v672, 0
        %v708 = vsel %vm560, %v673, 0
        %710 = vmatprep.subr.mxu0 0.0
        %711 = vmatpush1.msra.mxu0 %v666
        %712 = vmatprep.subr.mxu0 0.0
        %713 = vmatpush1.msra.mxu0 %v667
        %714 = vmatprep.subr.mxu0 0.0
        %715 = vmatpush1.msra.mxu0 %v668
        %716 = vmatprep.subr.mxu0 0.0
        %717 = vmatpush1.msra.mxu0 %v669
        %718 = vmatprep.subr.mxu0 0.0
        %719 = vmatpush1.msra.mxu0 0.0
        %720 = vmatprep.subr.mxu0 0.0
        %721 = vmatpush1.msra.mxu0 0.0
        %722 = vmatprep.subr.mxu0 0.0
        %723 = vmatpush1.msra.mxu0 0.0
        %724 = vmatprep.subr.mxu0 0.0
        %725 = vmatpush1.msra.mxu0 0.0
        %726 = vmatprep.subr.mxu0 0.0
        %727 = vmatpush1.msra.mxu0 0.0
        %728 = vmatprep.subr.mxu0 0.0
        %729 = vmatpush1.msra.mxu0 0.0
        %730 = vmatprep.subr.mxu0 0.0
        %731 = vmatpush1.msra.mxu0 0.0
        %732 = vmatprep.subr.mxu0 0.0
        %733 = vmatpush1.msra.mxu0 0.0
        %734 = vmatprep.subr.mxu0 0.0
        %735 = vmatpush1.msra.mxu0 0.0
        %736 = vmatprep.subr.mxu0 0.0
        %737 = vmatpush1.msra.mxu0 0.0
        %738 = vmatprep.subr.mxu0 0.0
        %739 = vmatpush1.msra.mxu0 0.0
        %740 = vmatprep.subr.mxu0 0.0
        %741 = vmatpush1.msra.mxu0 0.0
        %742 = vmatprep.subr.mxu0 0.0
        %743 = vmatpush1.msra.mxu0 0.0
        %744 = vmatprep.subr.mxu0 0.0
        %745 = vmatpush1.msra.mxu0 0.0
        %746 = vmatprep.subr.mxu0 0.0
        %747 = vmatpush1.msra.mxu0 0.0
        %748 = vmatprep.subr.mxu0 0.0
        %749 = vmatpush1.msra.mxu0 0.0
        %750 = vmatprep.subr.mxu0 0.0
        %751 = vmatpush1.msra.mxu0 0.0
        %752 = vmatprep.subr.mxu0 0.0
        %753 = vmatpush1.msra.mxu0 0.0
        %754 = vmatprep.subr.mxu0 0.0
        %755 = vmatpush1.msra.mxu0 0.0
        %756 = vmatprep.subr.mxu0 0.0
        %757 = vmatpush1.msra.mxu0 0.0
        %758 = vmatprep.subr.mxu0 0.0
        %759 = vmatpush1.msra.mxu0 0.0
        %760 = vmatprep.subr.mxu0 0.0
        %761 = vmatpush1.msra.mxu0 0.0
        %762 = vmatprep.subr.mxu0 0.0
        %763 = vmatpush1.msra.mxu0 0.0
        %764 = vmatprep.subr.mxu0 0.0
        %765 = vmatpush1.msra.mxu0 0.0
        %766 = vmatprep.subr.mxu0 0.0
        %767 = vmatpush1.msra.mxu0 0.0
        %768 = vmatprep.subr.mxu0 0.0
        %769 = vmatpush1.msra.mxu0 0.0
        %770 = vmatprep.subr.mxu0 0.0
        %771 = vmatpush1.msra.mxu0 0.0
        %772 = vmatprep.subr.mxu0 0.0
        %773 = vmatpush1.msra.mxu0 0.0
        %774 = vmatprep.mubr.f32.mxu0 0.0
        %775 = vmatmul.mubr.f32.gmra.mrb[0].mxu0 %v699
        %v776 = vpop.f32.mrb[0].mxu0
        %v777 = vadd.f32 %v681, %v776
        %v778 = vpop.f32.mrb[0].mxu0
        %779 = vmatprep.mubr.f32.mxu0 0.0
        %780 = vmatmul.mubr.f32.gmra.mrb[0].mxu0 %v702
        %v781 = vpop.f32.mrb[0].mxu0
        %v782 = vadd.f32 %v686, %v781
        %v783 = vpop.f32.mrb[0].mxu0
        %784 = vmatprep.mubr.f32.mxu0 0.0
        %785 = vmatmul.mubr.f32.gmra.mrb[0].mxu0 %v705
        %v786 = vpop.f32.mrb[0].mxu0
        %v787 = vadd.f32 %v691, %v786
        %v788 = vpop.f32.mrb[0].mxu0
        %789 = vmatprep.mubr.f32.mxu0 0.0
        %790 = vmatmul.mubr.f32.gmra.mrb[0].mxu0 %v708
        %v791 = vpop.f32.mrb[0].mxu0
        %v792 = vadd.f32 %v696, %v791
        %v793 = vpop.f32.mrb[0].mxu0
        %794 = vdwg.mxu0
        %v795 = vld [vmem:[%s6] sm:$0xff]
        %v796 = vld [vmem:[%s6 + $0x8] sm:$0xff]
        %v797 = vld [vmem:[%s6 + $0x10] sm:$0xff]
        %v798 = vld [vmem:[%s6 + $0x18] sm:$0xff]
        %v799 = vld [vmem:[%s7] sm:$0xff]
        %v800 = vld [vmem:[%s7 + $0x8] sm:$0xff]
        %v801 = vld [vmem:[%s7 + $0x10] sm:$0xff]
        %v802 = vld [vmem:[%s7 + $0x18] sm:$0xff]
        %804 = vset.pattern.permute.xlu0 0
        %805 = vperm.xlu0 %804, %v799
        %v806 = vpop.permute.xlu0 %805
        %809 = vset.pattern.permute.xlu0 0
        %810 = vperm.xlu0 %809, %v800
        %v811 = vpop.permute.xlu0 %810
        %814 = vset.pattern.permute.xlu0 0
        %815 = vperm.xlu0 %814, %v801
        %v816 = vpop.permute.xlu0 %815
        %819 = vset.pattern.permute.xlu0 0
        %820 = vperm.xlu0 %819, %v802
        %v821 = vpop.permute.xlu0 %820
        %v824 = vsel %vm560, %v795, 0
        %v827 = vsel %vm560, %v796, 0
        %v830 = vsel %vm560, %v797, 0
        %v833 = vsel %vm560, %v798, 0
        %835 = vmatprep.subr.mxu0 0.0
        %836 = vmatpush1.msra.mxu0 %v528
        %837 = vmatprep.subr.mxu0 0.0
        %838 = vmatpush1.msra.mxu0 %v529
        %839 = vmatprep.subr.mxu0 0.0
        %840 = vmatpush1.msra.mxu0 %v530
        %841 = vmatprep.subr.mxu0 0.0
        %842 = vmatpush1.msra.mxu0 %v531
        %843 = vmatprep.subr.mxu0 0.0
        %844 = vmatpush1.msra.mxu0 0.0
        %845 = vmatprep.subr.mxu0 0.0
        %846 = vmatpush1.msra.mxu0 0.0
        %847 = vmatprep.subr.mxu0 0.0
        %848 = vmatpush1.msra.mxu0 0.0
        %849 = vmatprep.subr.mxu0 0.0
        %850 = vmatpush1.msra.mxu0 0.0
        %851 = vmatprep.subr.mxu0 0.0
        %852 = vmatpush1.msra.mxu0 0.0
        %853 = vmatprep.subr.mxu0 0.0
        %854 = vmatpush1.msra.mxu0 0.0
        %855 = vmatprep.subr.mxu0 0.0
        %856 = vmatpush1.msra.mxu0 0.0
        %857 = vmatprep.subr.mxu0 0.0
        %858 = vmatpush1.msra.mxu0 0.0
        %859 = vmatprep.subr.mxu0 0.0
        %860 = vmatpush1.msra.mxu0 0.0
        %861 = vmatprep.subr.mxu0 0.0
        %862 = vmatpush1.msra.mxu0 0.0
        %863 = vmatprep.subr.mxu0 0.0
        %864 = vmatpush1.msra.mxu0 0.0
        %865 = vmatprep.subr.mxu0 0.0
        %866 = vmatpush1.msra.mxu0 0.0
        %867 = vmatprep.subr.mxu0 0.0
        %868 = vmatpush1.msra.mxu0 0.0
        %869 = vmatprep.subr.mxu0 0.0
        %870 = vmatpush1.msra.mxu0 0.0
        %871 = vmatprep.subr.mxu0 0.0
        %872 = vmatpush1.msra.mxu0 0.0
        %873 = vmatprep.subr.mxu0 0.0
        %874 = vmatpush1.msra.mxu0 0.0
        %875 = vmatprep.subr.mxu0 0.0
        %876 = vmatpush1.msra.mxu0 0.0
        %877 = vmatprep.subr.mxu0 0.0
        %878 = vmatpush1.msra.mxu0 0.0
        %879 = vmatprep.subr.mxu0 0.0
        %880 = vmatpush1.msra.mxu0 0.0
        %881 = vmatprep.subr.mxu0 0.0
        %882 = vmatpush1.msra.mxu0 0.0
        %883 = vmatprep.subr.mxu0 0.0
        %884 = vmatpush1.msra.mxu0 0.0
        %885 = vmatprep.subr.mxu0 0.0
        %886 = vmatpush1.msra.mxu0 0.0
        %887 = vmatprep.subr.mxu0 0.0
        %888 = vmatpush1.msra.mxu0 0.0
        %889 = vmatprep.subr.mxu0 0.0
        %890 = vmatpush1.msra.mxu0 0.0
        %891 = vmatprep.subr.mxu0 0.0
        %892 = vmatpush1.msra.mxu0 0.0
        %893 = vmatprep.subr.mxu0 0.0
        %894 = vmatpush1.msra.mxu0 0.0
        %895 = vmatprep.subr.mxu0 0.0
        %896 = vmatpush1.msra.mxu0 0.0
        %897 = vmatprep.subr.mxu0 0.0
        %898 = vmatpush1.msra.mxu0 0.0
        %899 = vmatprep.mubr.f32.mxu0 0.0
        %900 = vmatmul.mubr.f32.gmra.mrb[0].mxu0 %v824
        %v901 = vpop.f32.mrb[0].mxu0
        %v902 = vadd.f32 %v806, %v901
        %v903 = vpop.f32.mrb[0].mxu0
        %904 = vmatprep.mubr.f32.mxu0 0.0
        %905 = vmatmul.mubr.f32.gmra.mrb[0].mxu0 %v827
        %v906 = vpop.f32.mrb[0].mxu0
        %v907 = vadd.f32 %v811, %v906
        %v908 = vpop.f32.mrb[0].mxu0
        %909 = vmatprep.mubr.f32.mxu0 0.0
        %910 = vmatmul.mubr.f32.gmra.mrb[0].mxu0 %v830
        %v911 = vpop.f32.mrb[0].mxu0
        %v912 = vadd.f32 %v816, %v911
        %v913 = vpop.f32.mrb[0].mxu0
        %914 = vmatprep.mubr.f32.mxu0 0.0
        %915 = vmatmul.mubr.f32.gmra.mrb[0].mxu0 %v833
        %v916 = vpop.f32.mrb[0].mxu0
        %v917 = vadd.f32 %v821, %v916
        %v918 = vpop.f32.mrb[0].mxu0
        %919 = vdwg.mxu0
        %vm920 = vcmp.gt.f32.partialorder %v902, 0.0
        %vm921 = vcmp.gt.f32.partialorder %v907, 0.0
        %vm922 = vcmp.gt.f32.partialorder %v912, 0.0
        %vm923 = vcmp.gt.f32.partialorder %v917, 0.0
        %v924 = vmul.f32 %v902, 0.1
        %v925 = vmul.f32 %v907, 0.1
        %v926 = vmul.f32 %v912, 0.1
        %v927 = vmul.f32 %v917, 0.1
        %v928 = vsel %vm920, %v902, %v924
        %v929 = vsel %vm921, %v907, %v925
        %v930 = vsel %vm922, %v912, %v926
        %v931 = vsel %vm923, %v917, %v927
        %v932 = vld [vmem:[%s8] sm:$0xff]
        %v933 = vld [vmem:[%s8 + $0x8] sm:$0xff]
        %v934 = vld [vmem:[%s8 + $0x10] sm:$0xff]
        %v935 = vld [vmem:[%s8 + $0x18] sm:$0xff]
        %v936 = vld [vmem:[%s9] sm:$0xff]
        %v937 = vld [vmem:[%s9 + $0x8] sm:$0xff]
        %v938 = vld [vmem:[%s9 + $0x10] sm:$0xff]
        %v939 = vld [vmem:[%s9 + $0x18] sm:$0xff]
        %941 = vset.pattern.permute.xlu0 0
        %942 = vperm.xlu0 %941, %v936
        %v943 = vpop.permute.xlu0 %942
        %946 = vset.pattern.permute.xlu0 0
        %947 = vperm.xlu0 %946, %v937
        %v948 = vpop.permute.xlu0 %947
        %951 = vset.pattern.permute.xlu0 0
        %952 = vperm.xlu0 %951, %v938
        %v953 = vpop.permute.xlu0 %952
        %956 = vset.pattern.permute.xlu0 0
        %957 = vperm.xlu0 %956, %v939
        %v958 = vpop.permute.xlu0 %957
        %v961 = vsel %vm560, %v932, 0
        %v964 = vsel %vm560, %v933, 0
        %v967 = vsel %vm560, %v934, 0
        %v970 = vsel %vm560, %v935, 0
        %972 = vmatprep.subr.mxu0 0.0
        %973 = vmatpush1.msra.mxu0 %v928
        %974 = vmatprep.subr.mxu0 0.0
        %975 = vmatpush1.msra.mxu0 %v929
        %976 = vmatprep.subr.mxu0 0.0
        %977 = vmatpush1.msra.mxu0 %v930
        %978 = vmatprep.subr.mxu0 0.0
        %979 = vmatpush1.msra.mxu0 %v931
        %980 = vmatprep.subr.mxu0 0.0
        %981 = vmatpush1.msra.mxu0 0.0
        %982 = vmatprep.subr.mxu0 0.0
        %983 = vmatpush1.msra.mxu0 0.0
        %984 = vmatprep.subr.mxu0 0.0
        %985 = vmatpush1.msra.mxu0 0.0
        %986 = vmatprep.subr.mxu0 0.0
        %987 = vmatpush1.msra.mxu0 0.0
        %988 = vmatprep.subr.mxu0 0.0
        %989 = vmatpush1.msra.mxu0 0.0
        %990 = vmatprep.subr.mxu0 0.0
        %991 = vmatpush1.msra.mxu0 0.0
        %992 = vmatprep.subr.mxu0 0.0
        %993 = vmatpush1.msra.mxu0 0.0
        %994 = vmatprep.subr.mxu0 0.0
        %995 = vmatpush1.msra.mxu0 0.0
        %996 = vmatprep.subr.mxu0 0.0
        %997 = vmatpush1.msra.mxu0 0.0
        %998 = vmatprep.subr.mxu0 0.0
        %999 = vmatpush1.msra.mxu0 0.0
        %1000 = vmatprep.subr.mxu0 0.0
        %1001 = vmatpush1.msra.mxu0 0.0
        %1002 = vmatprep.subr.mxu0 0.0
        %1003 = vmatpush1.msra.mxu0 0.0
        %1004 = vmatprep.subr.mxu0 0.0
        %1005 = vmatpush1.msra.mxu0 0.0
        %1006 = vmatprep.subr.mxu0 0.0
        %1007 = vmatpush1.msra.mxu0 0.0
        %1008 = vmatprep.subr.mxu0 0.0
        %1009 = vmatpush1.msra.mxu0 0.0
        %1010 = vmatprep.subr.mxu0 0.0
        %1011 = vmatpush1.msra.mxu0 0.0
        %1012 = vmatprep.subr.mxu0 0.0
        %1013 = vmatpush1.msra.mxu0 0.0
        %1014 = vmatprep.subr.mxu0 0.0
        %1015 = vmatpush1.msra.mxu0 0.0
        %1016 = vmatprep.subr.mxu0 0.0
        %1017 = vmatpush1.msra.mxu0 0.0
        %1018 = vmatprep.subr.mxu0 0.0
        %1019 = vmatpush1.msra.mxu0 0.0
        %1020 = vmatprep.subr.mxu0 0.0
        %1021 = vmatpush1.msra.mxu0 0.0
        %1022 = vmatprep.subr.mxu0 0.0
        %1023 = vmatpush1.msra.mxu0 0.0
        %1024 = vmatprep.subr.mxu0 0.0
        %1025 = vmatpush1.msra.mxu0 0.0
        %1026 = vmatprep.subr.mxu0 0.0
        %1027 = vmatpush1.msra.mxu0 0.0
        %1028 = vmatprep.subr.mxu0 0.0
        %1029 = vmatpush1.msra.mxu0 0.0
        %1030 = vmatprep.subr.mxu0 0.0
        %1031 = vmatpush1.msra.mxu0 0.0
        %1032 = vmatprep.subr.mxu0 0.0
        %1033 = vmatpush1.msra.mxu0 0.0
        %1034 = vmatprep.subr.mxu0 0.0
        %1035 = vmatpush1.msra.mxu0 0.0
        %1036 = vmatprep.mubr.f32.mxu0 0.0
        %1037 = vmatmul.mubr.f32.gmra.mrb[0].mxu0 %v961
        %v1038 = vpop.f32.mrb[0].mxu0
        %v1039 = vadd.f32 %v943, %v1038
        %v1040 = vpop.f32.mrb[0].mxu0
        %1041 = vmatprep.mubr.f32.mxu0 0.0
        %1042 = vmatmul.mubr.f32.gmra.mrb[0].mxu0 %v964
        %v1043 = vpop.f32.mrb[0].mxu0
        %v1044 = vadd.f32 %v948, %v1043
        %v1045 = vpop.f32.mrb[0].mxu0
        %1046 = vmatprep.mubr.f32.mxu0 0.0
        %1047 = vmatmul.mubr.f32.gmra.mrb[0].mxu0 %v967
        %v1048 = vpop.f32.mrb[0].mxu0
        %v1049 = vadd.f32 %v953, %v1048
        %v1050 = vpop.f32.mrb[0].mxu0
        %1051 = vmatprep.mubr.f32.mxu0 0.0
        %1052 = vmatmul.mubr.f32.gmra.mrb[0].mxu0 %v970
        %v1053 = vpop.f32.mrb[0].mxu0
        %v1054 = vadd.f32 %v958, %v1053
        %v1055 = vpop.f32.mrb[0].mxu0
        %1056 = vdwg.mxu0
        %v1057 = vand.u32 2147483647, %v1039
        %vm1058 = vcmp.le.f32.partialorder %v1057, 0.7853982
        %vm1059 = vcmp.lt.s32.totalorder %v1039, 0
        %v1060 = vand.u32 %v1039, 2139095040
        %v1061 = vshrl.u32 %v1060, 23
        %v1062 = vsub.s32 %v1061, 127
        %v1063 = vand.u32 2147483647, %v1039
        %v1064 = vand.u32 %v1063, 8388607
        %v1065 = vor.u32 %v1064, 8388608
        %v1066 = vsub.s32 0, %v1065
        %v1067 = vadd.s32 %v1062, 1
        %vm1068 = vcmp.gt.s32.totalorder %v1067, 0
        %v1069 = vsel %vm1068, %v1067, 0
        %v1070 = vshrl.u32 %v1069, 5
        %v1071 = vand.u32 %v1069, 31
        %v1072 = vsub.s32 32, %v1071
        %v1073 = vshrl.u32 683565275, %v1072
        %v1074 = vshll.u32 683565275, %v1071
        %v1075 = vshrl.u32 2475754826, %v1072
        %v1076 = vor.u32 %v1074, %v1075
        %v1077 = vshll.u32 2475754826, %v1071
        %v1078 = vshrl.u32 2131351028, %v1072
        %v1079 = vor.u32 %v1077, %v1078
        %v1080 = vshll.u32 2131351028, %v1071
        %v1081 = vshrl.u32 2102212464, %v1072
        %v1082 = vor.u32 %v1080, %v1081
        %v1083 = vshll.u32 2102212464, %v1071
        %v1084 = vshrl.u32 920167782, %v1072
        %v1085 = vor.u32 %v1083, %v1084
        %v1086 = vshll.u32 920167782, %v1071
        %v1087 = vshrl.u32 1326507024, %v1072
        %v1088 = vor.u32 %v1086, %v1087
        %vm1089 = vcmp.lt.s32.totalorder %v1070, 1
        %vm1090 = vcmp.lt.s32.totalorder %v1070, 2
        %vm1091 = vcmp.lt.s32.totalorder %v1070, 3
        %vm1092 = vcmp.lt.s32.totalorder %v1070, 4
        %v1093 = vsel %vm1089, %v1073, %v1076
        %v1094 = vsel %vm1092, %v1082, 2102212464
        %v1095 = vsel %vm1091, %v1079, %v1094
        %v1096 = vsel %vm1090, %v1093, %v1095
        %v1097 = vsel %vm1089, %v1076, %v1079
        %v1098 = vsel %vm1092, %v1085, 920167782
        %v1099 = vsel %vm1091, %v1082, %v1098
        %v1100 = vsel %vm1090, %v1097, %v1099
        %v1101 = vsel %vm1089, %v1079, %v1082
        %v1102 = vsel %vm1092, %v1088, 1326507024
        %v1103 = vsel %vm1091, %v1085, %v1102
        %v1104 = vsel %vm1090, %v1101, %v1103
        %v1105 = vshll.u32 %v1065, 8
        %v1106 = vmul.u32.u64.compose %v1105, %v1104
        %v1107 = vextract.low.u32 %v1106
        %v1108 = vextract.high.u32 %v1106
        %v1109 = vmul.u32.u64.compose %v1105, %v1100
        %v1110 = vextract.low.u32 %v1109
        %v1111 = vextract.high.u32 %v1109
        %v1112 = vmul.u32 %v1105, %v1096
        %v1113 = vadd.s32 %v1108, %v1110
        %vm1114 = vc.u32 %v1108, %v1110
        %v1115 = vadd.s32 %v1111, 1
        %v1116 = vsel %vm1114, %v1115, %v1111
        %v1117 = vadd.s32 %v1112, %v1116
        %v1118 = vadd.s32 %v1117, 536870912
        %v1119 = vshrl.u32 %v1118, 30
        %v1120 = vshll.u32 %v1119, 30
        %v1121 = vsub.s32 %v1117, %v1120
        %vm1122 = vcmp.lt.s32.totalorder %v1121, 0
        %v1123 = vsub.s32 0, %v1121
        %v1124 = vsel %vm1122, %v1123, %v1121
        %v1125 = vclz %v1124
        %v1126 = vsub.s32 %v1125, 2
        %vm1127 = vcmp.gt.s32.totalorder 0, %v1126
        %v1128 = vsel %vm1127, 0, %v1126
        %v1129 = vsub.s32 32, %v1128
        %v1130 = vshll.u32 %v1121, %v1128
        %v1131 = vshrl.u32 %v1113, %v1129
        %v1132 = vor.u32 %v1130, %v1131
        %v1133 = vsub.s32 4294967266, %v1128
        %v1134 = vadd.s32 %v1133, 127
        %v1135 = vshll.u32 %v1134, 23
        %v1136 = vor.u32 4788187, %v1135
        %v1137 = vand.u32 2147483647, %v1136
        %v1139 = vcvt.s32.f32 %v1132
        %v1140 = vmul.f32 %v1139, %v1137
        %v1141 = vxor.u32 %v1140, 2147483648
        %v1142 = vsel %vm1059, %v1141, %v1140
        %v1143 = vsub.s32 4, %v1119
        %v1144 = vsel %vm1059, %v1143, %v1119
        %v1145 = vsel %vm1058, %v1039, %v1142
        %v1146 = vsel %vm1058, 0, %v1144
        %v1147 = vcosq.f32.pop %v1145
        %v1148 = vsinq.f32.pop %v1145
        %vm1149 = vweird.f32 %v1039
        %v1150 = vand.u32 %v1146, 3
        %vm1151 = vcmp.lt.s32.totalorder %v1150, 2
        %vm1152 = vcmp.eq.s32.totalorder %v1150, 0
        %v1153 = vxor.u32 %v1148, 2147483648
        %v1154 = vsel %vm1152, %v1147, %v1153
        %vm1155 = vcmp.eq.s32.totalorder %v1150, 2
        %v1156 = vxor.u32 %v1147, 2147483648
        %v1157 = vsel %vm1155, %v1156, %v1148
        %v1158 = vsel %vm1151, %v1154, %v1157
        %v1159 = vsel %vm1149, nan, %v1158
        %v1160 = vand.u32 2147483647, %v1044
        %vm1161 = vcmp.le.f32.partialorder %v1160, 0.7853982
        %vm1162 = vcmp.lt.s32.totalorder %v1044, 0
        %v1163 = vand.u32 %v1044, 2139095040
        %v1164 = vshrl.u32 %v1163, 23
        %v1165 = vsub.s32 %v1164, 127
        %v1166 = vand.u32 2147483647, %v1044
        %v1167 = vand.u32 %v1166, 8388607
        %v1168 = vor.u32 %v1167, 8388608
        %v1169 = vsub.s32 0, %v1168
        %v1170 = vadd.s32 %v1165, 1
        %vm1171 = vcmp.gt.s32.totalorder %v1170, 0
        %v1172 = vsel %vm1171, %v1170, 0
        %v1173 = vshrl.u32 %v1172, 5
        %v1174 = vand.u32 %v1172, 31
        %v1175 = vsub.s32 32, %v1174
        %v1176 = vshrl.u32 683565275, %v1175
        %v1177 = vshll.u32 683565275, %v1174
        %v1178 = vshrl.u32 2475754826, %v1175
        %v1179 = vor.u32 %v1177, %v1178
        %v1180 = vshll.u32 2475754826, %v1174
        %v1181 = vshrl.u32 2131351028, %v1175
        %v1182 = vor.u32 %v1180, %v1181
        %v1183 = vshll.u32 2131351028, %v1174
        %v1184 = vshrl.u32 2102212464, %v1175
        %v1185 = vor.u32 %v1183, %v1184
        %v1186 = vshll.u32 2102212464, %v1174
        %v1187 = vshrl.u32 920167782, %v1175
        %v1188 = vor.u32 %v1186, %v1187
        %v1189 = vshll.u32 920167782, %v1174
        %v1190 = vshrl.u32 1326507024, %v1175
        %v1191 = vor.u32 %v1189, %v1190
        %vm1192 = vcmp.lt.s32.totalorder %v1173, 1
        %vm1193 = vcmp.lt.s32.totalorder %v1173, 2
        %vm1194 = vcmp.lt.s32.totalorder %v1173, 3
        %vm1195 = vcmp.lt.s32.totalorder %v1173, 4
        %v1196 = vsel %vm1192, %v1176, %v1179
        %v1197 = vsel %vm1195, %v1185, 2102212464
        %v1198 = vsel %vm1194, %v1182, %v1197
        %v1199 = vsel %vm1193, %v1196, %v1198
        %v1200 = vsel %vm1192, %v1179, %v1182
        %v1201 = vsel %vm1195, %v1188, 920167782
        %v1202 = vsel %vm1194, %v1185, %v1201
        %v1203 = vsel %vm1193, %v1200, %v1202
        %v1204 = vsel %vm1192, %v1182, %v1185
        %v1205 = vsel %vm1195, %v1191, 1326507024
        %v1206 = vsel %vm1194, %v1188, %v1205
        %v1207 = vsel %vm1193, %v1204, %v1206
        %v1208 = vshll.u32 %v1168, 8
        %v1209 = vmul.u32.u64.compose %v1208, %v1207
        %v1210 = vextract.low.u32 %v1209
        %v1211 = vextract.high.u32 %v1209
        %v1212 = vmul.u32.u64.compose %v1208, %v1203
        %v1213 = vextract.low.u32 %v1212
        %v1214 = vextract.high.u32 %v1212
        %v1215 = vmul.u32 %v1208, %v1199
        %v1216 = vadd.s32 %v1211, %v1213
        %vm1217 = vc.u32 %v1211, %v1213
        %v1218 = vadd.s32 %v1214, 1
        %v1219 = vsel %vm1217, %v1218, %v1214
        %v1220 = vadd.s32 %v1215, %v1219
        %v1221 = vadd.s32 %v1220, 536870912
        %v1222 = vshrl.u32 %v1221, 30
        %v1223 = vshll.u32 %v1222, 30
        %v1224 = vsub.s32 %v1220, %v1223
        %vm1225 = vcmp.lt.s32.totalorder %v1224, 0
        %v1226 = vsub.s32 0, %v1224
        %v1227 = vsel %vm1225, %v1226, %v1224
        %v1228 = vclz %v1227
        %v1229 = vsub.s32 %v1228, 2
        %vm1230 = vcmp.gt.s32.totalorder 0, %v1229
        %v1231 = vsel %vm1230, 0, %v1229
        %v1232 = vsub.s32 32, %v1231
        %v1233 = vshll.u32 %v1224, %v1231
        %v1234 = vshrl.u32 %v1216, %v1232
        %v1235 = vor.u32 %v1233, %v1234
        %v1236 = vsub.s32 4294967266, %v1231
        %v1237 = vadd.s32 %v1236, 127
        %v1238 = vshll.u32 %v1237, 23
        %v1239 = vor.u32 4788187, %v1238
        %v1240 = vand.u32 2147483647, %v1239
        %v1242 = vcvt.s32.f32 %v1235
        %v1243 = vmul.f32 %v1242, %v1240
        %v1244 = vxor.u32 %v1243, 2147483648
        %v1245 = vsel %vm1162, %v1244, %v1243
        %v1246 = vsub.s32 4, %v1222
        %v1247 = vsel %vm1162, %v1246, %v1222
        %v1248 = vsel %vm1161, %v1044, %v1245
        %v1249 = vsel %vm1161, 0, %v1247
        %v1250 = vcosq.f32.pop %v1248
        %v1251 = vsinq.f32.pop %v1248
        %vm1252 = vweird.f32 %v1044
        %v1253 = vand.u32 %v1249, 3
        %vm1254 = vcmp.lt.s32.totalorder %v1253, 2
        %vm1255 = vcmp.eq.s32.totalorder %v1253, 0
        %v1256 = vxor.u32 %v1251, 2147483648
        %v1257 = vsel %vm1255, %v1250, %v1256
        %vm1258 = vcmp.eq.s32.totalorder %v1253, 2
        %v1259 = vxor.u32 %v1250, 2147483648
        %v1260 = vsel %vm1258, %v1259, %v1251
        %v1261 = vsel %vm1254, %v1257, %v1260
        %v1262 = vsel %vm1252, nan, %v1261
        %v1263 = vand.u32 2147483647, %v1049
        %vm1264 = vcmp.le.f32.partialorder %v1263, 0.7853982
        %vm1265 = vcmp.lt.s32.totalorder %v1049, 0
        %v1266 = vand.u32 %v1049, 2139095040
        %v1267 = vshrl.u32 %v1266, 23
        %v1268 = vsub.s32 %v1267, 127
        %v1269 = vand.u32 2147483647, %v1049
        %v1270 = vand.u32 %v1269, 8388607
        %v1271 = vor.u32 %v1270, 8388608
        %v1272 = vsub.s32 0, %v1271
        %v1273 = vadd.s32 %v1268, 1
        %vm1274 = vcmp.gt.s32.totalorder %v1273, 0
        %v1275 = vsel %vm1274, %v1273, 0
        %v1276 = vshrl.u32 %v1275, 5
        %v1277 = vand.u32 %v1275, 31
        %v1278 = vsub.s32 32, %v1277
        %v1279 = vshrl.u32 683565275, %v1278
        %v1280 = vshll.u32 683565275, %v1277
        %v1281 = vshrl.u32 2475754826, %v1278
        %v1282 = vor.u32 %v1280, %v1281
        %v1283 = vshll.u32 2475754826, %v1277
        %v1284 = vshrl.u32 2131351028, %v1278
        %v1285 = vor.u32 %v1283, %v1284
        %v1286 = vshll.u32 2131351028, %v1277
        %v1287 = vshrl.u32 2102212464, %v1278
        %v1288 = vor.u32 %v1286, %v1287
        %v1289 = vshll.u32 2102212464, %v1277
        %v1290 = vshrl.u32 920167782, %v1278
        %v1291 = vor.u32 %v1289, %v1290
        %v1292 = vshll.u32 920167782, %v1277
        %v1293 = vshrl.u32 1326507024, %v1278
        %v1294 = vor.u32 %v1292, %v1293
        %vm1295 = vcmp.lt.s32.totalorder %v1276, 1
        %vm1296 = vcmp.lt.s32.totalorder %v1276, 2
        %vm1297 = vcmp.lt.s32.totalorder %v1276, 3
        %vm1298 = vcmp.lt.s32.totalorder %v1276, 4
        %v1299 = vsel %vm1295, %v1279, %v1282
        %v1300 = vsel %vm1298, %v1288, 2102212464
        %v1301 = vsel %vm1297, %v1285, %v1300
        %v1302 = vsel %vm1296, %v1299, %v1301
        %v1303 = vsel %vm1295, %v1282, %v1285
        %v1304 = vsel %vm1298, %v1291, 920167782
        %v1305 = vsel %vm1297, %v1288, %v1304
        %v1306 = vsel %vm1296, %v1303, %v1305
        %v1307 = vsel %vm1295, %v1285, %v1288
        %v1308 = vsel %vm1298, %v1294, 1326507024
        %v1309 = vsel %vm1297, %v1291, %v1308
        %v1310 = vsel %vm1296, %v1307, %v1309
        %v1311 = vshll.u32 %v1271, 8
        %v1312 = vmul.u32.u64.compose %v1311, %v1310
        %v1313 = vextract.low.u32 %v1312
        %v1314 = vextract.high.u32 %v1312
        %v1315 = vmul.u32.u64.compose %v1311, %v1306
        %v1316 = vextract.low.u32 %v1315
        %v1317 = vextract.high.u32 %v1315
        %v1318 = vmul.u32 %v1311, %v1302
        %v1319 = vadd.s32 %v1314, %v1316
        %vm1320 = vc.u32 %v1314, %v1316
        %v1321 = vadd.s32 %v1317, 1
        %v1322 = vsel %vm1320, %v1321, %v1317
        %v1323 = vadd.s32 %v1318, %v1322
        %v1324 = vadd.s32 %v1323, 536870912
        %v1325 = vshrl.u32 %v1324, 30
        %v1326 = vshll.u32 %v1325, 30
        %v1327 = vsub.s32 %v1323, %v1326
        %vm1328 = vcmp.lt.s32.totalorder %v1327, 0
        %v1329 = vsub.s32 0, %v1327
        %v1330 = vsel %vm1328, %v1329, %v1327
        %v1331 = vclz %v1330
        %v1332 = vsub.s32 %v1331, 2
        %vm1333 = vcmp.gt.s32.totalorder 0, %v1332
        %v1334 = vsel %vm1333, 0, %v1332
        %v1335 = vsub.s32 32, %v1334
        %v1336 = vshll.u32 %v1327, %v1334
        %v1337 = vshrl.u32 %v1319, %v1335
        %v1338 = vor.u32 %v1336, %v1337
        %v1339 = vsub.s32 4294967266, %v1334
        %v1340 = vadd.s32 %v1339, 127
        %v1341 = vshll.u32 %v1340, 23
        %v1342 = vor.u32 4788187, %v1341
        %v1343 = vand.u32 2147483647, %v1342
        %v1345 = vcvt.s32.f32 %v1338
        %v1346 = vmul.f32 %v1345, %v1343
        %v1347 = vxor.u32 %v1346, 2147483648
        %v1348 = vsel %vm1265, %v1347, %v1346
        %v1349 = vsub.s32 4, %v1325
        %v1350 = vsel %vm1265, %v1349, %v1325
        %v1351 = vsel %vm1264, %v1049, %v1348
        %v1352 = vsel %vm1264, 0, %v1350
        %v1353 = vcosq.f32.pop %v1351
        %v1354 = vsinq.f32.pop %v1351
        %vm1355 = vweird.f32 %v1049
        %v1356 = vand.u32 %v1352, 3
        %vm1357 = vcmp.lt.s32.totalorder %v1356, 2
        %vm1358 = vcmp.eq.s32.totalorder %v1356, 0
        %v1359 = vxor.u32 %v1354, 2147483648
        %v1360 = vsel %vm1358, %v1353, %v1359
        %vm1361 = vcmp.eq.s32.totalorder %v1356, 2
        %v1362 = vxor.u32 %v1353, 2147483648
        %v1363 = vsel %vm1361, %v1362, %v1354
        %v1364 = vsel %vm1357, %v1360, %v1363
        %v1365 = vsel %vm1355, nan, %v1364
        %v1366 = vand.u32 2147483647, %v1054
        %vm1367 = vcmp.le.f32.partialorder %v1366, 0.7853982
        %vm1368 = vcmp.lt.s32.totalorder %v1054, 0
        %v1369 = vand.u32 %v1054, 2139095040
        %v1370 = vshrl.u32 %v1369, 23
        %v1371 = vsub.s32 %v1370, 127
        %v1372 = vand.u32 2147483647, %v1054
        %v1373 = vand.u32 %v1372, 8388607
        %v1374 = vor.u32 %v1373, 8388608
        %v1375 = vsub.s32 0, %v1374
        %v1376 = vadd.s32 %v1371, 1
        %vm1377 = vcmp.gt.s32.totalorder %v1376, 0
        %v1378 = vsel %vm1377, %v1376, 0
        %v1379 = vshrl.u32 %v1378, 5
        %v1380 = vand.u32 %v1378, 31
        %v1381 = vsub.s32 32, %v1380
        %v1382 = vshrl.u32 683565275, %v1381
        %v1383 = vshll.u32 683565275, %v1380
        %v1384 = vshrl.u32 2475754826, %v1381
        %v1385 = vor.u32 %v1383, %v1384
        %v1386 = vshll.u32 2475754826, %v1380
        %v1387 = vshrl.u32 2131351028, %v1381
        %v1388 = vor.u32 %v1386, %v1387
        %v1389 = vshll.u32 2131351028, %v1380
        %v1390 = vshrl.u32 2102212464, %v1381
        %v1391 = vor.u32 %v1389, %v1390
        %v1392 = vshll.u32 2102212464, %v1380
        %v1393 = vshrl.u32 920167782, %v1381
        %v1394 = vor.u32 %v1392, %v1393
        %v1395 = vshll.u32 920167782, %v1380
        %v1396 = vshrl.u32 1326507024, %v1381
        %v1397 = vor.u32 %v1395, %v1396
        %vm1398 = vcmp.lt.s32.totalorder %v1379, 1
        %vm1399 = vcmp.lt.s32.totalorder %v1379, 2
        %vm1400 = vcmp.lt.s32.totalorder %v1379, 3
        %vm1401 = vcmp.lt.s32.totalorder %v1379, 4
        %v1402 = vsel %vm1398, %v1382, %v1385
        %v1403 = vsel %vm1401, %v1391, 2102212464
        %v1404 = vsel %vm1400, %v1388, %v1403
        %v1405 = vsel %vm1399, %v1402, %v1404
        %v1406 = vsel %vm1398, %v1385, %v1388
        %v1407 = vsel %vm1401, %v1394, 920167782
        %v1408 = vsel %vm1400, %v1391, %v1407
        %v1409 = vsel %vm1399, %v1406, %v1408
        %v1410 = vsel %vm1398, %v1388, %v1391
        %v1411 = vsel %vm1401, %v1397, 1326507024
        %v1412 = vsel %vm1400, %v1394, %v1411
        %v1413 = vsel %vm1399, %v1410, %v1412
        %v1414 = vshll.u32 %v1374, 8
        %v1415 = vmul.u32.u64.compose %v1414, %v1413
        %v1416 = vextract.low.u32 %v1415
        %v1417 = vextract.high.u32 %v1415
        %v1418 = vmul.u32.u64.compose %v1414, %v1409
        %v1419 = vextract.low.u32 %v1418
        %v1420 = vextract.high.u32 %v1418
        %v1421 = vmul.u32 %v1414, %v1405
        %v1422 = vadd.s32 %v1417, %v1419
        %vm1423 = vc.u32 %v1417, %v1419
        %v1424 = vadd.s32 %v1420, 1
        %v1425 = vsel %vm1423, %v1424, %v1420
        %v1426 = vadd.s32 %v1421, %v1425
        %v1427 = vadd.s32 %v1426, 536870912
        %v1428 = vshrl.u32 %v1427, 30
        %v1429 = vshll.u32 %v1428, 30
        %v1430 = vsub.s32 %v1426, %v1429
        %vm1431 = vcmp.lt.s32.totalorder %v1430, 0
        %v1432 = vsub.s32 0, %v1430
        %v1433 = vsel %vm1431, %v1432, %v1430
        %v1434 = vclz %v1433
        %v1435 = vsub.s32 %v1434, 2
        %vm1436 = vcmp.gt.s32.totalorder 0, %v1435
        %v1437 = vsel %vm1436, 0, %v1435
        %v1438 = vsub.s32 32, %v1437
        %v1439 = vshll.u32 %v1430, %v1437
        %v1440 = vshrl.u32 %v1422, %v1438
        %v1441 = vor.u32 %v1439, %v1440
        %v1442 = vsub.s32 4294967266, %v1437
        %v1443 = vadd.s32 %v1442, 127
        %v1444 = vshll.u32 %v1443, 23
        %v1445 = vor.u32 4788187, %v1444
        %v1446 = vand.u32 2147483647, %v1445
        %v1448 = vcvt.s32.f32 %v1441
        %v1449 = vmul.f32 %v1448, %v1446
        %v1450 = vxor.u32 %v1449, 2147483648
        %v1451 = vsel %vm1368, %v1450, %v1449
        %v1452 = vsub.s32 4, %v1428
        %v1453 = vsel %vm1368, %v1452, %v1428
        %v1454 = vsel %vm1367, %v1054, %v1451
        %v1455 = vsel %vm1367, 0, %v1453
        %v1456 = vcosq.f32.pop %v1454
        %v1457 = vsinq.f32.pop %v1454
        %vm1458 = vweird.f32 %v1054
        %v1459 = vand.u32 %v1455, 3
        %vm1460 = vcmp.lt.s32.totalorder %v1459, 2
        %vm1461 = vcmp.eq.s32.totalorder %v1459, 0
        %v1462 = vxor.u32 %v1457, 2147483648
        %v1463 = vsel %vm1461, %v1456, %v1462
        %vm1464 = vcmp.eq.s32.totalorder %v1459, 2
        %v1465 = vxor.u32 %v1456, 2147483648
        %v1466 = vsel %vm1464, %v1465, %v1457
        %v1467 = vsel %vm1460, %v1463, %v1466
        %v1468 = vsel %vm1458, nan, %v1467
        %v1469 = vmul.f32 %v777, %v1159
        %v1470 = vmul.f32 %v782, %v1262
        %v1471 = vmul.f32 %v787, %v1365
        %v1472 = vmul.f32 %v792, %v1468
        %1473 = vst [vmem:[%s517] sm:$0xff] %v1469
        %1474 = vst [vmem:[%s517 + $0x8] sm:$0xff] %v1470
        %1475 = vst [vmem:[%s517 + $0x10] sm:$0xff] %v1471
        %1476 = vst [vmem:[%s517 + $0x18] sm:$0xff] %v1472
        %v1477 = vand.u32 2147483647, %v1039
        %vm1478 = vcmp.le.f32.partialorder %v1477, 0.7853982
        %vm1479 = vcmp.lt.s32.totalorder %v1039, 0
        %v1480 = vand.u32 %v1039, 2139095040
        %v1481 = vshrl.u32 %v1480, 23
        %v1482 = vsub.s32 %v1481, 127
        %v1483 = vand.u32 2147483647, %v1039
        %v1484 = vand.u32 %v1483, 8388607
        %v1485 = vor.u32 %v1484, 8388608
        %v1486 = vsub.s32 0, %v1485
        %v1487 = vadd.s32 %v1482, 1
        %vm1488 = vcmp.gt.s32.totalorder %v1487, 0
        %v1489 = vsel %vm1488, %v1487, 0
        %v1490 = vshrl.u32 %v1489, 5
        %v1491 = vand.u32 %v1489, 31
        %v1492 = vsub.s32 32, %v1491
        %v1493 = vshrl.u32 683565275, %v1492
        %v1494 = vshll.u32 683565275, %v1491
        %v1495 = vshrl.u32 2475754826, %v1492
        %v1496 = vor.u32 %v1494, %v1495
        %v1497 = vshll.u32 2475754826, %v1491
        %v1498 = vshrl.u32 2131351028, %v1492
        %v1499 = vor.u32 %v1497, %v1498
        %v1500 = vshll.u32 2131351028, %v1491
        %v1501 = vshrl.u32 2102212464, %v1492
        %v1502 = vor.u32 %v1500, %v1501
        %v1503 = vshll.u32 2102212464, %v1491
        %v1504 = vshrl.u32 920167782, %v1492
        %v1505 = vor.u32 %v1503, %v1504
        %v1506 = vshll.u32 920167782, %v1491
        %v1507 = vshrl.u32 1326507024, %v1492
        %v1508 = vor.u32 %v1506, %v1507
        %vm1509 = vcmp.lt.s32.totalorder %v1490, 1
        %vm1510 = vcmp.lt.s32.totalorder %v1490, 2
        %vm1511 = vcmp.lt.s32.totalorder %v1490, 3
        %vm1512 = vcmp.lt.s32.totalorder %v1490, 4
        %v1513 = vsel %vm1509, %v1493, %v1496
        %v1514 = vsel %vm1512, %v1502, 2102212464
        %v1515 = vsel %vm1511, %v1499, %v1514
        %v1516 = vsel %vm1510, %v1513, %v1515
        %v1517 = vsel %vm1509, %v1496, %v1499
        %v1518 = vsel %vm1512, %v1505, 920167782
        %v1519 = vsel %vm1511, %v1502, %v1518
        %v1520 = vsel %vm1510, %v1517, %v1519
        %v1521 = vsel %vm1509, %v1499, %v1502
        %v1522 = vsel %vm1512, %v1508, 1326507024
        %v1523 = vsel %vm1511, %v1505, %v1522
        %v1524 = vsel %vm1510, %v1521, %v1523
        %v1525 = vshll.u32 %v1485, 8
        %v1526 = vmul.u32.u64.compose %v1525, %v1524
        %v1527 = vextract.low.u32 %v1526
        %v1528 = vextract.high.u32 %v1526
        %v1529 = vmul.u32.u64.compose %v1525, %v1520
        %v1530 = vextract.low.u32 %v1529
        %v1531 = vextract.high.u32 %v1529
        %v1532 = vmul.u32 %v1525, %v1516
        %v1533 = vadd.s32 %v1528, %v1530
        %vm1534 = vc.u32 %v1528, %v1530
        %v1535 = vadd.s32 %v1531, 1
        %v1536 = vsel %vm1534, %v1535, %v1531
        %v1537 = vadd.s32 %v1532, %v1536
        %v1538 = vadd.s32 %v1537, 536870912
        %v1539 = vshrl.u32 %v1538, 30
        %v1540 = vshll.u32 %v1539, 30
        %v1541 = vsub.s32 %v1537, %v1540
        %vm1542 = vcmp.lt.s32.totalorder %v1541, 0
        %v1543 = vsub.s32 0, %v1541
        %v1544 = vsel %vm1542, %v1543, %v1541
        %v1545 = vclz %v1544
        %v1546 = vsub.s32 %v1545, 2
        %vm1547 = vcmp.gt.s32.totalorder 0, %v1546
        %v1548 = vsel %vm1547, 0, %v1546
        %v1549 = vsub.s32 32, %v1548
        %v1550 = vshll.u32 %v1541, %v1548
        %v1551 = vshrl.u32 %v1533, %v1549
        %v1552 = vor.u32 %v1550, %v1551
        %v1553 = vsub.s32 4294967266, %v1548
        %v1554 = vadd.s32 %v1553, 127
        %v1555 = vshll.u32 %v1554, 23
        %v1556 = vor.u32 4788187, %v1555
        %v1557 = vand.u32 2147483647, %v1556
        %v1559 = vcvt.s32.f32 %v1552
        %v1560 = vmul.f32 %v1559, %v1557
        %v1561 = vxor.u32 %v1560, 2147483648
        %v1562 = vsel %vm1479, %v1561, %v1560
        %v1563 = vsub.s32 4, %v1539
        %v1564 = vsel %vm1479, %v1563, %v1539
        %v1565 = vsel %vm1478, %v1039, %v1562
        %v1566 = vsel %vm1478, 0, %v1564
        %v1567 = vcosq.f32.pop %v1565
        %v1568 = vsinq.f32.pop %v1565
        %vm1569 = vweird.f32 %v1039
        %v1570 = vadd.s32 %v1566, 3
        %v1571 = vand.u32 %v1570, 3
        %vm1572 = vcmp.lt.s32.totalorder %v1571, 2
        %vm1573 = vcmp.eq.s32.totalorder %v1571, 0
        %v1574 = vxor.u32 %v1568, 2147483648
        %v1575 = vsel %vm1573, %v1567, %v1574
        %vm1576 = vcmp.eq.s32.totalorder %v1571, 2
        %v1577 = vxor.u32 %v1567, 2147483648
        %v1578 = vsel %vm1576, %v1577, %v1568
        %v1579 = vsel %vm1572, %v1575, %v1578
        %v1580 = vsel %vm1569, nan, %v1579
        %v1581 = vand.u32 2147483647, %v1044
        %vm1582 = vcmp.le.f32.partialorder %v1581, 0.7853982
        %vm1583 = vcmp.lt.s32.totalorder %v1044, 0
        %v1584 = vand.u32 %v1044, 2139095040
        %v1585 = vshrl.u32 %v1584, 23
        %v1586 = vsub.s32 %v1585, 127
        %v1587 = vand.u32 2147483647, %v1044
        %v1588 = vand.u32 %v1587, 8388607
        %v1589 = vor.u32 %v1588, 8388608
        %v1590 = vsub.s32 0, %v1589
        %v1591 = vadd.s32 %v1586, 1
        %vm1592 = vcmp.gt.s32.totalorder %v1591, 0
        %v1593 = vsel %vm1592, %v1591, 0
        %v1594 = vshrl.u32 %v1593, 5
        %v1595 = vand.u32 %v1593, 31
        %v1596 = vsub.s32 32, %v1595
        %v1597 = vshrl.u32 683565275, %v1596
        %v1598 = vshll.u32 683565275, %v1595
        %v1599 = vshrl.u32 2475754826, %v1596
        %v1600 = vor.u32 %v1598, %v1599
        %v1601 = vshll.u32 2475754826, %v1595
        %v1602 = vshrl.u32 2131351028, %v1596
        %v1603 = vor.u32 %v1601, %v1602
        %v1604 = vshll.u32 2131351028, %v1595
        %v1605 = vshrl.u32 2102212464, %v1596
        %v1606 = vor.u32 %v1604, %v1605
        %v1607 = vshll.u32 2102212464, %v1595
        %v1608 = vshrl.u32 920167782, %v1596
        %v1609 = vor.u32 %v1607, %v1608
        %v1610 = vshll.u32 920167782, %v1595
        %v1611 = vshrl.u32 1326507024, %v1596
        %v1612 = vor.u32 %v1610, %v1611
        %vm1613 = vcmp.lt.s32.totalorder %v1594, 1
        %vm1614 = vcmp.lt.s32.totalorder %v1594, 2
        %vm1615 = vcmp.lt.s32.totalorder %v1594, 3
        %vm1616 = vcmp.lt.s32.totalorder %v1594, 4
        %v1617 = vsel %vm1613, %v1597, %v1600
        %v1618 = vsel %vm1616, %v1606, 2102212464
        %v1619 = vsel %vm1615, %v1603, %v1618
        %v1620 = vsel %vm1614, %v1617, %v1619
        %v1621 = vsel %vm1613, %v1600, %v1603
        %v1622 = vsel %vm1616, %v1609, 920167782
        %v1623 = vsel %vm1615, %v1606, %v1622
        %v1624 = vsel %vm1614, %v1621, %v1623
        %v1625 = vsel %vm1613, %v1603, %v1606
        %v1626 = vsel %vm1616, %v1612, 1326507024
        %v1627 = vsel %vm1615, %v1609, %v1626
        %v1628 = vsel %vm1614, %v1625, %v1627
        %v1629 = vshll.u32 %v1589, 8
        %v1630 = vmul.u32.u64.compose %v1629, %v1628
        %v1631 = vextract.low.u32 %v1630
        %v1632 = vextract.high.u32 %v1630
        %v1633 = vmul.u32.u64.compose %v1629, %v1624
        %v1634 = vextract.low.u32 %v1633
        %v1635 = vextract.high.u32 %v1633
        %v1636 = vmul.u32 %v1629, %v1620
        %v1637 = vadd.s32 %v1632, %v1634
        %vm1638 = vc.u32 %v1632, %v1634
        %v1639 = vadd.s32 %v1635, 1
        %v1640 = vsel %vm1638, %v1639, %v1635
        %v1641 = vadd.s32 %v1636, %v1640
        %v1642 = vadd.s32 %v1641, 536870912
        %v1643 = vshrl.u32 %v1642, 30
        %v1644 = vshll.u32 %v1643, 30
        %v1645 = vsub.s32 %v1641, %v1644
        %vm1646 = vcmp.lt.s32.totalorder %v1645, 0
        %v1647 = vsub.s32 0, %v1645
        %v1648 = vsel %vm1646, %v1647, %v1645
        %v1649 = vclz %v1648
        %v1650 = vsub.s32 %v1649, 2
        %vm1651 = vcmp.gt.s32.totalorder 0, %v1650
        %v1652 = vsel %vm1651, 0, %v1650
        %v1653 = vsub.s32 32, %v1652
        %v1654 = vshll.u32 %v1645, %v1652
        %v1655 = vshrl.u32 %v1637, %v1653
        %v1656 = vor.u32 %v1654, %v1655
        %v1657 = vsub.s32 4294967266, %v1652
        %v1658 = vadd.s32 %v1657, 127
        %v1659 = vshll.u32 %v1658, 23
        %v1660 = vor.u32 4788187, %v1659
        %v1661 = vand.u32 2147483647, %v1660
        %v1663 = vcvt.s32.f32 %v1656
        %v1664 = vmul.f32 %v1663, %v1661
        %v1665 = vxor.u32 %v1664, 2147483648
        %v1666 = vsel %vm1583, %v1665, %v1664
        %v1667 = vsub.s32 4, %v1643
        %v1668 = vsel %vm1583, %v1667, %v1643
        %v1669 = vsel %vm1582, %v1044, %v1666
        %v1670 = vsel %vm1582, 0, %v1668
        %v1671 = vcosq.f32.pop %v1669
        %v1672 = vsinq.f32.pop %v1669
        %vm1673 = vweird.f32 %v1044
        %v1674 = vadd.s32 %v1670, 3
        %v1675 = vand.u32 %v1674, 3
        %vm1676 = vcmp.lt.s32.totalorder %v1675, 2
        %vm1677 = vcmp.eq.s32.totalorder %v1675, 0
        %v1678 = vxor.u32 %v1672, 2147483648
        %v1679 = vsel %vm1677, %v1671, %v1678
        %vm1680 = vcmp.eq.s32.totalorder %v1675, 2
        %v1681 = vxor.u32 %v1671, 2147483648
        %v1682 = vsel %vm1680, %v1681, %v1672
        %v1683 = vsel %vm1676, %v1679, %v1682
        %v1684 = vsel %vm1673, nan, %v1683
        %v1685 = vand.u32 2147483647, %v1049
        %vm1686 = vcmp.le.f32.partialorder %v1685, 0.7853982
        %vm1687 = vcmp.lt.s32.totalorder %v1049, 0
        %v1688 = vand.u32 %v1049, 2139095040
        %v1689 = vshrl.u32 %v1688, 23
        %v1690 = vsub.s32 %v1689, 127
        %v1691 = vand.u32 2147483647, %v1049
        %v1692 = vand.u32 %v1691, 8388607
        %v1693 = vor.u32 %v1692, 8388608
        %v1694 = vsub.s32 0, %v1693
        %v1695 = vadd.s32 %v1690, 1
        %vm1696 = vcmp.gt.s32.totalorder %v1695, 0
        %v1697 = vsel %vm1696, %v1695, 0
        %v1698 = vshrl.u32 %v1697, 5
        %v1699 = vand.u32 %v1697, 31
        %v1700 = vsub.s32 32, %v1699
        %v1701 = vshrl.u32 683565275, %v1700
        %v1702 = vshll.u32 683565275, %v1699
        %v1703 = vshrl.u32 2475754826, %v1700
        %v1704 = vor.u32 %v1702, %v1703
        %v1705 = vshll.u32 2475754826, %v1699
        %v1706 = vshrl.u32 2131351028, %v1700
        %v1707 = vor.u32 %v1705, %v1706
        %v1708 = vshll.u32 2131351028, %v1699
        %v1709 = vshrl.u32 2102212464, %v1700
        %v1710 = vor.u32 %v1708, %v1709
        %v1711 = vshll.u32 2102212464, %v1699
        %v1712 = vshrl.u32 920167782, %v1700
        %v1713 = vor.u32 %v1711, %v1712
        %v1714 = vshll.u32 920167782, %v1699
        %v1715 = vshrl.u32 1326507024, %v1700
        %v1716 = vor.u32 %v1714, %v1715
        %vm1717 = vcmp.lt.s32.totalorder %v1698, 1
        %vm1718 = vcmp.lt.s32.totalorder %v1698, 2
        %vm1719 = vcmp.lt.s32.totalorder %v1698, 3
        %vm1720 = vcmp.lt.s32.totalorder %v1698, 4
        %v1721 = vsel %vm1717, %v1701, %v1704
        %v1722 = vsel %vm1720, %v1710, 2102212464
        %v1723 = vsel %vm1719, %v1707, %v1722
        %v1724 = vsel %vm1718, %v1721, %v1723
        %v1725 = vsel %vm1717, %v1704, %v1707
        %v1726 = vsel %vm1720, %v1713, 920167782
        %v1727 = vsel %vm1719, %v1710, %v1726
        %v1728 = vsel %vm1718, %v1725, %v1727
        %v1729 = vsel %vm1717, %v1707, %v1710
        %v1730 = vsel %vm1720, %v1716, 1326507024
        %v1731 = vsel %vm1719, %v1713, %v1730
        %v1732 = vsel %vm1718, %v1729, %v1731
        %v1733 = vshll.u32 %v1693, 8
        %v1734 = vmul.u32.u64.compose %v1733, %v1732
        %v1735 = vextract.low.u32 %v1734
        %v1736 = vextract.high.u32 %v1734
        %v1737 = vmul.u32.u64.compose %v1733, %v1728
        %v1738 = vextract.low.u32 %v1737
        %v1739 = vextract.high.u32 %v1737
        %v1740 = vmul.u32 %v1733, %v1724
        %v1741 = vadd.s32 %v1736, %v1738
        %vm1742 = vc.u32 %v1736, %v1738
        %v1743 = vadd.s32 %v1739, 1
        %v1744 = vsel %vm1742, %v1743, %v1739
        %v1745 = vadd.s32 %v1740, %v1744
        %v1746 = vadd.s32 %v1745, 536870912
        %v1747 = vshrl.u32 %v1746, 30
        %v1748 = vshll.u32 %v1747, 30
        %v1749 = vsub.s32 %v1745, %v1748
        %vm1750 = vcmp.lt.s32.totalorder %v1749, 0
        %v1751 = vsub.s32 0, %v1749
        %v1752 = vsel %vm1750, %v1751, %v1749
        %v1753 = vclz %v1752
        %v1754 = vsub.s32 %v1753, 2
        %vm1755 = vcmp.gt.s32.totalorder 0, %v1754
        %v1756 = vsel %vm1755, 0, %v1754
        %v1757 = vsub.s32 32, %v1756
        %v1758 = vshll.u32 %v1749, %v1756
        %v1759 = vshrl.u32 %v1741, %v1757
        %v1760 = vor.u32 %v1758, %v1759
        %v1761 = vsub.s32 4294967266, %v1756
        %v1762 = vadd.s32 %v1761, 127
        %v1763 = vshll.u32 %v1762, 23
        %v1764 = vor.u32 4788187, %v1763
        %v1765 = vand.u32 2147483647, %v1764
        %v1767 = vcvt.s32.f32 %v1760
        %v1768 = vmul.f32 %v1767, %v1765
        %v1769 = vxor.u32 %v1768, 2147483648
        %v1770 = vsel %vm1687, %v1769, %v1768
        %v1771 = vsub.s32 4, %v1747
        %v1772 = vsel %vm1687, %v1771, %v1747
        %v1773 = vsel %vm1686, %v1049, %v1770
        %v1774 = vsel %vm1686, 0, %v1772
        %v1775 = vcosq.f32.pop %v1773
        %v1776 = vsinq.f32.pop %v1773
        %vm1777 = vweird.f32 %v1049
        %v1778 = vadd.s32 %v1774, 3
        %v1779 = vand.u32 %v1778, 3
        %vm1780 = vcmp.lt.s32.totalorder %v1779, 2
        %vm1781 = vcmp.eq.s32.totalorder %v1779, 0
        %v1782 = vxor.u32 %v1776, 2147483648
        %v1783 = vsel %vm1781, %v1775, %v1782
        %vm1784 = vcmp.eq.s32.totalorder %v1779, 2
        %v1785 = vxor.u32 %v1775, 2147483648
        %v1786 = vsel %vm1784, %v1785, %v1776
        %v1787 = vsel %vm1780, %v1783, %v1786
        %v1788 = vsel %vm1777, nan, %v1787
        %v1789 = vand.u32 2147483647, %v1054
        %vm1790 = vcmp.le.f32.partialorder %v1789, 0.7853982
        %vm1791 = vcmp.lt.s32.totalorder %v1054, 0
        %v1792 = vand.u32 %v1054, 2139095040
        %v1793 = vshrl.u32 %v1792, 23
        %v1794 = vsub.s32 %v1793, 127
        %v1795 = vand.u32 2147483647, %v1054
        %v1796 = vand.u32 %v1795, 8388607
        %v1797 = vor.u32 %v1796, 8388608
        %v1798 = vsub.s32 0, %v1797
        %v1799 = vadd.s32 %v1794, 1
        %vm1800 = vcmp.gt.s32.totalorder %v1799, 0
        %v1801 = vsel %vm1800, %v1799, 0
        %v1802 = vshrl.u32 %v1801, 5
        %v1803 = vand.u32 %v1801, 31
        %v1804 = vsub.s32 32, %v1803
        %v1805 = vshrl.u32 683565275, %v1804
        %v1806 = vshll.u32 683565275, %v1803
        %v1807 = vshrl.u32 2475754826, %v1804
        %v1808 = vor.u32 %v1806, %v1807
        %v1809 = vshll.u32 2475754826, %v1803
        %v1810 = vshrl.u32 2131351028, %v1804
        %v1811 = vor.u32 %v1809, %v1810
        %v1812 = vshll.u32 2131351028, %v1803
        %v1813 = vshrl.u32 2102212464, %v1804
        %v1814 = vor.u32 %v1812, %v1813
        %v1815 = vshll.u32 2102212464, %v1803
        %v1816 = vshrl.u32 920167782, %v1804
        %v1817 = vor.u32 %v1815, %v1816
        %v1818 = vshll.u32 920167782, %v1803
        %v1819 = vshrl.u32 1326507024, %v1804
        %v1820 = vor.u32 %v1818, %v1819
        %vm1821 = vcmp.lt.s32.totalorder %v1802, 1
        %vm1822 = vcmp.lt.s32.totalorder %v1802, 2
        %vm1823 = vcmp.lt.s32.totalorder %v1802, 3
        %vm1824 = vcmp.lt.s32.totalorder %v1802, 4
        %v1825 = vsel %vm1821, %v1805, %v1808
        %v1826 = vsel %vm1824, %v1814, 2102212464
        %v1827 = vsel %vm1823, %v1811, %v1826
        %v1828 = vsel %vm1822, %v1825, %v1827
        %v1829 = vsel %vm1821, %v1808, %v1811
        %v1830 = vsel %vm1824, %v1817, 920167782
        %v1831 = vsel %vm1823, %v1814, %v1830
        %v1832 = vsel %vm1822, %v1829, %v1831
        %v1833 = vsel %vm1821, %v1811, %v1814
        %v1834 = vsel %vm1824, %v1820, 1326507024
        %v1835 = vsel %vm1823, %v1817, %v1834
        %v1836 = vsel %vm1822, %v1833, %v1835
        %v1837 = vshll.u32 %v1797, 8
        %v1838 = vmul.u32.u64.compose %v1837, %v1836
        %v1839 = vextract.low.u32 %v1838
        %v1840 = vextract.high.u32 %v1838
        %v1841 = vmul.u32.u64.compose %v1837, %v1832
        %v1842 = vextract.low.u32 %v1841
        %v1843 = vextract.high.u32 %v1841
        %v1844 = vmul.u32 %v1837, %v1828
        %v1845 = vadd.s32 %v1840, %v1842
        %vm1846 = vc.u32 %v1840, %v1842
        %v1847 = vadd.s32 %v1843, 1
        %v1848 = vsel %vm1846, %v1847, %v1843
        %v1849 = vadd.s32 %v1844, %v1848
        %v1850 = vadd.s32 %v1849, 536870912
        %v1851 = vshrl.u32 %v1850, 30
        %v1852 = vshll.u32 %v1851, 30
        %v1853 = vsub.s32 %v1849, %v1852
        %vm1854 = vcmp.lt.s32.totalorder %v1853, 0
        %v1855 = vsub.s32 0, %v1853
        %v1856 = vsel %vm1854, %v1855, %v1853
        %v1857 = vclz %v1856
        %v1858 = vsub.s32 %v1857, 2
        %vm1859 = vcmp.gt.s32.totalorder 0, %v1858
        %v1860 = vsel %vm1859, 0, %v1858
        %v1861 = vsub.s32 32, %v1860
        %v1862 = vshll.u32 %v1853, %v1860
        %v1863 = vshrl.u32 %v1845, %v1861
        %v1864 = vor.u32 %v1862, %v1863
        %v1865 = vsub.s32 4294967266, %v1860
        %v1866 = vadd.s32 %v1865, 127
        %v1867 = vshll.u32 %v1866, 23
        %v1868 = vor.u32 4788187, %v1867
        %v1869 = vand.u32 2147483647, %v1868
        %v1871 = vcvt.s32.f32 %v1864
        %v1872 = vmul.f32 %v1871, %v1869
        %v1873 = vxor.u32 %v1872, 2147483648
        %v1874 = vsel %vm1791, %v1873, %v1872
        %v1875 = vsub.s32 4, %v1851
        %v1876 = vsel %vm1791, %v1875, %v1851
        %v1877 = vsel %vm1790, %v1054, %v1874
        %v1878 = vsel %vm1790, 0, %v1876
        %v1879 = vcosq.f32.pop %v1877
        %v1880 = vsinq.f32.pop %v1877
        %vm1881 = vweird.f32 %v1054
        %v1882 = vadd.s32 %v1878, 3
        %v1883 = vand.u32 %v1882, 3
        %vm1884 = vcmp.lt.s32.totalorder %v1883, 2
        %vm1885 = vcmp.eq.s32.totalorder %v1883, 0
        %v1886 = vxor.u32 %v1880, 2147483648
        %v1887 = vsel %vm1885, %v1879, %v1886
        %vm1888 = vcmp.eq.s32.totalorder %v1883, 2
        %v1889 = vxor.u32 %v1879, 2147483648
        %v1890 = vsel %vm1888, %v1889, %v1880
        %v1891 = vsel %vm1884, %v1887, %v1890
        %v1892 = vsel %vm1881, nan, %v1891
        %v1893 = vmul.f32 %v777, %v1580
        %v1894 = vmul.f32 %v782, %v1684
        %v1895 = vmul.f32 %v787, %v1788
        %v1896 = vmul.f32 %v792, %v1892
        %1897 = vst [vmem:[%s523] sm:$0xff] %v1893
        %1898 = vst [vmem:[%s523 + $0x8] sm:$0xff] %v1894
        %1899 = vst [vmem:[%s523 + $0x10] sm:$0xff] %v1895
        %1900 = vst [vmem:[%s523 + $0x18] sm:$0xff] %v1896
        %s1901 = sand.u32 %s269, 1
        %s1902 = sand.u32 %s269, 1
        %s1903 = smul.addr %s1902, 32
        %s1904 = scalar_lea.vmem [#allocation4], %s1903
        %s1905 = sand.u32 %s297, 1
        %s1906 = sand.u32 %s297, 1
        %s1907 = smul.addr %s1906, 32
        %s1908 = scalar_lea.vmem [#allocation5], %s1907
        // Predicated region
        $region137: #{frescat_forward.2} parent=127 // pred_check
          %p1909 = pneg %p279
        $region138: #{frescat_forward.2} parent=127 // pred_check_branch
          %1911 = sbr.rel (%p1909) target = $region140
        $region139: #{frescat_forward.2} parent=127 // pred_region
          %s1912 = smul.addr %s27, 8
          %s1913 = sadd.s32 %s28, %s1912
          %s1914 = smul.addr %s1913, 8
          %s1915 = scalar_lea.vmem %s10, %s1914
          // Predicated region
          $region141: #{frescat_forward.2} parent=139 // pred_check
            _
          $region142: #{frescat_forward.2} parent=139 // pred_check_branch
            %1917 = sbr.rel (0) target = $region144
          $region143: #{frescat_forward.2} parent=139 // pred_region
            // Predicated region
            $region145: #{frescat_forward.2} parent=143 // pred_check
              _
            $region146: #{frescat_forward.2} parent=143 // pred_check_branch
              %1919 = sbr.rel (0) target = $region148
            $region147: #{frescat_forward.2} parent=143 // pred_region
              // Predicated region
              $region160: #{frescat_forward.2} parent=147 // pred_check
                _
              $region161: #{frescat_forward.2} parent=147 // pred_check_branch
                %1940 = sbr.rel (0) target = $region163
              $region162: #{frescat_forward.2} parent=147 // pred_region
                loop: start=0, step=1, limit=1
                $region164: #{frescat_forward.2} parent=162 // loop_pre_header
                  _
                $region165: #{frescat_forward.2} parent=162 // loop_header
                  %s1942 = sphi 0, %s1946
                  %p1943 = scmp.ge.s32.totalorder %s1942, 1
                  %s1947 = sphi %s1904, %s1904
                  %s1948 = sphi %s1915, %s1915
                $region166: #{frescat_forward.2} parent=162 // loop_header_branch
                  %1945 = sbr.rel (%p1943) target = $region170
                $region167: #{frescat_forward.2} parent=162 // loop_body
                  %v1949 = vld [vmem:[%s1947] sm:$0xff]
                  %1950 = vst [vmem:[%s1948] sm:$0xff] %v1949
                  %v1951 = vld [vmem:[%s1947 + $0x8] sm:$0xff]
                  %1952 = vst [vmem:[%s1948 + $0x10] sm:$0xff] %v1951
                  %v1953 = vld [vmem:[%s1947 + $0x10] sm:$0xff]
                  %1954 = vst [vmem:[%s1948 + $0x20] sm:$0xff] %v1953
                  %v1955 = vld [vmem:[%s1947 + $0x18] sm:$0xff]
                  %1956 = vst [vmem:[%s1948 + $0x30] sm:$0xff] %v1955
                $region168: #{frescat_forward.2} parent=162 // loop_footer
                  %s1946 = sadd.s32 1, %s1942
                $region169: #{frescat_forward.2} parent=162 // loop_footer_branch
                  %1941 = sbr.rel target = $region165
                $region170: #{frescat_forward.2} parent=162 // loop_exit
                  _
              $region163: #{frescat_forward.2} parent=147 // pred_fallthru
                _
              // Predicated region
              $region171: #{frescat_forward.2} parent=147 // pred_check
                _
              $region172: #{frescat_forward.2} parent=147 // pred_check_branch
                %1958 = sbr.rel target = $region174
              $region173: #{frescat_forward.2} parent=147 // pred_region
                _
              $region174: #{frescat_forward.2} parent=147 // pred_fallthru
                _
            $region148: #{frescat_forward.2} parent=143 // pred_fallthru
              _
            // Predicated region
            $region149: #{frescat_forward.2} parent=143 // pred_check
              _
            $region150: #{frescat_forward.2} parent=143 // pred_check_branch
              %1921 = sbr.rel target = $region152
            $region151: #{frescat_forward.2} parent=143 // pred_region
              loop: start=0, step=1, limit=1
              $region153: #{frescat_forward.2} parent=151 // loop_pre_header
                _
              $region154: #{frescat_forward.2} parent=151 // loop_header
                %s1924 = sphi 0, %s1928
                %p1925 = scmp.ge.s32.totalorder %s1924, 1
                %s1929 = sphi %s1904, %s1904
                %s1930 = sphi %s1915, %s1915
              $region155: #{frescat_forward.2} parent=151 // loop_header_branch
                %1927 = sbr.rel (%p1925) target = $region159
              $region156: #{frescat_forward.2} parent=151 // loop_body
                %v1931 = vld [vmem:[%s1929] sm:$0xff]
                %1932 = vst [vmem:[%s1930] sm:$0xff] %v1931
                %v1933 = vld [vmem:[%s1929 + $0x8] sm:$0xff]
                %1934 = vst [vmem:[%s1930 + $0x10] sm:$0xff] %v1933
                %v1935 = vld [vmem:[%s1929 + $0x10] sm:$0xff]
                %1936 = vst [vmem:[%s1930 + $0x20] sm:$0xff] %v1935
                %v1937 = vld [vmem:[%s1929 + $0x18] sm:$0xff]
                %1938 = vst [vmem:[%s1930 + $0x30] sm:$0xff] %v1937
              $region157: #{frescat_forward.2} parent=151 // loop_footer
                %s1928 = sadd.s32 1, %s1924
              $region158: #{frescat_forward.2} parent=151 // loop_footer_branch
                %1923 = sbr.rel target = $region154
              $region159: #{frescat_forward.2} parent=151 // loop_exit
                _
            $region152: #{frescat_forward.2} parent=143 // pred_fallthru
              _
          $region144: #{frescat_forward.2} parent=139 // pred_fallthru
            _
          %1959 = vnop
        $region140: #{frescat_forward.2} parent=127 // pred_fallthru
          _
        // Predicated region
        $region175: #{frescat_forward.2} parent=127 // pred_check
          %p1960 = pneg %p307
        $region176: #{frescat_forward.2} parent=127 // pred_check_branch
          %1962 = sbr.rel (%p1960) target = $region178
        $region177: #{frescat_forward.2} parent=127 // pred_region
          %s1963 = smul.addr %s27, 8
          %s1964 = sadd.s32 %s28, %s1963
          %s1965 = smul.addr %s1964, 8
          %s1966 = scalar_lea.vmem %s11, %s1965
          // Predicated region
          $region179: #{frescat_forward.2} parent=177 // pred_check
            _
          $region180: #{frescat_forward.2} parent=177 // pred_check_branch
            %1968 = sbr.rel (0) target = $region182
          $region181: #{frescat_forward.2} parent=177 // pred_region
            // Predicated region
            $region183: #{frescat_forward.2} parent=181 // pred_check
              _
            $region184: #{frescat_forward.2} parent=181 // pred_check_branch
              %1970 = sbr.rel (0) target = $region186
            $region185: #{frescat_forward.2} parent=181 // pred_region
              // Predicated region
              $region198: #{frescat_forward.2} parent=185 // pred_check
                _
              $region199: #{frescat_forward.2} parent=185 // pred_check_branch
                %1991 = sbr.rel (0) target = $region201
              $region200: #{frescat_forward.2} parent=185 // pred_region
                loop: start=0, step=1, limit=1
                $region202: #{frescat_forward.2} parent=200 // loop_pre_header
                  _
                $region203: #{frescat_forward.2} parent=200 // loop_header
                  %s1993 = sphi 0, %s1997
                  %p1994 = scmp.ge.s32.totalorder %s1993, 1
                  %s1998 = sphi %s1908, %s1908
                  %s1999 = sphi %s1966, %s1966
                $region204: #{frescat_forward.2} parent=200 // loop_header_branch
                  %1996 = sbr.rel (%p1994) target = $region208
                $region205: #{frescat_forward.2} parent=200 // loop_body
                  %v2000 = vld [vmem:[%s1998] sm:$0xff]
                  %2001 = vst [vmem:[%s1999] sm:$0xff] %v2000
                  %v2002 = vld [vmem:[%s1998 + $0x8] sm:$0xff]
                  %2003 = vst [vmem:[%s1999 + $0x10] sm:$0xff] %v2002
                  %v2004 = vld [vmem:[%s1998 + $0x10] sm:$0xff]
                  %2005 = vst [vmem:[%s1999 + $0x20] sm:$0xff] %v2004
                  %v2006 = vld [vmem:[%s1998 + $0x18] sm:$0xff]
                  %2007 = vst [vmem:[%s1999 + $0x30] sm:$0xff] %v2006
                $region206: #{frescat_forward.2} parent=200 // loop_footer
                  %s1997 = sadd.s32 1, %s1993
                $region207: #{frescat_forward.2} parent=200 // loop_footer_branch
                  %1992 = sbr.rel target = $region203
                $region208: #{frescat_forward.2} parent=200 // loop_exit
                  _
              $region201: #{frescat_forward.2} parent=185 // pred_fallthru
                _
              // Predicated region
              $region209: #{frescat_forward.2} parent=185 // pred_check
                _
              $region210: #{frescat_forward.2} parent=185 // pred_check_branch
                %2009 = sbr.rel target = $region212
              $region211: #{frescat_forward.2} parent=185 // pred_region
                _
              $region212: #{frescat_forward.2} parent=185 // pred_fallthru
                _
            $region186: #{frescat_forward.2} parent=181 // pred_fallthru
              _
            // Predicated region
            $region187: #{frescat_forward.2} parent=181 // pred_check
              _
            $region188: #{frescat_forward.2} parent=181 // pred_check_branch
              %1972 = sbr.rel target = $region190
            $region189: #{frescat_forward.2} parent=181 // pred_region
              loop: start=0, step=1, limit=1
              $region191: #{frescat_forward.2} parent=189 // loop_pre_header
                _
              $region192: #{frescat_forward.2} parent=189 // loop_header
                %s1975 = sphi 0, %s1979
                %p1976 = scmp.ge.s32.totalorder %s1975, 1
                %s1980 = sphi %s1908, %s1908
                %s1981 = sphi %s1966, %s1966
              $region193: #{frescat_forward.2} parent=189 // loop_header_branch
                %1978 = sbr.rel (%p1976) target = $region197
              $region194: #{frescat_forward.2} parent=189 // loop_body
                %v1982 = vld [vmem:[%s1980] sm:$0xff]
                %1983 = vst [vmem:[%s1981] sm:$0xff] %v1982
                %v1984 = vld [vmem:[%s1980 + $0x8] sm:$0xff]
                %1985 = vst [vmem:[%s1981 + $0x10] sm:$0xff] %v1984
                %v1986 = vld [vmem:[%s1980 + $0x10] sm:$0xff]
                %1987 = vst [vmem:[%s1981 + $0x20] sm:$0xff] %v1986
                %v1988 = vld [vmem:[%s1980 + $0x18] sm:$0xff]
                %1989 = vst [vmem:[%s1981 + $0x30] sm:$0xff] %v1988
              $region195: #{frescat_forward.2} parent=189 // loop_footer
                %s1979 = sadd.s32 1, %s1975
              $region196: #{frescat_forward.2} parent=189 // loop_footer_branch
                %1974 = sbr.rel target = $region192
              $region197: #{frescat_forward.2} parent=189 // loop_exit
                _
            $region190: #{frescat_forward.2} parent=181 // pred_fallthru
              _
          $region182: #{frescat_forward.2} parent=177 // pred_fallthru
            _
          %2010 = vnop
        $region178: #{frescat_forward.2} parent=127 // pred_fallthru
          _
      $region128: #{frescat_forward.2} parent=5 // pred_fallthru
        _
      %p2011 = scmp.le.s32.totalorder 2, %s18
      // Predicated region
      $region213: #{frescat_forward.2} parent=5 // pred_check
        %p2012 = pneg %p2011
      $region214: #{frescat_forward.2} parent=5 // pred_check_branch
        %2014 = sbr.rel (%p2012) target = $region216
      $region215: #{frescat_forward.2} parent=5 // pred_region
        %s2015 = ssub.s32 %s18, 2
        // Predicated region
        $region217: #{frescat_forward.2} parent=215 // pred_check
          %p2016 = pneg %p285
        $region218: #{frescat_forward.2} parent=215 // pred_check_branch
          %2018 = sbr.rel (%p2016) target = $region220
        $region219: #{frescat_forward.2} parent=215 // pred_region
          %s2019 = sand.u32 %s270, 1
          %s2020 = sand.u32 %s270, 1
          %s2021 = smul.addr %s2020, 32
          %s2022 = scalar_lea.vmem [#allocation4], %s2021
        $region220: #{frescat_forward.2} parent=215 // pred_fallthru
          _
        // Predicated region
        $region221: #{frescat_forward.2} parent=215 // pred_check
          %p2023 = pneg %p313
        $region222: #{frescat_forward.2} parent=215 // pred_check_branch
          %2025 = sbr.rel (%p2023) target = $region224
        $region223: #{frescat_forward.2} parent=215 // pred_region
          %s2026 = sand.u32 %s298, 1
          %s2027 = sand.u32 %s298, 1
          %s2028 = smul.addr %s2027, 32
          %s2029 = scalar_lea.vmem [#allocation5], %s2028
        $region224: #{frescat_forward.2} parent=215 // pred_fallthru
          _
      $region216: #{frescat_forward.2} parent=5 // pred_fallthru
        _
    $region6: #{frescat_forward.2} parent=1 // loop_footer
      %s22 = sadd.s32 1, %s18
    $region7: #{frescat_forward.2} parent=1 // loop_footer_branch
      %17 = sbr.rel target = $region3
    $region8: #{frescat_forward.2} parent=1 // loop_exit
      _

// kernel: frescat_forward.3
$region0: #{frescat_forward.3}
  #allocation0 [shape = 'u32[]', space=smem, size = 0x4, offset = 0x4, fixed_abs, tag = 'smem constant byte address 0x4 - core index']
  #allocation1 [shape = 'u32[144,128]{1,0:T(1,128)}', space=vmem, size = 0x12000, scoped, tag = 'internal scratch']
  %s0 = inlined_call_operand.vmem [shape: f32[2,32,1024], index: 0, kind: input, shape index: {}]
  %s1 = inlined_call_operand.vmem [shape: f32[2,32,1024], index: 1, kind: input, shape index: {}]
  %s2 = inlined_call_operand.vmem [shape: f32[32,32], index: 2, kind: input, shape index: {}]
  %s3 = inlined_call_operand.vmem [shape: f32[32,32], index: 3, kind: input, shape index: {}]
  %s4 = inlined_call_operand.vmem [shape: f32[32,1], index: 4, kind: input, shape index: {}]
  %s5 = inlined_call_operand.vmem [shape: f32[2,32,1024], index: 5, kind: output, shape index: {}]
  %s6 = sld [smem:[#allocation0]]
  $region118: #{frescat_forward.3} parent=0
    _
  %s8 = ssub.s32 1, %s6
  %s9 = scalar_select 0, %s8, %s6
  $region1: #{frescat_forward.3} parent=0
    #allocation2 [shape = 'u8[131072]{0}', space=vmem, size = 0x20000, scoped, tag = 'input window, operand 0']
    #allocation3 [shape = 'u8[131072]{0}', space=vmem, size = 0x20000, scoped, tag = 'input window, operand 1']
    #allocation4 [shape = 'u8[131072]{0}', space=vmem, size = 0x20000, scoped, tag = 'output window, operand 0']
    loop: start=0, step=1, limit=6
    $region2: #{frescat_forward.3} parent=1 // loop_pre_header
      _
    $region3: #{frescat_forward.3} parent=1 // loop_header
      %s11 = sphi 0, %s15
      %p12 = scmp.ge.s32.totalorder %s11, 6
      %s18 = sphi 0, %s30
      %s19 = sphi 0, %s26
      %s20 = sphi 0, %s18
      %s21 = sphi 0, %s19
      %s22 = sphi 0, %s20
      %s23 = sphi 0, %s21
      %s35 = sphi 0, %s37
      %s38 = sphi 0, %s35
      %s39 = sphi 0, %s38
      %s55 = sphi 0, %s39
      %s63 = sphi 0, %s65
      %s66 = sphi 0, %s63
      %s67 = sphi 0, %s66
      %s83 = sphi 0, %s67
      %s87 = sphi 0, %s87
      %s89 = sphi 0, %s87
      %s90 = sphi 0, %s89
      %s104 = sphi 0, %s90
      %s108 = sphi 0, %s108
      %s110 = sphi 0, %s108
      %s111 = sphi 0, %s110
      %s125 = sphi 0, %s111
      %s129 = sphi 0, %s129
      %s131 = sphi 0, %s129
      %s132 = sphi 0, %s131
      %s146 = sphi 0, %s132
      %s154 = sphi 0, %s156
      %s157 = sphi 0, %s154
      %s158 = sphi 0, %s157
      %s174 = sphi 0, %s158
    $region4: #{frescat_forward.3} parent=1 // loop_header_branch
      %14 = sbr.rel (%p12) target = $region8
    $region5: #{frescat_forward.3} parent=1 // loop_body
      %s16 = ssub.s32 %s11, 1
      %s17 = ssub.s32 %s11, 2
      %s24 = sadd.s32 1, %s19
      %p25 = scmp.ge.s32.totalorder %s24, 2
      %s26 = scalar_select %p25, 0, %s24
      %s27 = sadd.s32 1, %s18
      %s28 = scalar_select %p25, %s27, %s18
      %p29 = scmp.ge.s32.totalorder %s28, 2
      %s30 = scalar_select %p29, 0, %s28
      %s31 = ssub.s32 %s18, %s30
      %s32 = ssub.s32 %s19, %s26
      %s33 = sor.u32 %s31, %s32
      %p34 = scmp.eq.s32.totalorder %s33, 0
      %s36 = sadd.s32 %s35, 1
      %s37 = scalar_select %p34, %s35, %s36
      %p40 = pneg %p34
      %p41 = scmp.eq.s32.totalorder %s11, 3
      %p42 = por %p40, %p41
      %p43 = scmp.ne.s32.totalorder %s35, %s38
      %p44 = scmp.eq.s32.totalorder %s11, 0
      %p45 = por %p43, %p44
      %p46 = scmp.ne.s32.totalorder %s35, %s38
      %p47 = scmp.eq.s32.totalorder %s16, 3
      %p48 = por %p46, %p47
      %p49 = scmp.ne.s32.totalorder %s38, %s39
      %p50 = scmp.eq.s32.totalorder %s16, 0
      %p51 = por %p49, %p50
      %p52 = scmp.ne.s32.totalorder %s38, %s39
      %p53 = scmp.eq.s32.totalorder %s17, 3
      %p54 = por %p52, %p53
      %p56 = scmp.ne.s32.totalorder %s39, %s55
      %p57 = scmp.eq.s32.totalorder %s17, 0
      %p58 = por %p56, %p57
      %s59 = ssub.s32 %s18, %s30
      %s60 = ssub.s32 %s19, %s26
      %s61 = sor.u32 %s59, %s60
      %p62 = scmp.eq.s32.totalorder %s61, 0
      %s64 = sadd.s32 %s63, 1
      %s65 = scalar_select %p62, %s63, %s64
      %p68 = pneg %p62
      %p69 = scmp.eq.s32.totalorder %s11, 3
      %p70 = por %p68, %p69
      %p71 = scmp.ne.s32.totalorder %s63, %s66
      %p72 = scmp.eq.s32.totalorder %s11, 0
      %p73 = por %p71, %p72
      %p74 = scmp.ne.s32.totalorder %s63, %s66
      %p75 = scmp.eq.s32.totalorder %s16, 3
      %p76 = por %p74, %p75
      %p77 = scmp.ne.s32.totalorder %s66, %s67
      %p78 = scmp.eq.s32.totalorder %s16, 0
      %p79 = por %p77, %p78
      %p80 = scmp.ne.s32.totalorder %s66, %s67
      %p81 = scmp.eq.s32.totalorder %s17, 3
      %p82 = por %p80, %p81
      %p84 = scmp.ne.s32.totalorder %s67, %s83
      %p85 = scmp.eq.s32.totalorder %s17, 0
      %p86 = por %p84, %p85
      %s88 = sadd.s32 %s87, 1
      %p91 = scmp.eq.s32.totalorder %s11, 3
      %p92 = scmp.ne.s32.totalorder %s87, %s89
      %p93 = scmp.eq.s32.totalorder %s11, 0
      %p94 = por %p92, %p93
      %p95 = scmp.ne.s32.totalorder %s87, %s89
      %p96 = scmp.eq.s32.totalorder %s16, 3
      %p97 = por %p95, %p96
      %p98 = scmp.ne.s32.totalorder %s89, %s90
      %p99 = scmp.eq.s32.totalorder %s16, 0
      %p100 = por %p98, %p99
      %p101 = scmp.ne.s32.totalorder %s89, %s90
      %p102 = scmp.eq.s32.totalorder %s17, 3
      %p103 = por %p101, %p102
      %p105 = scmp.ne.s32.totalorder %s90, %s104
      %p106 = scmp.eq.s32.totalorder %s17, 0
      %p107 = por %p105, %p106
      %s109 = sadd.s32 %s108, 1
      %p112 = scmp.eq.s32.totalorder %s11, 3
      %p113 = scmp.ne.s32.totalorder %s108, %s110
      %p114 = scmp.eq.s32.totalorder %s11, 0
      %p115 = por %p113, %p114
      %p116 = scmp.ne.s32.totalorder %s108, %s110
      %p117 = scmp.eq.s32.totalorder %s16, 3
      %p118 = por %p116, %p117
      %p119 = scmp.ne.s32.totalorder %s110, %s111
      %p120 = scmp.eq.s32.totalorder %s16, 0
      %p121 = por %p119, %p120
      %p122 = scmp.ne.s32.totalorder %s110, %s111
      %p123 = scmp.eq.s32.totalorder %s17, 3
      %p124 = por %p122, %p123
      %p126 = scmp.ne.s32.totalorder %s111, %s125
      %p127 = scmp.eq.s32.totalorder %s17, 0
      %p128 = por %p126, %p127
      %s130 = sadd.s32 %s129, 1
      %p133 = scmp.eq.s32.totalorder %s11, 3
      %p134 = scmp.ne.s32.totalorder %s129, %s131
      %p135 = scmp.eq.s32.totalorder %s11, 0
      %p136 = por %p134, %p135
      %p137 = scmp.ne.s32.totalorder %s129, %s131
      %p138 = scmp.eq.s32.totalorder %s16, 3
      %p139 = por %p137, %p138
      %p140 = scmp.ne.s32.totalorder %s131, %s132
      %p141 = scmp.eq.s32.totalorder %s16, 0
      %p142 = por %p140, %p141
      %p143 = scmp.ne.s32.totalorder %s131, %s132
      %p144 = scmp.eq.s32.totalorder %s17, 3
      %p145 = por %p143, %p144
      %p147 = scmp.ne.s32.totalorder %s132, %s146
      %p148 = scmp.eq.s32.totalorder %s17, 0
      %p149 = por %p147, %p148
      %s150 = ssub.s32 %s18, %s30
      %s151 = ssub.s32 %s19, %s26
      %s152 = sor.u32 %s150, %s151
      %p153 = scmp.eq.s32.totalorder %s152, 0
      %s155 = sadd.s32 %s154, 1
      %s156 = scalar_select %p153, %s154, %s155
      %p159 = pneg %p153
      %p160 = scmp.eq.s32.totalorder %s11, 3
      %p161 = por %p159, %p160
      %p162 = scmp.ne.s32.totalorder %s154, %s157
      %p163 = scmp.eq.s32.totalorder %s11, 0
      %p164 = por %p162, %p163
      %p165 = scmp.ne.s32.totalorder %s154, %s157
      %p166 = scmp.eq.s32.totalorder %s16, 3
      %p167 = por %p165, %p166
      %p168 = scmp.ne.s32.totalorder %s157, %s158
      %p169 = scmp.eq.s32.totalorder %s16, 0
      %p170 = por %p168, %p169
      %p171 = scmp.ne.s32.totalorder %s157, %s158
      %p172 = scmp.eq.s32.totalorder %s17, 3
      %p173 = por %p171, %p172
      %p175 = scmp.ne.s32.totalorder %s158, %s174
      %p176 = scmp.eq.s32.totalorder %s17, 0
      %p177 = por %p175, %p176
      %p178 = scmp.le.s32.totalorder 1, %s11
      %p179 = scmp.lt.s32.totalorder %s11, 5
      %p180 = pnand %p178, %p179
      %p181 = pneg %p180
      // Predicated region
      $region9: #{frescat_forward.3} parent=5 // pred_check
        _
      $region10: #{frescat_forward.3} parent=5 // pred_check_branch
        %183 = sbr.rel (%p180) target = $region12
      $region11: #{frescat_forward.3} parent=5 // pred_region
        %s184 = ssub.s32 %s11, 1
        // Predicated region
        $region13: #{frescat_forward.3} parent=11 // pred_check
          %p185 = pneg %p100
        $region14: #{frescat_forward.3} parent=11 // pred_check_branch
          %187 = sbr.rel (%p185) target = $region16
        $region15: #{frescat_forward.3} parent=11 // pred_region
          _
        $region16: #{frescat_forward.3} parent=11 // pred_fallthru
          _
        // Predicated region
        $region17: #{frescat_forward.3} parent=11 // pred_check
          %p188 = pneg %p121
        $region18: #{frescat_forward.3} parent=11 // pred_check_branch
          %190 = sbr.rel (%p188) target = $region20
        $region19: #{frescat_forward.3} parent=11 // pred_region
          _
        $region20: #{frescat_forward.3} parent=11 // pred_fallthru
          _
        // Predicated region
        $region21: #{frescat_forward.3} parent=11 // pred_check
          %p191 = pneg %p142
        $region22: #{frescat_forward.3} parent=11 // pred_check_branch
          %193 = sbr.rel (%p191) target = $region24
        $region23: #{frescat_forward.3} parent=11 // pred_region
          _
        $region24: #{frescat_forward.3} parent=11 // pred_fallthru
          _
      $region12: #{frescat_forward.3} parent=5 // pred_fallthru
        _
      %p194 = scmp.lt.s32.totalorder %s11, 4
      // Predicated region
      $region25: #{frescat_forward.3} parent=5 // pred_check
        %p195 = pneg %p194
      $region26: #{frescat_forward.3} parent=5 // pred_check_branch
        %197 = sbr.rel (%p195) target = $region28
      $region27: #{frescat_forward.3} parent=5 // pred_region
        // Predicated region
        $region29: #{frescat_forward.3} parent=27 // pred_check
          %p198 = pneg %p45
        $region30: #{frescat_forward.3} parent=27 // pred_check_branch
          %200 = sbr.rel (%p198) target = $region32
        $region31: #{frescat_forward.3} parent=27 // pred_region
          %s201 = sand.u32 %s35, 1
          %s202 = sand.u32 %s35, 1
          %s203 = smul.addr %s202, 128
          %s204 = scalar_lea.vmem [#allocation2], %s203
          %s205 = smul.u32 4, %s19
          %s206 = smul.addr %s18, 32
          %s207 = sadd.s32 %s205, %s206
          %s208 = smul.addr %s207, 8
          %s209 = scalar_lea.vmem %s0, %s208
          // Predicated region
          $region33: #{frescat_forward.3} parent=31 // pred_check
            _
          $region34: #{frescat_forward.3} parent=31 // pred_check_branch
            %211 = sbr.rel (0) target = $region36
          $region35: #{frescat_forward.3} parent=31 // pred_region
            // Predicated region
            $region37: #{frescat_forward.3} parent=35 // pred_check
              _
            $region38: #{frescat_forward.3} parent=35 // pred_check_branch
              %213 = sbr.rel (0) target = $region40
            $region39: #{frescat_forward.3} parent=35 // pred_region
              loop: start=0, step=1, limit=1
              $region41: #{frescat_forward.3} parent=39 // loop_pre_header
                _
              $region42: #{frescat_forward.3} parent=39 // loop_header
                %s215 = sphi 0, %s219
                %p216 = scmp.ge.s32.totalorder %s215, 1
                %s220 = sphi %s209, %s209
                %s221 = sphi %s204, %s204
              $region43: #{frescat_forward.3} parent=39 // loop_header_branch
                %218 = sbr.rel (%p216) target = $region47
              $region44: #{frescat_forward.3} parent=39 // loop_body
                %v222 = vld [vmem:[%s220] sm:$0xff]
                %223 = vst [vmem:[%s221] sm:$0xff] %v222
                %v224 = vld [vmem:[%s220 + $0x8] sm:$0xff]
                %225 = vst [vmem:[%s221 + $0x8] sm:$0xff] %v224
                %v226 = vld [vmem:[%s220 + $0x10] sm:$0xff]
                %227 = vst [vmem:[%s221 + $0x10] sm:$0xff] %v226
                %v228 = vld [vmem:[%s220 + $0x18] sm:$0xff]
                %229 = vst [vmem:[%s221 + $0x18] sm:$0xff] %v228
                %v230 = vld [vmem:[%s220 + $0x40] sm:$0xff]
                %231 = vst [vmem:[%s221 + $0x20] sm:$0xff] %v230
                %v232 = vld [vmem:[%s220 + $0x48] sm:$0xff]
                %233 = vst [vmem:[%s221 + $0x28] sm:$0xff] %v232
                %v234 = vld [vmem:[%s220 + $0x50] sm:$0xff]
                %235 = vst [vmem:[%s221 + $0x30] sm:$0xff] %v234
                %v236 = vld [vmem:[%s220 + $0x58] sm:$0xff]
                %237 = vst [vmem:[%s221 + $0x38] sm:$0xff] %v236
                %v238 = vld [vmem:[%s220 + $0x80] sm:$0xff]
                %239 = vst [vmem:[%s221 + $0x40] sm:$0xff] %v238
                %v240 = vld [vmem:[%s220 + $0x88] sm:$0xff]
                %241 = vst [vmem:[%s221 + $0x48] sm:$0xff] %v240
                %v242 = vld [vmem:[%s220 + $0x90] sm:$0xff]
                %243 = vst [vmem:[%s221 + $0x50] sm:$0xff] %v242
                %v244 = vld [vmem:[%s220 + $0x98] sm:$0xff]
                %245 = vst [vmem:[%s221 + $0x58] sm:$0xff] %v244
                %v246 = vld [vmem:[%s220 + $0xc0] sm:$0xff]
                %247 = vst [vmem:[%s221 + $0x60] sm:$0xff] %v246
                %v248 = vld [vmem:[%s220 + $0xc8] sm:$0xff]
                %249 = vst [vmem:[%s221 + $0x68] sm:$0xff] %v248
                %v250 = vld [vmem:[%s220 + $0xd0] sm:$0xff]
                %251 = vst [vmem:[%s221 + $0x70] sm:$0xff] %v250
                %v252 = vld [vmem:[%s220 + $0xd8] sm:$0xff]
                %253 = vst [vmem:[%s221 + $0x78] sm:$0xff] %v252
              $region45: #{frescat_forward.3} parent=39 // loop_footer
                %s219 = sadd.s32 1, %s215
              $region46: #{frescat_forward.3} parent=39 // loop_footer_branch
                %214 = sbr.rel target = $region42
              $region47: #{frescat_forward.3} parent=39 // loop_exit
                _
            $region40: #{frescat_forward.3} parent=35 // pred_fallthru
              _
            // Predicated region
            $region48: #{frescat_forward.3} parent=35 // pred_check
              _
            $region49: #{frescat_forward.3} parent=35 // pred_check_branch
              %255 = sbr.rel target = $region51
            $region50: #{frescat_forward.3} parent=35 // pred_region
              _
            $region51: #{frescat_forward.3} parent=35 // pred_fallthru
              _
          $region36: #{frescat_forward.3} parent=31 // pred_fallthru
            _
          %256 = vnop
        $region32: #{frescat_forward.3} parent=27 // pred_fallthru
          _
        // Predicated region
        $region52: #{frescat_forward.3} parent=27 // pred_check
          %p257 = pneg %p73
        $region53: #{frescat_forward.3} parent=27 // pred_check_branch
          %259 = sbr.rel (%p257) target = $region55
        $region54: #{frescat_forward.3} parent=27 // pred_region
          %s260 = sand.u32 %s63, 1
          %s261 = sand.u32 %s63, 1
          %s262 = smul.addr %s261, 128
          %s263 = scalar_lea.vmem [#allocation3], %s262
          %s264 = smul.u32 4, %s19
          %s265 = smul.addr %s18, 32
          %s266 = sadd.s32 %s264, %s265
          %s267 = smul.addr %s266, 8
          %s268 = scalar_lea.vmem %s1, %s267
          // Predicated region
          $region56: #{frescat_forward.3} parent=54 // pred_check
            _
          $region57: #{frescat_forward.3} parent=54 // pred_check_branch
            %270 = sbr.rel (0) target = $region59
          $region58: #{frescat_forward.3} parent=54 // pred_region
            // Predicated region
            $region60: #{frescat_forward.3} parent=58 // pred_check
              _
            $region61: #{frescat_forward.3} parent=58 // pred_check_branch
              %272 = sbr.rel (0) target = $region63
            $region62: #{frescat_forward.3} parent=58 // pred_region
              loop: start=0, step=1, limit=1
              $region64: #{frescat_forward.3} parent=62 // loop_pre_header
                _
              $region65: #{frescat_forward.3} parent=62 // loop_header
                %s274 = sphi 0, %s278
                %p275 = scmp.ge.s32.totalorder %s274, 1
                %s279 = sphi %s268, %s268
                %s280 = sphi %s263, %s263
              $region66: #{frescat_forward.3} parent=62 // loop_header_branch
                %277 = sbr.rel (%p275) target = $region70
              $region67: #{frescat_forward.3} parent=62 // loop_body
                %v281 = vld [vmem:[%s279] sm:$0xff]
                %282 = vst [vmem:[%s280] sm:$0xff] %v281
                %v283 = vld [vmem:[%s279 + $0x8] sm:$0xff]
                %284 = vst [vmem:[%s280 + $0x8] sm:$0xff] %v283
                %v285 = vld [vmem:[%s279 + $0x10] sm:$0xff]
                %286 = vst [vmem:[%s280 + $0x10] sm:$0xff] %v285
                %v287 = vld [vmem:[%s279 + $0x18] sm:$0xff]
                %288 = vst [vmem:[%s280 + $0x18] sm:$0xff] %v287
                %v289 = vld [vmem:[%s279 + $0x40] sm:$0xff]
                %290 = vst [vmem:[%s280 + $0x20] sm:$0xff] %v289
                %v291 = vld [vmem:[%s279 + $0x48] sm:$0xff]
                %292 = vst [vmem:[%s280 + $0x28] sm:$0xff] %v291
                %v293 = vld [vmem:[%s279 + $0x50] sm:$0xff]
                %294 = vst [vmem:[%s280 + $0x30] sm:$0xff] %v293
                %v295 = vld [vmem:[%s279 + $0x58] sm:$0xff]
                %296 = vst [vmem:[%s280 + $0x38] sm:$0xff] %v295
                %v297 = vld [vmem:[%s279 + $0x80] sm:$0xff]
                %298 = vst [vmem:[%s280 + $0x40] sm:$0xff] %v297
                %v299 = vld [vmem:[%s279 + $0x88] sm:$0xff]
                %300 = vst [vmem:[%s280 + $0x48] sm:$0xff] %v299
                %v301 = vld [vmem:[%s279 + $0x90] sm:$0xff]
                %302 = vst [vmem:[%s280 + $0x50] sm:$0xff] %v301
                %v303 = vld [vmem:[%s279 + $0x98] sm:$0xff]
                %304 = vst [vmem:[%s280 + $0x58] sm:$0xff] %v303
                %v305 = vld [vmem:[%s279 + $0xc0] sm:$0xff]
                %306 = vst [vmem:[%s280 + $0x60] sm:$0xff] %v305
                %v307 = vld [vmem:[%s279 + $0xc8] sm:$0xff]
                %308 = vst [vmem:[%s280 + $0x68] sm:$0xff] %v307
                %v309 = vld [vmem:[%s279 + $0xd0] sm:$0xff]
                %310 = vst [vmem:[%s280 + $0x70] sm:$0xff] %v309
                %v311 = vld [vmem:[%s279 + $0xd8] sm:$0xff]
                %312 = vst [vmem:[%s280 + $0x78] sm:$0xff] %v311
              $region68: #{frescat_forward.3} parent=62 // loop_footer
                %s278 = sadd.s32 1, %s274
              $region69: #{frescat_forward.3} parent=62 // loop_footer_branch
                %273 = sbr.rel target = $region65
              $region70: #{frescat_forward.3} parent=62 // loop_exit
                _
            $region63: #{frescat_forward.3} parent=58 // pred_fallthru
              _
            // Predicated region
            $region71: #{frescat_forward.3} parent=58 // pred_check
              _
            $region72: #{frescat_forward.3} parent=58 // pred_check_branch
              %314 = sbr.rel target = $region74
            $region73: #{frescat_forward.3} parent=58 // pred_region
              _
            $region74: #{frescat_forward.3} parent=58 // pred_fallthru
              _
          $region59: #{frescat_forward.3} parent=54 // pred_fallthru
            _
          %315 = vnop
        $region55: #{frescat_forward.3} parent=27 // pred_fallthru
          _
      $region28: #{frescat_forward.3} parent=5 // pred_fallthru
        _
      %p316 = scmp.le.s32.totalorder 1, %s11
      %p317 = scmp.lt.s32.totalorder %s11, 5
      %p318 = pnand %p316, %p317
      %p319 = pneg %p318
      // Predicated region
      $region75: #{frescat_forward.3} parent=5 // pred_check
        _
      $region76: #{frescat_forward.3} parent=5 // pred_check_branch
        %321 = sbr.rel (%p318) target = $region78
      $region77: #{frescat_forward.3} parent=5 // pred_region
        %s322 = ssub.s32 %s11, 1
        %s323 = sand.u32 %s38, 1
        %s324 = sand.u32 %s38, 1
        %s325 = smul.addr %s324, 128
        %s326 = scalar_lea.vmem [#allocation2], %s325
        // Predicated region
        $region79: #{frescat_forward.3} parent=77 // pred_check
          %p327 = pneg %p51
        $region80: #{frescat_forward.3} parent=77 // pred_check_branch
          %329 = sbr.rel (%p327) target = $region82
        $region81: #{frescat_forward.3} parent=77 // pred_region
          _
        $region82: #{frescat_forward.3} parent=77 // pred_fallthru
          _
        %s330 = sand.u32 %s66, 1
        %s331 = sand.u32 %s66, 1
        %s332 = smul.addr %s331, 128
        %s333 = scalar_lea.vmem [#allocation3], %s332
        // Predicated region
        $region83: #{frescat_forward.3} parent=77 // pred_check
          %p334 = pneg %p79
        $region84: #{frescat_forward.3} parent=77 // pred_check_branch
          %336 = sbr.rel (%p334) target = $region86
        $region85: #{frescat_forward.3} parent=77 // pred_region
          _
        $region86: #{frescat_forward.3} parent=77 // pred_fallthru
          _
        %s337 = sand.u32 %s38, 1
        %s338 = sand.u32 %s38, 1
        %s339 = smul.addr %s338, 128
        %s340 = scalar_lea.vmem [#allocation2], %s339
        %p341 = pneg %p51
        %p342 = pneg %p48
        %s343 = sand.u32 %s66, 1
        %s344 = sand.u32 %s66, 1
        %s345 = smul.addr %s344, 128
        %s346 = scalar_lea.vmem [#allocation3], %s345
        %p347 = pneg %p79
        %p348 = pneg %p76
        %p349 = pneg %p100
        %p350 = pneg %p97
        %p351 = pneg %p121
        %p352 = pneg %p118
        %p353 = pneg %p142
        %p354 = pneg %p139
        %p355 = pneg %p170
        %p356 = pneg %p167
        %s357 = sand.u32 %s157, 1
        %s358 = sand.u32 %s157, 1
        %s359 = smul.addr %s358, 128
        %s360 = scalar_lea.vmem [#allocation4], %s359
        %s361 = smul.u32 4, %s21
        %s362 = smul.u32 4, %s21
        %s363 = smul.u32 4, %s21
        %v364 = vld [vmem:[%s2] sm:$0xff]
        %v365 = vld [vmem:[%s2 + $0x8] sm:$0xff]
        %v366 = vld [vmem:[%s2 + $0x10] sm:$0xff]
        %v367 = vld [vmem:[%s2 + $0x18] sm:$0xff]
        %v368 = vld [vmem:[%s326] sm:$0xff]
        %v369 = vld [vmem:[%s326 + $0x8] sm:$0xff]
        %v370 = vld [vmem:[%s326 + $0x10] sm:$0xff]
        %v371 = vld [vmem:[%s326 + $0x18] sm:$0xff]
        %v372 = vld [vmem:[%s326 + $0x20] sm:$0xff]
        %v373 = vld [vmem:[%s326 + $0x28] sm:$0xff]
        %v374 = vld [vmem:[%s326 + $0x30] sm:$0xff]
        %v375 = vld [vmem:[%s326 + $0x38] sm:$0xff]
        %v376 = vld [vmem:[%s326 + $0x40] sm:$0xff]
        %v377 = vld [vmem:[%s326 + $0x48] sm:$0xff]
        %v378 = vld [vmem:[%s326 + $0x50] sm:$0xff]
        %v379 = vld [vmem:[%s326 + $0x58] sm:$0xff]
        %v380 = vld [vmem:[%s326 + $0x60] sm:$0xff]
        %v381 = vld [vmem:[%s326 + $0x68] sm:$0xff]
        %v382 = vld [vmem:[%s326 + $0x70] sm:$0xff]
        %v383 = vld [vmem:[%s326 + $0x78] sm:$0xff]
        %v384 = vld [vmem:[%s3] sm:$0xff]
        %v385 = vld [vmem:[%s3 + $0x8] sm:$0xff]
        %v386 = vld [vmem:[%s3 + $0x10] sm:$0xff]
        %v387 = vld [vmem:[%s3 + $0x18] sm:$0xff]
        %v388 = vld [vmem:[%s333] sm:$0xff]
        %v389 = vld [vmem:[%s333 + $0x8] sm:$0xff]
        %v390 = vld [vmem:[%s333 + $0x10] sm:$0xff]
        %v391 = vld [vmem:[%s333 + $0x18] sm:$0xff]
        %v392 = vld [vmem:[%s333 + $0x20] sm:$0xff]
        %v393 = vld [vmem:[%s333 + $0x28] sm:$0xff]
        %v394 = vld [vmem:[%s333 + $0x30] sm:$0xff]
        %v395 = vld [vmem:[%s333 + $0x38] sm:$0xff]
        %v396 = vld [vmem:[%s333 + $0x40] sm:$0xff]
        %v397 = vld [vmem:[%s333 + $0x48] sm:$0xff]
        %v398 = vld [vmem:[%s333 + $0x50] sm:$0xff]
        %v399 = vld [vmem:[%s333 + $0x58] sm:$0xff]
        %v400 = vld [vmem:[%s333 + $0x60] sm:$0xff]
        %v401 = vld [vmem:[%s333 + $0x68] sm:$0xff]
        %v402 = vld [vmem:[%s333 + $0x70] sm:$0xff]
        %v403 = vld [vmem:[%s333 + $0x78] sm:$0xff]
        %vm404 = vcmask 261120
        %v406 = vsel %vm404, %v384, 0
        %v409 = vsel %vm404, %v385, 0
        %v412 = vsel %vm404, %v386, 0
        %v415 = vsel %vm404, %v387, 0
        %417 = vmatprep.subr.mxu0 %v389
        %418 = vmatpush1.msra.mxu0 %v388
        %419 = vmatprep.subr.mxu0 %v393
        %420 = vmatpush1.msra.mxu0 %v392
        %421 = vmatprep.subr.mxu0 %v397
        %422 = vmatpush1.msra.mxu0 %v396
        %423 = vmatprep.subr.mxu0 %v401
        %424 = vmatpush1.msra.mxu0 %v400
        %425 = vmatprep.subr.mxu0 0.0
        %426 = vmatpush1.msra.mxu0 0.0
        %427 = vmatprep.subr.mxu0 0.0
        %428 = vmatpush1.msra.mxu0 0.0
        %429 = vmatprep.subr.mxu0 0.0
        %430 = vmatpush1.msra.mxu0 0.0
        %431 = vmatprep.subr.mxu0 0.0
        %432 = vmatpush1.msra.mxu0 0.0
        %433 = vmatprep.subr.mxu0 0.0
        %434 = vmatpush1.msra.mxu0 0.0
        %435 = vmatprep.subr.mxu0 0.0
        %436 = vmatpush1.msra.mxu0 0.0
        %437 = vmatprep.subr.mxu0 0.0
        %438 = vmatpush1.msra.mxu0 0.0
        %439 = vmatprep.subr.mxu0 0.0
        %440 = vmatpush1.msra.mxu0 0.0
        %441 = vmatprep.subr.mxu0 0.0
        %442 = vmatpush1.msra.mxu0 0.0
        %443 = vmatprep.subr.mxu0 0.0
        %444 = vmatpush1.msra.mxu0 0.0
        %445 = vmatprep.subr.mxu0 0.0
        %446 = vmatpush1.msra.mxu0 0.0
        %447 = vmatprep.subr.mxu0 0.0
        %448 = vmatpush1.msra.mxu0 0.0
        %449 = vmatprep.subr.mxu0 0.0
        %450 = vmatpush1.msra.mxu0 0.0
        %451 = vmatprep.subr.mxu0 0.0
        %452 = vmatpush1.msra.mxu0 0.0
        %453 = vmatprep.subr.mxu0 0.0
        %454 = vmatpush1.msra.mxu0 0.0
        %455 = vmatprep.subr.mxu0 0.0
        %456 = vmatpush1.msra.mxu0 0.0
        %457 = vmatprep.subr.mxu0 0.0
        %458 = vmatpush1.msra.mxu0 0.0
        %459 = vmatprep.subr.mxu0 0.0
        %460 = vmatpush1.msra.mxu0 0.0
        %461 = vmatprep.subr.mxu0 0.0
        %462 = vmatpush1.msra.mxu0 0.0
        %463 = vmatprep.subr.mxu0 0.0
        %464 = vmatpush1.msra.mxu0 0.0
        %465 = vmatprep.subr.mxu0 0.0
        %466 = vmatpush1.msra.mxu0 0.0
        %467 = vmatprep.subr.mxu0 0.0
        %468 = vmatpush1.msra.mxu0 0.0
        %469 = vmatprep.subr.mxu0 0.0
        %470 = vmatpush1.msra.mxu0 0.0
        %471 = vmatprep.subr.mxu0 0.0
        %472 = vmatpush1.msra.mxu0 0.0
        %473 = vmatprep.subr.mxu0 0.0
        %474 = vmatpush1.msra.mxu0 0.0
        %475 = vmatprep.subr.mxu0 0.0
        %476 = vmatpush1.msra.mxu0 0.0
        %477 = vmatprep.subr.mxu0 0.0
        %478 = vmatpush1.msra.mxu0 0.0
        %479 = vmatprep.subr.mxu0 0.0
        %480 = vmatpush1.msra.mxu0 0.0
        %481 = vmatprep.mubr.f32.mxu0 0.0
        %482 = vmatmul.mubr.f32.gmra.mrb[0].mxu0 %v406
        %v483 = vpop.f32.mrb[0].mxu0
        %v484 = vadd.f32 0.0, %v483
        %v485 = vpop.f32.mrb[0].mxu0
        %v486 = vadd.f32 0.0, %v485
        %487 = vmatprep.mubr.f32.mxu0 0.0
        %488 = vmatmul.mubr.f32.gmra.mrb[0].mxu0 %v409
        %v489 = vpop.f32.mrb[0].mxu0
        %v490 = vadd.f32 0.0, %v489
        %v491 = vpop.f32.mrb[0].mxu0
        %v492 = vadd.f32 0.0, %v491
        %493 = vmatprep.mubr.f32.mxu0 0.0
        %494 = vmatmul.mubr.f32.gmra.mrb[0].mxu0 %v412
        %v495 = vpop.f32.mrb[0].mxu0
        %v496 = vadd.f32 0.0, %v495
        %v497 = vpop.f32.mrb[0].mxu0
        %v498 = vadd.f32 0.0, %v497
        %499 = vmatprep.mubr.f32.mxu0 0.0
        %500 = vmatmul.mubr.f32.gmra.mrb[0].mxu0 %v415
        %v501 = vpop.f32.mrb[0].mxu0
        %v502 = vadd.f32 0.0, %v501
        %v503 = vpop.f32.mrb[0].mxu0
        %v504 = vadd.f32 0.0, %v503
        %505 = vdwg.mxu0
        %506 = vmatprep.subr.mxu0 %v391
        %507 = vmatpush1.msra.mxu0 %v390
        %508 = vmatprep.subr.mxu0 %v395
        %509 = vmatpush1.msra.mxu0 %v394
        %510 = vmatprep.subr.mxu0 %v399
        %511 = vmatpush1.msra.mxu0 %v398
        %512 = vmatprep.subr.mxu0 %v403
        %513 = vmatpush1.msra.mxu0 %v402
        %514 = vmatprep.subr.mxu0 0.0
        %515 = vmatpush1.msra.mxu0 0.0
        %516 = vmatprep.subr.mxu0 0.0
        %517 = vmatpush1.msra.mxu0 0.0
        %518 = vmatprep.subr.mxu0 0.0
        %519 = vmatpush1.msra.mxu0 0.0
        %520 = vmatprep.subr.mxu0 0.0
        %521 = vmatpush1.msra.mxu0 0.0
        %522 = vmatprep.subr.mxu0 0.0
        %523 = vmatpush1.msra.mxu0 0.0
        %524 = vmatprep.subr.mxu0 0.0
        %525 = vmatpush1.msra.mxu0 0.0
        %526 = vmatprep.subr.mxu0 0.0
        %527 = vmatpush1.msra.mxu0 0.0
        %528 = vmatprep.subr.mxu0 0.0
        %529 = vmatpush1.msra.mxu0 0.0
        %530 = vmatprep.subr.mxu0 0.0
        %531 = vmatpush1.msra.mxu0 0.0
        %532 = vmatprep.subr.mxu0 0.0
        %533 = vmatpush1.msra.mxu0 0.0
        %534 = vmatprep.subr.mxu0 0.0
        %535 = vmatpush1.msra.mxu0 0.0
        %536 = vmatprep.subr.mxu0 0.0
        %537 = vmatpush1.msra.mxu0 0.0
        %538 = vmatprep.subr.mxu0 0.0
        %539 = vmatpush1.msra.mxu0 0.0
        %540 = vmatprep.subr.mxu0 0.0
        %541 = vmatpush1.msra.mxu0 0.0
        %542 = vmatprep.subr.mxu0 0.0
        %543 = vmatpush1.msra.mxu0 0.0
        %544 = vmatprep.subr.mxu0 0.0
        %545 = vmatpush1.msra.mxu0 0.0
        %546 = vmatprep.subr.mxu0 0.0
        %547 = vmatpush1.msra.mxu0 0.0
        %548 = vmatprep.subr.mxu0 0.0
        %549 = vmatpush1.msra.mxu0 0.0
        %550 = vmatprep.subr.mxu0 0.0
        %551 = vmatpush1.msra.mxu0 0.0
        %552 = vmatprep.subr.mxu0 0.0
        %553 = vmatpush1.msra.mxu0 0.0
        %554 = vmatprep.subr.mxu0 0.0
        %555 = vmatpush1.msra.mxu0 0.0
        %556 = vmatprep.subr.mxu0 0.0
        %557 = vmatpush1.msra.mxu0 0.0
        %558 = vmatprep.subr.mxu0 0.0
        %559 = vmatpush1.msra.mxu0 0.0
        %560 = vmatprep.subr.mxu0 0.0
        %561 = vmatpush1.msra.mxu0 0.0
        %562 = vmatprep.subr.mxu0 0.0
        %563 = vmatpush1.msra.mxu0 0.0
        %564 = vmatprep.subr.mxu0 0.0
        %565 = vmatpush1.msra.mxu0 0.0
        %566 = vmatprep.subr.mxu0 0.0
        %567 = vmatpush1.msra.mxu0 0.0
        %568 = vmatprep.subr.mxu0 0.0
        %569 = vmatpush1.msra.mxu0 0.0
        %570 = vmatprep.mubr.f32.mxu0 0.0
        %571 = vmatmul.mubr.f32.gmra.mrb[0].mxu0 %v406
        %v572 = vpop.f32.mrb[0].mxu0
        %v573 = vadd.f32 0.0, %v572
        %v574 = vpop.f32.mrb[0].mxu0
        %v575 = vadd.f32 0.0, %v574
        %576 = vmatprep.mubr.f32.mxu0 0.0
        %577 = vmatmul.mubr.f32.gmra.mrb[0].mxu0 %v409
        %v578 = vpop.f32.mrb[0].mxu0
        %v579 = vadd.f32 0.0, %v578
        %v580 = vpop.f32.mrb[0].mxu0
        %v581 = vadd.f32 0.0, %v580
        %582 = vmatprep.mubr.f32.mxu0 0.0
        %583 = vmatmul.mubr.f32.gmra.mrb[0].mxu0 %v412
        %v584 = vpop.f32.mrb[0].mxu0
        %v585 = vadd.f32 0.0, %v584
        %v586 = vpop.f32.mrb[0].mxu0
        %v587 = vadd.f32 0.0, %v586
        %588 = vmatprep.mubr.f32.mxu0 0.0
        %589 = vmatmul.mubr.f32.gmra.mrb[0].mxu0 %v415
        %v590 = vpop.f32.mrb[0].mxu0
        %v591 = vadd.f32 0.0, %v590
        %v592 = vpop.f32.mrb[0].mxu0
        %v593 = vadd.f32 0.0, %v592
        %594 = vdwg.mxu0
        %v596 = vsel %vm404, %v364, 0
        %v599 = vsel %vm404, %v365, 0
        %v602 = vsel %vm404, %v366, 0
        %v605 = vsel %vm404, %v367, 0
        %607 = vmatprep.subr.mxu0 %v369
        %608 = vmatpush1.msra.mxu0 %v368
        %609 = vmatprep.subr.mxu0 %v373
        %610 = vmatpush1.msra.mxu0 %v372
        %611 = vmatprep.subr.mxu0 %v377
        %612 = vmatpush1.msra.mxu0 %v376
        %613 = vmatprep.subr.mxu0 %v381
        %614 = vmatpush1.msra.mxu0 %v380
        %615 = vmatprep.subr.mxu0 0.0
        %616 = vmatpush1.msra.mxu0 0.0
        %617 = vmatprep.subr.mxu0 0.0
        %618 = vmatpush1.msra.mxu0 0.0
        %619 = vmatprep.subr.mxu0 0.0
        %620 = vmatpush1.msra.mxu0 0.0
        %621 = vmatprep.subr.mxu0 0.0
        %622 = vmatpush1.msra.mxu0 0.0
        %623 = vmatprep.subr.mxu0 0.0
        %624 = vmatpush1.msra.mxu0 0.0
        %625 = vmatprep.subr.mxu0 0.0
        %626 = vmatpush1.msra.mxu0 0.0
        %627 = vmatprep.subr.mxu0 0.0
        %628 = vmatpush1.msra.mxu0 0.0
        %629 = vmatprep.subr.mxu0 0.0
        %630 = vmatpush1.msra.mxu0 0.0
        %631 = vmatprep.subr.mxu0 0.0
        %632 = vmatpush1.msra.mxu0 0.0
        %633 = vmatprep.subr.mxu0 0.0
        %634 = vmatpush1.msra.mxu0 0.0
        %635 = vmatprep.subr.mxu0 0.0
        %636 = vmatpush1.msra.mxu0 0.0
        %637 = vmatprep.subr.mxu0 0.0
        %638 = vmatpush1.msra.mxu0 0.0
        %639 = vmatprep.subr.mxu0 0.0
        %640 = vmatpush1.msra.mxu0 0.0
        %641 = vmatprep.subr.mxu0 0.0
        %642 = vmatpush1.msra.mxu0 0.0
        %643 = vmatprep.subr.mxu0 0.0
        %644 = vmatpush1.msra.mxu0 0.0
        %645 = vmatprep.subr.mxu0 0.0
        %646 = vmatpush1.msra.mxu0 0.0
        %647 = vmatprep.subr.mxu0 0.0
        %648 = vmatpush1.msra.mxu0 0.0
        %649 = vmatprep.subr.mxu0 0.0
        %650 = vmatpush1.msra.mxu0 0.0
        %651 = vmatprep.subr.mxu0 0.0
        %652 = vmatpush1.msra.mxu0 0.0
        %653 = vmatprep.subr.mxu0 0.0
        %654 = vmatpush1.msra.mxu0 0.0
        %655 = vmatprep.subr.mxu0 0.0
        %656 = vmatpush1.msra.mxu0 0.0
        %657 = vmatprep.subr.mxu0 0.0
        %658 = vmatpush1.msra.mxu0 0.0
        %659 = vmatprep.subr.mxu0 0.0
        %660 = vmatpush1.msra.mxu0 0.0
        %661 = vmatprep.subr.mxu0 0.0
        %662 = vmatpush1.msra.mxu0 0.0
        %663 = vmatprep.subr.mxu0 0.0
        %664 = vmatpush1.msra.mxu0 0.0
        %665 = vmatprep.subr.mxu0 0.0
        %666 = vmatpush1.msra.mxu0 0.0
        %667 = vmatprep.subr.mxu0 0.0
        %668 = vmatpush1.msra.mxu0 0.0
        %669 = vmatprep.subr.mxu0 0.0
        %670 = vmatpush1.msra.mxu0 0.0
        %671 = vmatprep.mubr.f32.mxu0 0.0
        %672 = vmatmul.mubr.f32.gmra.mrb[0].mxu0 %v596
        %v673 = vpop.f32.mrb[0].mxu0
        %v674 = vadd.f32 %v484, %v673
        %v675 = vpop.f32.mrb[0].mxu0
        %v676 = vadd.f32 %v486, %v675
        %677 = vmatprep.mubr.f32.mxu0 0.0
        %678 = vmatmul.mubr.f32.gmra.mrb[0].mxu0 %v599
        %v679 = vpop.f32.mrb[0].mxu0
        %v680 = vadd.f32 %v490, %v679
        %v681 = vpop.f32.mrb[0].mxu0
        %v682 = vadd.f32 %v492, %v681
        %683 = vmatprep.mubr.f32.mxu0 0.0
        %684 = vmatmul.mubr.f32.gmra.mrb[0].mxu0 %v602
        %v685 = vpop.f32.mrb[0].mxu0
        %v686 = vadd.f32 %v496, %v685
        %v687 = vpop.f32.mrb[0].mxu0
        %v688 = vadd.f32 %v498, %v687
        %689 = vmatprep.mubr.f32.mxu0 0.0
        %690 = vmatmul.mubr.f32.gmra.mrb[0].mxu0 %v605
        %v691 = vpop.f32.mrb[0].mxu0
        %v692 = vadd.f32 %v502, %v691
        %v693 = vpop.f32.mrb[0].mxu0
        %v694 = vadd.f32 %v504, %v693
        %695 = vdwg.mxu0
        %696 = vmatprep.subr.mxu0 %v371
        %697 = vmatpush1.msra.mxu0 %v370
        %698 = vmatprep.subr.mxu0 %v375
        %699 = vmatpush1.msra.mxu0 %v374
        %700 = vmatprep.subr.mxu0 %v379
        %701 = vmatpush1.msra.mxu0 %v378
        %702 = vmatprep.subr.mxu0 %v383
        %703 = vmatpush1.msra.mxu0 %v382
        %704 = vmatprep.subr.mxu0 0.0
        %705 = vmatpush1.msra.mxu0 0.0
        %706 = vmatprep.subr.mxu0 0.0
        %707 = vmatpush1.msra.mxu0 0.0
        %708 = vmatprep.subr.mxu0 0.0
        %709 = vmatpush1.msra.mxu0 0.0
        %710 = vmatprep.subr.mxu0 0.0
        %711 = vmatpush1.msra.mxu0 0.0
        %712 = vmatprep.subr.mxu0 0.0
        %713 = vmatpush1.msra.mxu0 0.0
        %714 = vmatprep.subr.mxu0 0.0
        %715 = vmatpush1.msra.mxu0 0.0
        %716 = vmatprep.subr.mxu0 0.0
        %717 = vmatpush1.msra.mxu0 0.0
        %718 = vmatprep.subr.mxu0 0.0
        %719 = vmatpush1.msra.mxu0 0.0
        %720 = vmatprep.subr.mxu0 0.0
        %721 = vmatpush1.msra.mxu0 0.0
        %722 = vmatprep.subr.mxu0 0.0
        %723 = vmatpush1.msra.mxu0 0.0
        %724 = vmatprep.subr.mxu0 0.0
        %725 = vmatpush1.msra.mxu0 0.0
        %726 = vmatprep.subr.mxu0 0.0
        %727 = vmatpush1.msra.mxu0 0.0
        %728 = vmatprep.subr.mxu0 0.0
        %729 = vmatpush1.msra.mxu0 0.0
        %730 = vmatprep.subr.mxu0 0.0
        %731 = vmatpush1.msra.mxu0 0.0
        %732 = vmatprep.subr.mxu0 0.0
        %733 = vmatpush1.msra.mxu0 0.0
        %734 = vmatprep.subr.mxu0 0.0
        %735 = vmatpush1.msra.mxu0 0.0
        %736 = vmatprep.subr.mxu0 0.0
        %737 = vmatpush1.msra.mxu0 0.0
        %738 = vmatprep.subr.mxu0 0.0
        %739 = vmatpush1.msra.mxu0 0.0
        %740 = vmatprep.subr.mxu0 0.0
        %741 = vmatpush1.msra.mxu0 0.0
        %742 = vmatprep.subr.mxu0 0.0
        %743 = vmatpush1.msra.mxu0 0.0
        %744 = vmatprep.subr.mxu0 0.0
        %745 = vmatpush1.msra.mxu0 0.0
        %746 = vmatprep.subr.mxu0 0.0
        %747 = vmatpush1.msra.mxu0 0.0
        %748 = vmatprep.subr.mxu0 0.0
        %749 = vmatpush1.msra.mxu0 0.0
        %750 = vmatprep.subr.mxu0 0.0
        %751 = vmatpush1.msra.mxu0 0.0
        %752 = vmatprep.subr.mxu0 0.0
        %753 = vmatpush1.msra.mxu0 0.0
        %754 = vmatprep.subr.mxu0 0.0
        %755 = vmatpush1.msra.mxu0 0.0
        %756 = vmatprep.subr.mxu0 0.0
        %757 = vmatpush1.msra.mxu0 0.0
        %758 = vmatprep.subr.mxu0 0.0
        %759 = vmatpush1.msra.mxu0 0.0
        %760 = vmatprep.mubr.f32.mxu0 0.0
        %761 = vmatmul.mubr.f32.gmra.mrb[0].mxu0 %v596
        %v762 = vpop.f32.mrb[0].mxu0
        %v763 = vadd.f32 %v573, %v762
        %v764 = vpop.f32.mrb[0].mxu0
        %v765 = vadd.f32 %v575, %v764
        %766 = vmatprep.mubr.f32.mxu0 0.0
        %767 = vmatmul.mubr.f32.gmra.mrb[0].mxu0 %v599
        %v768 = vpop.f32.mrb[0].mxu0
        %v769 = vadd.f32 %v579, %v768
        %v770 = vpop.f32.mrb[0].mxu0
        %v771 = vadd.f32 %v581, %v770
        %772 = vmatprep.mubr.f32.mxu0 0.0
        %773 = vmatmul.mubr.f32.gmra.mrb[0].mxu0 %v602
        %v774 = vpop.f32.mrb[0].mxu0
        %v775 = vadd.f32 %v585, %v774
        %v776 = vpop.f32.mrb[0].mxu0
        %v777 = vadd.f32 %v587, %v776
        %778 = vmatprep.mubr.f32.mxu0 0.0
        %779 = vmatmul.mubr.f32.gmra.mrb[0].mxu0 %v605
        %v780 = vpop.f32.mrb[0].mxu0
        %v781 = vadd.f32 %v591, %v780
        %v782 = vpop.f32.mrb[0].mxu0
        %v783 = vadd.f32 %v593, %v782
        %784 = vdwg.mxu0
        %v785 = vld [vmem:[%s4] sm:$0xff]
        %v786 = vld [vmem:[%s4 + $0x8] sm:$0xff]
        %v787 = vld [vmem:[%s4 + $0x10] sm:$0xff]
        %v788 = vld [vmem:[%s4 + $0x18] sm:$0xff]
        %790 = vset.pattern.permute.xlu0 0
        %791 = vperm.xlu0 %790, %v785
        %v792 = vpop.permute.xlu0 %791
        %795 = vset.pattern.permute.xlu0 0
        %796 = vperm.xlu0 %795, %v786
        %v797 = vpop.permute.xlu0 %796
        %800 = vset.pattern.permute.xlu0 0
        %801 = vperm.xlu0 %800, %v787
        %v802 = vpop.permute.xlu0 %801
        %805 = vset.pattern.permute.xlu0 0
        %806 = vperm.xlu0 %805, %v788
        %v807 = vpop.permute.xlu0 %806
        %v809 = vadd.f32 %v674, %v792
        %v810 = vadd.f32 %v676, %v792
        %v811 = vadd.f32 %v763, %v792
        %v812 = vadd.f32 %v765, %v792
        %v813 = vadd.f32 %v680, %v797
        %v814 = vadd.f32 %v682, %v797
        %v815 = vadd.f32 %v769, %v797
        %v816 = vadd.f32 %v771, %v797
        %v817 = vadd.f32 %v686, %v802
        %v818 = vadd.f32 %v688, %v802
        %v819 = vadd.f32 %v775, %v802
        %v820 = vadd.f32 %v777, %v802
        %v821 = vadd.f32 %v692, %v807
        %v822 = vadd.f32 %v694, %v807
        %v823 = vadd.f32 %v781, %v807
        %v824 = vadd.f32 %v783, %v807
        %825 = vst [vmem:[%s360] sm:$0xff] %v809
        %826 = vst [vmem:[%s360 + $0x8] sm:$0xff] %v810
        %827 = vst [vmem:[%s360 + $0x10] sm:$0xff] %v811
        %828 = vst [vmem:[%s360 + $0x18] sm:$0xff] %v812
        %829 = vst [vmem:[%s360 + $0x20] sm:$0xff] %v813
        %830 = vst [vmem:[%s360 + $0x28] sm:$0xff] %v814
        %831 = vst [vmem:[%s360 + $0x30] sm:$0xff] %v815
        %832 = vst [vmem:[%s360 + $0x38] sm:$0xff] %v816
        %833 = vst [vmem:[%s360 + $0x40] sm:$0xff] %v817
        %834 = vst [vmem:[%s360 + $0x48] sm:$0xff] %v818
        %835 = vst [vmem:[%s360 + $0x50] sm:$0xff] %v819
        %836 = vst [vmem:[%s360 + $0x58] sm:$0xff] %v820
        %837 = vst [vmem:[%s360 + $0x60] sm:$0xff] %v821
        %838 = vst [vmem:[%s360 + $0x68] sm:$0xff] %v822
        %839 = vst [vmem:[%s360 + $0x70] sm:$0xff] %v823
        %840 = vst [vmem:[%s360 + $0x78] sm:$0xff] %v824
        %s841 = sand.u32 %s157, 1
        %s842 = sand.u32 %s157, 1
        %s843 = smul.addr %s842, 128
        %s844 = scalar_lea.vmem [#allocation4], %s843
        // Predicated region
        $region87: #{frescat_forward.3} parent=77 // pred_check
          %p845 = pneg %p167
        $region88: #{frescat_forward.3} parent=77 // pred_check_branch
          %847 = sbr.rel (%p845) target = $region90
        $region89: #{frescat_forward.3} parent=77 // pred_region
          %s848 = smul.u32 4, %s21
          %s849 = smul.addr %s20, 32
          %s850 = sadd.s32 %s848, %s849
          %s851 = smul.addr %s850, 8
          %s852 = scalar_lea.vmem %s5, %s851
          // Predicated region
          $region91: #{frescat_forward.3} parent=89 // pred_check
            _
          $region92: #{frescat_forward.3} parent=89 // pred_check_branch
            %854 = sbr.rel (0) target = $region94
          $region93: #{frescat_forward.3} parent=89 // pred_region
            // Predicated region
            $region95: #{frescat_forward.3} parent=93 // pred_check
              _
            $region96: #{frescat_forward.3} parent=93 // pred_check_branch
              %856 = sbr.rel (0) target = $region98
            $region97: #{frescat_forward.3} parent=93 // pred_region
              loop: start=0, step=1, limit=1
              $region99: #{frescat_forward.3} parent=97 // loop_pre_header
                _
              $region100: #{frescat_forward.3} parent=97 // loop_header
                %s858 = sphi 0, %s862
                %p859 = scmp.ge.s32.totalorder %s858, 1
                %s863 = sphi %s844, %s844
                %s864 = sphi %s852, %s852
              $region101: #{frescat_forward.3} parent=97 // loop_header_branch
                %861 = sbr.rel (%p859) target = $region105
              $region102: #{frescat_forward.3} parent=97 // loop_body
                %v865 = vld [vmem:[%s863] sm:$0xff]
                %866 = vst [vmem:[%s864] sm:$0xff] %v865
                %v867 = vld [vmem:[%s863 + $0x8] sm:$0xff]
                %868 = vst [vmem:[%s864 + $0x8] sm:$0xff] %v867
                %v869 = vld [vmem:[%s863 + $0x10] sm:$0xff]
                %870 = vst [vmem:[%s864 + $0x10] sm:$0xff] %v869
                %v871 = vld [vmem:[%s863 + $0x18] sm:$0xff]
                %872 = vst [vmem:[%s864 + $0x18] sm:$0xff] %v871
                %v873 = vld [vmem:[%s863 + $0x20] sm:$0xff]
                %874 = vst [vmem:[%s864 + $0x40] sm:$0xff] %v873
                %v875 = vld [vmem:[%s863 + $0x28] sm:$0xff]
                %876 = vst [vmem:[%s864 + $0x48] sm:$0xff] %v875
                %v877 = vld [vmem:[%s863 + $0x30] sm:$0xff]
                %878 = vst [vmem:[%s864 + $0x50] sm:$0xff] %v877
                %v879 = vld [vmem:[%s863 + $0x38] sm:$0xff]
                %880 = vst [vmem:[%s864 + $0x58] sm:$0xff] %v879
                %v881 = vld [vmem:[%s863 + $0x40] sm:$0xff]
                %882 = vst [vmem:[%s864 + $0x80] sm:$0xff] %v881
                %v883 = vld [vmem:[%s863 + $0x48] sm:$0xff]
                %884 = vst [vmem:[%s864 + $0x88] sm:$0xff] %v883
                %v885 = vld [vmem:[%s863 + $0x50] sm:$0xff]
                %886 = vst [vmem:[%s864 + $0x90] sm:$0xff] %v885
                %v887 = vld [vmem:[%s863 + $0x58] sm:$0xff]
                %888 = vst [vmem:[%s864 + $0x98] sm:$0xff] %v887
                %v889 = vld [vmem:[%s863 + $0x60] sm:$0xff]
                %890 = vst [vmem:[%s864 + $0xc0] sm:$0xff] %v889
                %v891 = vld [vmem:[%s863 + $0x68] sm:$0xff]
                %892 = vst [vmem:[%s864 + $0xc8] sm:$0xff] %v891
                %v893 = vld [vmem:[%s863 + $0x70] sm:$0xff]
                %894 = vst [vmem:[%s864 + $0xd0] sm:$0xff] %v893
                %v895 = vld [vmem:[%s863 + $0x78] sm:$0xff]
                %896 = vst [vmem:[%s864 + $0xd8] sm:$0xff] %v895
              $region103: #{frescat_forward.3} parent=97 // loop_footer
                %s862 = sadd.s32 1, %s858
              $region104: #{frescat_forward.3} parent=97 // loop_footer_branch
                %857 = sbr.rel target = $region100
              $region105: #{frescat_forward.3} parent=97 // loop_exit
                _
            $region98: #{frescat_forward.3} parent=93 // pred_fallthru
              _
            // Predicated region
            $region106: #{frescat_forward.3} parent=93 // pred_check
              _
            $region107: #{frescat_forward.3} parent=93 // pred_check_branch
              %898 = sbr.rel target = $region109
            $region108: #{frescat_forward.3} parent=93 // pred_region
              _
            $region109: #{frescat_forward.3} parent=93 // pred_fallthru
              _
          $region94: #{frescat_forward.3} parent=89 // pred_fallthru
            _
          %899 = vnop
        $region90: #{frescat_forward.3} parent=77 // pred_fallthru
          _
      $region78: #{frescat_forward.3} parent=5 // pred_fallthru
        _
      %p900 = scmp.le.s32.totalorder 2, %s11
      // Predicated region
      $region110: #{frescat_forward.3} parent=5 // pred_check
        %p901 = pneg %p900
      $region111: #{frescat_forward.3} parent=5 // pred_check_branch
        %903 = sbr.rel (%p901) target = $region113
      $region112: #{frescat_forward.3} parent=5 // pred_region
        %s904 = ssub.s32 %s11, 2
        // Predicated region
        $region114: #{frescat_forward.3} parent=112 // pred_check
          %p905 = pneg %p173
        $region115: #{frescat_forward.3} parent=112 // pred_check_branch
          %907 = sbr.rel (%p905) target = $region117
        $region116: #{frescat_forward.3} parent=112 // pred_region
          %s908 = sand.u32 %s158, 1
          %s909 = sand.u32 %s158, 1
          %s910 = smul.addr %s909, 128
          %s911 = scalar_lea.vmem [#allocation4], %s910
        $region117: #{frescat_forward.3} parent=112 // pred_fallthru
          _
      $region113: #{frescat_forward.3} parent=5 // pred_fallthru
        _
    $region6: #{frescat_forward.3} parent=1 // loop_footer
      %s15 = sadd.s32 1, %s11
    $region7: #{frescat_forward.3} parent=1 // loop_footer_branch
      %10 = sbr.rel target = $region3
    $region8: #{frescat_forward.3} parent=1 // loop_exit
      _

</llo_original>
